<compile_context>
chip_gen: v7x
topology: tpu7x:2x2x1
jax: 0.10.0
libtpu: 0.0.40
codegen_flags: <defaults>
</compile_context>

<pallas_src>
import functools

import numpy as np
import jax
import jax.numpy as jnp
from jax.experimental import pallas as pl
from jax.experimental.pallas import tpu as pltpu


def _resnet_block_kernel(x_ref, w1_ref, w2_ref, out_ref, xpbuf, hbuf, *, H, W, C, eps):
    HW = H * W

    def reflect_pad_into(buf, v3):
        # v3: (H, W, C) bf16  ->  buf: (H+2, W+2, C) bf16, matching nn.ReflectionPad2d(1).
        # Every cell of buf is overwritten each grid step before any read.
        buf[1:H + 1, 1:W + 1, :] = v3
        buf[0:1, 1:W + 1, :] = v3[1:2]                    # top row    <- row 1
        buf[H + 1:H + 2, 1:W + 1, :] = v3[H - 2:H - 1]    # bottom row <- row H-2
        # Order-sensitive: the column fills read the already-written top/bottom rows so the
        # four corners come out as x[1,1], x[1,W-2], x[H-2,1], x[H-2,W-2] (true reflection).
        buf[:, 0:1, :] = buf[:, 2:3, :]                   # left col   <- padded col 2
        buf[:, W + 1:W + 2, :] = buf[:, W - 1:W, :]       # right col  <- padded col W-1

    def conv3x3(buf, w_ref):
        # im2col in bf16: 9 taps (H, W, C) -> (HW, C), lane-concat (each piece is a full
        # 128-lane group, so the concat is aligned), then one bf16 MXU matmul with f32 acc.
        pad = buf[...]                                     # (H+2, W+2, C) bf16
        taps = [pad[kh:kh + H, kw:kw + W, :].reshape(HW, C)
                for kh in range(3) for kw in range(3)]
        slab = jnp.concatenate(taps, axis=-1)              # (HW, 9C) bf16
        return jnp.dot(slab, w_ref[...], preferred_element_type=jnp.float32)   # (HW, C) f32

    def inst_norm(v):
        # InstanceNorm2d, affine=False: per-channel stats over all HW positions of this batch
        # element.  One-pass sum / sum-of-squares (biased variance, eps inside the sqrt).
        s = jnp.sum(v, axis=0, keepdims=True)
        ss = jnp.sum(v * v, axis=0, keepdims=True)
        mu = s * (1.0 / HW)
        var = jnp.maximum(ss * (1.0 / HW) - mu * mu, 0.0)
        return (v - mu) * jax.lax.rsqrt(var + eps)

    x3 = x_ref[0]                                          # (H, W, C) f32, unpadded input

    # ---- conv1 + InstanceNorm + ReLU ------------------------------------------------
    # (conv bias omitted: exactly cancelled by the following InstanceNorm mean subtraction)
    reflect_pad_into(xpbuf, x3.astype(jnp.bfloat16))
    h = jnp.maximum(inst_norm(conv3x3(xpbuf, w1_ref)), 0.0)    # (HW, C) f32

    # ---- conv2 + InstanceNorm --------------------------------------------------------
    reflect_pad_into(hbuf, h.reshape(H, W, C).astype(jnp.bfloat16))
    y = inst_norm(conv3x3(hbuf, w2_ref))                        # (HW, C) f32

    # ---- residual add ----------------------------------------------------------------
    out_ref[...] = (x3.reshape(HW, C) + y).reshape(1, H, W, C)


def resnet_block_nhwc(x_nhwc, params, *, eps=1e-5):
    """Fused ResnetBlock forward on NHWC activations (chain-friendly entry point)."""
    N, H, W, C = x_nhwc.shape
    if C % 128 != 0:
        raise NotImplementedError("lane-dense layout requires channels to be a multiple of 128")
    if H * W * 9 * C * 2 > 24 * 1024 * 1024:   # bf16 im2col slab must fit VMEM comfortably
        raise NotImplementedError("H*W too large for the whole-image-per-step design; "
                                  "needs a spatial row-tile grid axis")

    # Repack PyTorch OIHW (C, C, 3, 3) conv weights into im2col matmul layout (9*C, C) in bf16:
    # row index = kh*3*C + kw*C + cin, matching the tap/concat order used in the kernel.
    def repack(w_oihw):
        return jnp.transpose(w_oihw, (2, 3, 1, 0)).reshape(9 * C, C).astype(jnp.bfloat16)

    w1 = repack(params["w1_oihw"])
    w2 = repack(params["w2_oihw"])
    # NOTE: params["b1"], params["b2"] are intentionally not passed to the kernel —
    # InstanceNorm2d(affine=False) cancels the conv bias exactly.

    kernel = functools.partial(_resnet_block_kernel, H=H, W=W, C=C, eps=eps)
    full2 = lambda b: (0, 0)

    return pl.pallas_call(
        kernel,
        out_shape=jax.ShapeDtypeStruct((N, H, W, C), jnp.float32),
        grid=(N,),
        in_specs=[
            pl.BlockSpec((1, H, W, C), lambda b: (b, 0, 0, 0)),   # unpadded input block
            pl.BlockSpec((9 * C, C), full2),                      # conv1 weight (bf16)
            pl.BlockSpec((9 * C, C), full2),                      # conv2 weight (bf16)
        ],
        out_specs=pl.BlockSpec((1, H, W, C), lambda b: (b, 0, 0, 0)),
        scratch_shapes=[
            pltpu.VMEM((H + 2, W + 2, C), jnp.bfloat16),          # reflect-padded input
            pltpu.VMEM((H + 2, W + 2, C), jnp.bfloat16),          # reflect-padded intermediate
        ],
        compiler_params=pltpu.CompilerParams(
            dimension_semantics=("parallel",),          # batch sharding across v7x's 2 TCs
            vmem_limit_bytes=32 * 1024 * 1024),
    )(x_nhwc.astype(jnp.float32), w1, w2)


def resnet_block(x_nchw, params, *, eps=1e-5):
    """PyTorch-convention wrapper: (N, C, H, W) in / out."""
    x = jnp.transpose(x_nchw, (0, 2, 3, 1))
    out = resnet_block_nhwc(x, params, eps=eps)
    return jnp.transpose(out, (0, 3, 1, 2))


def _reference(x_nchw, params, eps=1e-5):
    """Pure-JAX f32 reference (lax.conv, highest precision, biases included)."""
    prec = jax.lax.Precision.HIGHEST

    def conv3x3_reflect(h, w, b):
        hp = jnp.pad(h, ((0, 0), (0, 0), (1, 1), (1, 1)), mode="reflect")
        y = jax.lax.conv_general_dilated(
            hp, w, window_strides=(1, 1), padding="VALID",
            dimension_numbers=("NCHW", "OIHW", "NCHW"), precision=prec)
        return y + b[None, :, None, None]

    def inst_norm(h):
        mu = jnp.mean(h, axis=(2, 3), keepdims=True)
        var = jnp.mean((h - mu) ** 2, axis=(2, 3), keepdims=True)
        return (h - mu) * jax.lax.rsqrt(var + eps)

    h = jnp.maximum(inst_norm(conv3x3_reflect(x_nchw, params["w1_oihw"], params["b1"])), 0.0)
    y = inst_norm(conv3x3_reflect(h, params["w2_oihw"], params["b2"]))
    return x_nchw + y


def _init_params(key, dim):
    k1, k2, k3, k4 = jax.random.split(key, 4)
    return {
        "w1_oihw": 0.02 * jax.random.normal(k1, (dim, dim, 3, 3), jnp.float32),
        "b1":      0.02 * jax.random.normal(k2, (dim,), jnp.float32),
        "w2_oihw": 0.02 * jax.random.normal(k3, (dim, dim, 3, 3), jnp.float32),
        "b2":      0.02 * jax.random.normal(k4, (dim,), jnp.float32),
    }


if __name__ == "__main__":
    key = jax.random.PRNGKey(0)
    k_x, k_p = jax.random.split(key)

    # dim=128 fills the 128-lane vreg exactly (lane-dense); small batch / spatial extent.
    N, dim, H, W = 2, 128, 16, 16
    x = jax.random.normal(k_x, (N, dim, H, W), jnp.float32)
    params = _init_params(k_p, dim)

    out = jax.jit(resnet_block)(x, params)
    jax.block_until_ready(out)

    ref = _reference(x, params)
    # Tolerance accommodates bf16 MXU operands (f32 accumulation): stage-wise bf16 rounding of
    # inputs/weights/intermediates gives max abs errors around 1e-2 at the tails of O(1)
    # instance-normalized outputs, well inside 2e-2.
    np.testing.assert_allclose(np.asarray(out), np.asarray(ref), rtol=2e-2, atol=2e-2)

    print("KERNEL_OK")
</pallas_src>

<mosaic_0001>
module attributes {stable_mosaic.version = 11 : i64} {
  func.func @_resnet_block_kernel(%arg0: i32, %arg1: memref<1x16x16x128xf32, #tpu.memory_space<vmem>>, %arg2: memref<1152x128xbf16, #tpu.memory_space<vmem>>, %arg3: memref<1152x128xbf16, #tpu.memory_space<vmem>>, %arg4: memref<1x16x16x128xf32, #tpu.memory_space<vmem>>, %arg5: memref<18x18x128xbf16, #tpu.memory_space<vmem>>, %arg6: memref<18x18x128xbf16, #tpu.memory_space<vmem>>) attributes {dimension_semantics = [#tpu.dimension_semantics<parallel>], iteration_bounds = array<i64: 2>, scalar_prefetch = 0 : i64, scratch_operands = 2 : i64, tpu.core_type = #tpu.core_type<tc>, window_params = [{transform_indices = @transform_0, window_bounds = array<i64: 1, 16, 16, 128>}, {pipeline_mode = #tpu.pipeline_mode<synchronous>, transform_indices = @transform_1, window_bounds = array<i64: 1152, 128>}, {pipeline_mode = #tpu.pipeline_mode<synchronous>, transform_indices = @transform_2, window_bounds = array<i64: 1152, 128>}, {transform_indices = @transform_3, window_bounds = array<i64: 1, 16, 16, 128>}]} {
    %c0 = arith.constant 0 : index
    %c0_0 = arith.constant 0 : index
    %c0_1 = arith.constant 0 : index
    %c0_2 = arith.constant 0 : index
    %0 = vector.load %arg1[%c0, %c0_0, %c0_1, %c0_2] : memref<1x16x16x128xf32, #tpu.memory_space<vmem>>, vector<1x16x16x128xf32>
    %1 = vector.shape_cast %0 : vector<1x16x16x128xf32> to vector<16x16x128xf32>
    %2 = arith.truncf %1 : vector<16x16x128xf32> to vector<16x16x128xbf16>
    %c1 = arith.constant 1 : index
    %c1_3 = arith.constant 1 : index
    %c0_4 = arith.constant 0 : index
    %3 = vector.load %arg5[%c1, %c1_3, %c0_4] : memref<18x18x128xbf16, #tpu.memory_space<vmem>>, vector<16x16x128xbf16>
    tpu.vector_store %arg5[%c1, %c1_3, %c0_4], %2 {strides = array<i32>} : memref<18x18x128xbf16, #tpu.memory_space<vmem>>, vector<16x16x128xbf16>,
    %4 = vector.extract_strided_slice %2 {offsets = [1, 0, 0], sizes = [1, 16, 128], strides = [1, 1, 1]} : vector<16x16x128xbf16> to vector<1x16x128xbf16>
    %c0_5 = arith.constant 0 : index
    %c1_6 = arith.constant 1 : index
    %c0_7 = arith.constant 0 : index
    %5 = vector.load %arg5[%c0_5, %c1_6, %c0_7] : memref<18x18x128xbf16, #tpu.memory_space<vmem>>, vector<1x16x128xbf16>
    tpu.vector_store %arg5[%c0_5, %c1_6, %c0_7], %4 {strides = array<i32>} : memref<18x18x128xbf16, #tpu.memory_space<vmem>>, vector<1x16x128xbf16>,
    %6 = vector.extract_strided_slice %2 {offsets = [14, 0, 0], sizes = [1, 16, 128], strides = [1, 1, 1]} : vector<16x16x128xbf16> to vector<1x16x128xbf16>
    %c17 = arith.constant 17 : index
    %c1_8 = arith.constant 1 : index
    %c0_9 = arith.constant 0 : index
    %7 = vector.load %arg5[%c17, %c1_8, %c0_9] : memref<18x18x128xbf16, #tpu.memory_space<vmem>>, vector<1x16x128xbf16>
    tpu.vector_store %arg5[%c17, %c1_8, %c0_9], %6 {strides = array<i32>} : memref<18x18x128xbf16, #tpu.memory_space<vmem>>, vector<1x16x128xbf16>,
    %c0_10 = arith.constant 0 : index
    %c2 = arith.constant 2 : index
    %c0_11 = arith.constant 0 : index
    %8 = vector.load %arg5[%c0_10, %c2, %c0_11] : memref<18x18x128xbf16, #tpu.memory_space<vmem>>, vector<18x1x128xbf16>
    %c0_12 = arith.constant 0 : index
    %c0_13 = arith.constant 0 : index
    %c0_14 = arith.constant 0 : index
    %9 = vector.load %arg5[%c0_12, %c0_13, %c0_14] : memref<18x18x128xbf16, #tpu.memory_space<vmem>>, vector<18x1x128xbf16>
    tpu.vector_store %arg5[%c0_12, %c0_13, %c0_14], %8 {strides = array<i32>} : memref<18x18x128xbf16, #tpu.memory_space<vmem>>, vector<18x1x128xbf16>,
    %c0_15 = arith.constant 0 : index
    %c15 = arith.constant 15 : index
    %c0_16 = arith.constant 0 : index
    %10 = vector.load %arg5[%c0_15, %c15, %c0_16] : memref<18x18x128xbf16, #tpu.memory_space<vmem>>, vector<18x1x128xbf16>
    %c0_17 = arith.constant 0 : index
    %c17_18 = arith.constant 17 : index
    %c0_19 = arith.constant 0 : index
    %11 = vector.load %arg5[%c0_17, %c17_18, %c0_19] : memref<18x18x128xbf16, #tpu.memory_space<vmem>>, vector<18x1x128xbf16>
    tpu.vector_store %arg5[%c0_17, %c17_18, %c0_19], %10 {strides = array<i32>} : memref<18x18x128xbf16, #tpu.memory_space<vmem>>, vector<18x1x128xbf16>,
    %c0_20 = arith.constant 0 : index
    %c0_21 = arith.constant 0 : index
    %c0_22 = arith.constant 0 : index
    %12 = vector.load %arg5[%c0_20, %c0_21, %c0_22] : memref<18x18x128xbf16, #tpu.memory_space<vmem>>, vector<18x18x128xbf16>
    %13 = vector.extract_strided_slice %12 {offsets = [0, 0, 0], sizes = [16, 16, 128], strides = [1, 1, 1]} : vector<18x18x128xbf16> to vector<16x16x128xbf16>
    %14 = vector.shape_cast %13 : vector<16x16x128xbf16> to vector<256x128xbf16>
    %15 = vector.extract_strided_slice %12 {offsets = [0, 1, 0], sizes = [16, 16, 128], strides = [1, 1, 1]} : vector<18x18x128xbf16> to vector<16x16x128xbf16>
    %16 = vector.shape_cast %15 : vector<16x16x128xbf16> to vector<256x128xbf16>
    %17 = vector.extract_strided_slice %12 {offsets = [0, 2, 0], sizes = [16, 16, 128], strides = [1, 1, 1]} : vector<18x18x128xbf16> to vector<16x16x128xbf16>
    %18 = vector.shape_cast %17 : vector<16x16x128xbf16> to vector<256x128xbf16>
    %19 = vector.extract_strided_slice %12 {offsets = [1, 0, 0], sizes = [16, 16, 128], strides = [1, 1, 1]} : vector<18x18x128xbf16> to vector<16x16x128xbf16>
    %20 = vector.shape_cast %19 : vector<16x16x128xbf16> to vector<256x128xbf16>
    %21 = vector.extract_strided_slice %12 {offsets = [1, 1, 0], sizes = [16, 16, 128], strides = [1, 1, 1]} : vector<18x18x128xbf16> to vector<16x16x128xbf16>
    %22 = vector.shape_cast %21 : vector<16x16x128xbf16> to vector<256x128xbf16>
    %23 = vector.extract_strided_slice %12 {offsets = [1, 2, 0], sizes = [16, 16, 128], strides = [1, 1, 1]} : vector<18x18x128xbf16> to vector<16x16x128xbf16>
    %24 = vector.shape_cast %23 : vector<16x16x128xbf16> to vector<256x128xbf16>
    %25 = vector.extract_strided_slice %12 {offsets = [2, 0, 0], sizes = [16, 16, 128], strides = [1, 1, 1]} : vector<18x18x128xbf16> to vector<16x16x128xbf16>
    %26 = vector.shape_cast %25 : vector<16x16x128xbf16> to vector<256x128xbf16>
    %27 = vector.extract_strided_slice %12 {offsets = [2, 1, 0], sizes = [16, 16, 128], strides = [1, 1, 1]} : vector<18x18x128xbf16> to vector<16x16x128xbf16>
    %28 = vector.shape_cast %27 : vector<16x16x128xbf16> to vector<256x128xbf16>
    %29 = vector.extract_strided_slice %12 {offsets = [2, 2, 0], sizes = [16, 16, 128], strides = [1, 1, 1]} : vector<18x18x128xbf16> to vector<16x16x128xbf16>
    %30 = vector.shape_cast %29 : vector<16x16x128xbf16> to vector<256x128xbf16>
    %31 = tpu.concatenate %14, %16, %18, %20, %22, %24, %26, %28, %30 in 1 : vector<256x128xbf16>, vector<256x128xbf16>, vector<256x128xbf16>, vector<256x128xbf16>, vector<256x128xbf16>, vector<256x128xbf16>, vector<256x128xbf16>, vector<256x128xbf16>, vector<256x128xbf16> -> vector<256x1152xbf16>
    %c0_23 = arith.constant 0 : index
    %c0_24 = arith.constant 0 : index
    %32 = vector.load %arg2[%c0_23, %c0_24] : memref<1152x128xbf16, #tpu.memory_space<vmem>>, vector<1152x128xbf16>
    %cst = arith.constant dense<0.000000e+00> : vector<256x128xf32>
    %33 = tpu.matmul %31, %32, %cst {dimension_numbers = #tpu.dot_dimension_numbers<[1], [0], [0], [1], [0, 0, 1, 1], [], []>} : vector<256x1152xbf16>, vector<1152x128xbf16>, vector<256x128xf32> -> vector<256x128xf32>
    %cst_25 = arith.constant dense<0.000000e+00> : vector<128xf32>
    %34 = vector.multi_reduction <add>, %33, %cst_25 [0] : vector<256x128xf32> to vector<128xf32>
    %35 = vector.shape_cast %34 : vector<128xf32> to vector<1x128xf32>
    %36 = arith.mulf %33, %33 : vector<256x128xf32>
    %cst_26 = arith.constant dense<0.000000e+00> : vector<128xf32>
    %37 = vector.multi_reduction <add>, %36, %cst_26 [0] : vector<256x128xf32> to vector<128xf32>
    %38 = vector.shape_cast %37 : vector<128xf32> to vector<1x128xf32>
    %cst_27 = arith.constant 3.906250e-03 : f32
    %39 = vector.broadcast %cst_27 : f32 to vector<1x128xf32>
    %40 = arith.mulf %35, %39 : vector<1x128xf32>
    %cst_28 = arith.constant 3.906250e-03 : f32
    %41 = vector.broadcast %cst_28 : f32 to vector<1x128xf32>
    %42 = arith.mulf %38, %41 : vector<1x128xf32>
    %43 = arith.mulf %40, %40 : vector<1x128xf32>
    %44 = arith.subf %42, %43 : vector<1x128xf32>
    %cst_29 = arith.constant 0.000000e+00 : f32
    %45 = vector.broadcast %cst_29 : f32 to vector<1x128xf32>
    %46 = arith.maximumf %44, %45 : vector<1x128xf32>
    %47 = vector.broadcast %40 : vector<1x128xf32> to vector<256x128xf32>
    %48 = arith.subf %33, %47 : vector<256x128xf32>
    %cst_30 = arith.constant 9.99999974E-6 : f32
    %49 = vector.broadcast %cst_30 : f32 to vector<1x128xf32>
    %50 = arith.addf %46, %49 : vector<1x128xf32>
    %51 = math.rsqrt %50 : vector<1x128xf32>
    %52 = vector.broadcast %51 : vector<1x128xf32> to vector<256x128xf32>
    %53 = arith.mulf %48, %52 : vector<256x128xf32>
    %cst_31 = arith.constant 0.000000e+00 : f32
    %54 = vector.broadcast %cst_31 : f32 to vector<256x128xf32>
    %55 = arith.maximumf %53, %54 : vector<256x128xf32>
    %56 = vector.shape_cast %55 : vector<256x128xf32> to vector<16x16x128xf32>
    %57 = arith.truncf %56 : vector<16x16x128xf32> to vector<16x16x128xbf16>
    %c1_32 = arith.constant 1 : index
    %c1_33 = arith.constant 1 : index
    %c0_34 = arith.constant 0 : index
    %58 = vector.load %arg6[%c1_32, %c1_33, %c0_34] : memref<18x18x128xbf16, #tpu.memory_space<vmem>>, vector<16x16x128xbf16>
    tpu.vector_store %arg6[%c1_32, %c1_33, %c0_34], %57 {strides = array<i32>} : memref<18x18x128xbf16, #tpu.memory_space<vmem>>, vector<16x16x128xbf16>,
    %59 = vector.extract_strided_slice %57 {offsets = [1, 0, 0], sizes = [1, 16, 128], strides = [1, 1, 1]} : vector<16x16x128xbf16> to vector<1x16x128xbf16>
    %c0_35 = arith.constant 0 : index
    %c1_36 = arith.constant 1 : index
    %c0_37 = arith.constant 0 : index
    %60 = vector.load %arg6[%c0_35, %c1_36, %c0_37] : memref<18x18x128xbf16, #tpu.memory_space<vmem>>, vector<1x16x128xbf16>
    tpu.vector_store %arg6[%c0_35, %c1_36, %c0_37], %59 {strides = array<i32>} : memref<18x18x128xbf16, #tpu.memory_space<vmem>>, vector<1x16x128xbf16>,
    %61 = vector.extract_strided_slice %57 {offsets = [14, 0, 0], sizes = [1, 16, 128], strides = [1, 1, 1]} : vector<16x16x128xbf16> to vector<1x16x128xbf16>
    %c17_38 = arith.constant 17 : index
    %c1_39 = arith.constant 1 : index
    %c0_40 = arith.constant 0 : index
    %62 = vector.load %arg6[%c17_38, %c1_39, %c0_40] : memref<18x18x128xbf16, #tpu.memory_space<vmem>>, vector<1x16x128xbf16>
    tpu.vector_store %arg6[%c17_38, %c1_39, %c0_40], %61 {strides = array<i32>} : memref<18x18x128xbf16, #tpu.memory_space<vmem>>, vector<1x16x128xbf16>,
    %c0_41 = arith.constant 0 : index
    %c2_42 = arith.constant 2 : index
    %c0_43 = arith.constant 0 : index
    %63 = vector.load %arg6[%c0_41, %c2_42, %c0_43] : memref<18x18x128xbf16, #tpu.memory_space<vmem>>, vector<18x1x128xbf16>
    %c0_44 = arith.constant 0 : index
    %c0_45 = arith.constant 0 : index
    %c0_46 = arith.constant 0 : index
    %64 = vector.load %arg6[%c0_44, %c0_45, %c0_46] : memref<18x18x128xbf16, #tpu.memory_space<vmem>>, vector<18x1x128xbf16>
    tpu.vector_store %arg6[%c0_44, %c0_45, %c0_46], %63 {strides = array<i32>} : memref<18x18x128xbf16, #tpu.memory_space<vmem>>, vector<18x1x128xbf16>,
    %c0_47 = arith.constant 0 : index
    %c15_48 = arith.constant 15 : index
    %c0_49 = arith.constant 0 : index
    %65 = vector.load %arg6[%c0_47, %c15_48, %c0_49] : memref<18x18x128xbf16, #tpu.memory_space<vmem>>, vector<18x1x128xbf16>
    %c0_50 = arith.constant 0 : index
    %c17_51 = arith.constant 17 : index
    %c0_52 = arith.constant 0 : index
    %66 = vector.load %arg6[%c0_50, %c17_51, %c0_52] : memref<18x18x128xbf16, #tpu.memory_space<vmem>>, vector<18x1x128xbf16>
    tpu.vector_store %arg6[%c0_50, %c17_51, %c0_52], %65 {strides = array<i32>} : memref<18x18x128xbf16, #tpu.memory_space<vmem>>, vector<18x1x128xbf16>,
    %c0_53 = arith.constant 0 : index
    %c0_54 = arith.constant 0 : index
    %c0_55 = arith.constant 0 : index
    %67 = vector.load %arg6[%c0_53, %c0_54, %c0_55] : memref<18x18x128xbf16, #tpu.memory_space<vmem>>, vector<18x18x128xbf16>
    %68 = vector.extract_strided_slice %67 {offsets = [0, 0, 0], sizes = [16, 16, 128], strides = [1, 1, 1]} : vector<18x18x128xbf16> to vector<16x16x128xbf16>
    %69 = vector.shape_cast %68 : vector<16x16x128xbf16> to vector<256x128xbf16>
    %70 = vector.extract_strided_slice %67 {offsets = [0, 1, 0], sizes = [16, 16, 128], strides = [1, 1, 1]} : vector<18x18x128xbf16> to vector<16x16x128xbf16>
    %71 = vector.shape_cast %70 : vector<16x16x128xbf16> to vector<256x128xbf16>
    %72 = vector.extract_strided_slice %67 {offsets = [0, 2, 0], sizes = [16, 16, 128], strides = [1, 1, 1]} : vector<18x18x128xbf16> to vector<16x16x128xbf16>
    %73 = vector.shape_cast %72 : vector<16x16x128xbf16> to vector<256x128xbf16>
    %74 = vector.extract_strided_slice %67 {offsets = [1, 0, 0], sizes = [16, 16, 128], strides = [1, 1, 1]} : vector<18x18x128xbf16> to vector<16x16x128xbf16>
    %75 = vector.shape_cast %74 : vector<16x16x128xbf16> to vector<256x128xbf16>
    %76 = vector.extract_strided_slice %67 {offsets = [1, 1, 0], sizes = [16, 16, 128], strides = [1, 1, 1]} : vector<18x18x128xbf16> to vector<16x16x128xbf16>
    %77 = vector.shape_cast %76 : vector<16x16x128xbf16> to vector<256x128xbf16>
    %78 = vector.extract_strided_slice %67 {offsets = [1, 2, 0], sizes = [16, 16, 128], strides = [1, 1, 1]} : vector<18x18x128xbf16> to vector<16x16x128xbf16>
    %79 = vector.shape_cast %78 : vector<16x16x128xbf16> to vector<256x128xbf16>
    %80 = vector.extract_strided_slice %67 {offsets = [2, 0, 0], sizes = [16, 16, 128], strides = [1, 1, 1]} : vector<18x18x128xbf16> to vector<16x16x128xbf16>
    %81 = vector.shape_cast %80 : vector<16x16x128xbf16> to vector<256x128xbf16>
    %82 = vector.extract_strided_slice %67 {offsets = [2, 1, 0], sizes = [16, 16, 128], strides = [1, 1, 1]} : vector<18x18x128xbf16> to vector<16x16x128xbf16>
    %83 = vector.shape_cast %82 : vector<16x16x128xbf16> to vector<256x128xbf16>
    %84 = vector.extract_strided_slice %67 {offsets = [2, 2, 0], sizes = [16, 16, 128], strides = [1, 1, 1]} : vector<18x18x128xbf16> to vector<16x16x128xbf16>
    %85 = vector.shape_cast %84 : vector<16x16x128xbf16> to vector<256x128xbf16>
    %86 = tpu.concatenate %69, %71, %73, %75, %77, %79, %81, %83, %85 in 1 : vector<256x128xbf16>, vector<256x128xbf16>, vector<256x128xbf16>, vector<256x128xbf16>, vector<256x128xbf16>, vector<256x128xbf16>, vector<256x128xbf16>, vector<256x128xbf16>, vector<256x128xbf16> -> vector<256x1152xbf16>
    %c0_56 = arith.constant 0 : index
    %c0_57 = arith.constant 0 : index
    %87 = vector.load %arg3[%c0_56, %c0_57] : memref<1152x128xbf16, #tpu.memory_space<vmem>>, vector<1152x128xbf16>
    %cst_58 = arith.constant dense<0.000000e+00> : vector<256x128xf32>
    %88 = tpu.matmul %86, %87, %cst_58 {dimension_numbers = #tpu.dot_dimension_numbers<[1], [0], [0], [1], [0, 0, 1, 1], [], []>} : vector<256x1152xbf16>, vector<1152x128xbf16>, vector<256x128xf32> -> vector<256x128xf32>
    %cst_59 = arith.constant dense<0.000000e+00> : vector<128xf32>
    %89 = vector.multi_reduction <add>, %88, %cst_59 [0] : vector<256x128xf32> to vector<128xf32>
    %90 = vector.shape_cast %89 : vector<128xf32> to vector<1x128xf32>
    %91 = arith.mulf %88, %88 : vector<256x128xf32>
    %cst_60 = arith.constant dense<0.000000e+00> : vector<128xf32>
    %92 = vector.multi_reduction <add>, %91, %cst_60 [0] : vector<256x128xf32> to vector<128xf32>
    %93 = vector.shape_cast %92 : vector<128xf32> to vector<1x128xf32>
    %cst_61 = arith.constant 3.906250e-03 : f32
    %94 = vector.broadcast %cst_61 : f32 to vector<1x128xf32>
    %95 = arith.mulf %90, %94 : vector<1x128xf32>
    %cst_62 = arith.constant 3.906250e-03 : f32
    %96 = vector.broadcast %cst_62 : f32 to vector<1x128xf32>
    %97 = arith.mulf %93, %96 : vector<1x128xf32>
    %98 = arith.mulf %95, %95 : vector<1x128xf32>
    %99 = arith.subf %97, %98 : vector<1x128xf32>
    %cst_63 = arith.constant 0.000000e+00 : f32
    %100 = vector.broadcast %cst_63 : f32 to vector<1x128xf32>
    %101 = arith.maximumf %99, %100 : vector<1x128xf32>
    %102 = vector.broadcast %95 : vector<1x128xf32> to vector<256x128xf32>
    %103 = arith.subf %88, %102 : vector<256x128xf32>
    %cst_64 = arith.constant 9.99999974E-6 : f32
    %104 = vector.broadcast %cst_64 : f32 to vector<1x128xf32>
    %105 = arith.addf %101, %104 : vector<1x128xf32>
    %106 = math.rsqrt %105 : vector<1x128xf32>
    %107 = vector.broadcast %106 : vector<1x128xf32> to vector<256x128xf32>
    %108 = arith.mulf %103, %107 : vector<256x128xf32>
    %109 = vector.shape_cast %1 : vector<16x16x128xf32> to vector<256x128xf32>
    %110 = arith.addf %109, %108 : vector<256x128xf32>
    %111 = vector.shape_cast %110 : vector<256x128xf32> to vector<1x16x16x128xf32>
    %c0_65 = arith.constant 0 : index
    %c0_66 = arith.constant 0 : index
    %c0_67 = arith.constant 0 : index
    %c0_68 = arith.constant 0 : index
    %112 = vector.load %arg4[%c0_65, %c0_66, %c0_67, %c0_68] : memref<1x16x16x128xf32, #tpu.memory_space<vmem>>, vector<1x16x16x128xf32>
    tpu.vector_store %arg4[%c0_65, %c0_66, %c0_67, %c0_68], %111 {strides = array<i32>} : memref<1x16x16x128xf32, #tpu.memory_space<vmem>>, vector<1x16x16x128xf32>,
    return
  }
  func.func @transform_0(%arg0: i32) -> (i32, i32, i32, i32) {
    %c0_i32 = arith.constant 0 : i32
    %c0_i32_0 = arith.constant 0 : i32
    %c0_i32_1 = arith.constant 0 : i32
    %c0_i32_2 = arith.constant 0 : i32
    return %arg0, %c0_i32, %c0_i32_0, %c0_i32_1 : i32, i32, i32, i32
  }
  func.func @transform_1(%arg0: i32) -> (i32, i32) {
    %c0_i32 = arith.constant 0 : i32
    %c0_i32_0 = arith.constant 0 : i32
    %c0_i32_1 = arith.constant 0 : i32
    return %c0_i32, %c0_i32_0 : i32, i32
  }
  func.func @transform_2(%arg0: i32) -> (i32, i32) {
    %c0_i32 = arith.constant 0 : i32
    %c0_i32_0 = arith.constant 0 : i32
    %c0_i32_1 = arith.constant 0 : i32
    return %c0_i32, %c0_i32_0 : i32, i32
  }
  func.func @transform_3(%arg0: i32) -> (i32, i32, i32, i32) {
    %c0_i32 = arith.constant 0 : i32
    %c0_i32_0 = arith.constant 0 : i32
    %c0_i32_1 = arith.constant 0 : i32
    %c0_i32_2 = arith.constant 0 : i32
    return %arg0, %c0_i32, %c0_i32_0, %c0_i32_1 : i32, i32, i32, i32
  }
}

</mosaic_0001>

<llo_original>
// kernel: resnet_block.1
$region0: #{resnet_block.1}
  #allocation0 [shape = 'u32[]', space=smem, size = 0x4, offset = 0x4, fixed_abs, tag = 'smem constant byte address 0x4 - core index']
  #allocation1 [shape = 'u32[144,128]{1,0:T(1,128)}', space=vmem, size = 0x12000, scoped, tag = 'internal scratch']
  #allocation2 [shape = 'bf16[18,18,128]{2,1,0:T(8,128)(2,1)}', space=vmem, size = 0x1b000, scoped, tag = 'scratch operand']
  #allocation3 [shape = 'bf16[18,18,128]{2,1,0:T(8,128)(2,1)}', space=vmem, size = 0x1b000, scoped, tag = 'scratch operand']
  %s0 = inlined_call_operand.vmem [shape: f32[2,16,16,128], index: 0, kind: input, shape index: {}]
  %s1 = inlined_call_operand.vmem [shape: bf16[1152,128], index: 1, kind: input, shape index: {}]
  %s2 = inlined_call_operand.vmem [shape: bf16[1152,128], index: 2, kind: input, shape index: {}]
  %s3 = inlined_call_operand.hbm [shape: f32[2,16,16,128], index: 3, kind: output, shape index: {}]
  %s4 = sld [smem:[#allocation0]]
  $region45: #{resnet_block.1} parent=0
    _
  %s6 = ssub.s32 1, %s4
  %s7 = scalar_select 0, %s6, %s4
  $region1: #{resnet_block.1} parent=0
    #allocation4 [shape = 'u8[262144]{0}', space=vmem, size = 0x40000, scoped, tag = 'output window, operand 0']
    #allocation5 [shape = 's32[2]{0}', space=sflag, size = 0x8, scoped, tag = 'scoped memory for resnet_block.1']
    %8 = vsyncpa [#allocation5], 0
    %s9 = scalar_lea.sflag [#allocation5], 1
    %10 = vsyncpa %s9, 0
    loop: start=0, step=1, limit=4
    $region2: #{resnet_block.1} parent=1 // loop_pre_header
      _
    $region3: #{resnet_block.1} parent=1 // loop_header
      %s12 = sphi 0, %s16
      %p13 = scmp.ge.s32.totalorder %s12, 4
      %s22 = sphi 0, %s24
      %s25 = sphi 0, %s22
      %s26 = sphi 0, %s25
      %s42 = sphi 0, %s26
      %s46 = sphi 0, %s46
      %s48 = sphi 0, %s46
      %s49 = sphi 0, %s48
      %s63 = sphi 0, %s49
      %s67 = sphi 0, %s67
      %s69 = sphi 0, %s67
      %s70 = sphi 0, %s69
      %s84 = sphi 0, %s70
      %s90 = sphi 0, %s92
      %s93 = sphi 0, %s90
      %s94 = sphi 0, %s93
      %s110 = sphi 0, %s94
    $region4: #{resnet_block.1} parent=1 // loop_header_branch
      %15 = sbr.rel (%p13) target = $region8
    $region5: #{resnet_block.1} parent=1 // loop_body
      %s17 = ssub.s32 %s12, 1
      %s18 = ssub.s32 %s12, 2
      %s19 = sadd.s32 %s12, 1
      %s20 = ssub.s32 %s12, %s19
      %p21 = scmp.eq.s32.totalorder %s20, 0
      %s23 = sadd.s32 %s22, 1
      %s24 = scalar_select %p21, %s22, %s23
      %p27 = pneg %p21
      %p28 = scmp.eq.s32.totalorder %s12, 1
      %p29 = por %p27, %p28
      %p30 = scmp.ne.s32.totalorder %s22, %s25
      %p31 = scmp.eq.s32.totalorder %s12, 0
      %p32 = por %p30, %p31
      %p33 = scmp.ne.s32.totalorder %s22, %s25
      %p34 = scmp.eq.s32.totalorder %s17, 1
      %p35 = por %p33, %p34
      %p36 = scmp.ne.s32.totalorder %s25, %s26
      %p37 = scmp.eq.s32.totalorder %s17, 0
      %p38 = por %p36, %p37
      %p39 = scmp.ne.s32.totalorder %s25, %s26
      %p40 = scmp.eq.s32.totalorder %s18, 1
      %p41 = por %p39, %p40
      %p43 = scmp.ne.s32.totalorder %s26, %s42
      %p44 = scmp.eq.s32.totalorder %s18, 0
      %p45 = por %p43, %p44
      %s47 = sadd.s32 %s46, 1
      %p50 = scmp.eq.s32.totalorder %s12, 1
      %p51 = scmp.ne.s32.totalorder %s46, %s48
      %p52 = scmp.eq.s32.totalorder %s12, 0
      %p53 = por %p51, %p52
      %p54 = scmp.ne.s32.totalorder %s46, %s48
      %p55 = scmp.eq.s32.totalorder %s17, 1
      %p56 = por %p54, %p55
      %p57 = scmp.ne.s32.totalorder %s48, %s49
      %p58 = scmp.eq.s32.totalorder %s17, 0
      %p59 = por %p57, %p58
      %p60 = scmp.ne.s32.totalorder %s48, %s49
      %p61 = scmp.eq.s32.totalorder %s18, 1
      %p62 = por %p60, %p61
      %p64 = scmp.ne.s32.totalorder %s49, %s63
      %p65 = scmp.eq.s32.totalorder %s18, 0
      %p66 = por %p64, %p65
      %s68 = sadd.s32 %s67, 1
      %p71 = scmp.eq.s32.totalorder %s12, 1
      %p72 = scmp.ne.s32.totalorder %s67, %s69
      %p73 = scmp.eq.s32.totalorder %s12, 0
      %p74 = por %p72, %p73
      %p75 = scmp.ne.s32.totalorder %s67, %s69
      %p76 = scmp.eq.s32.totalorder %s17, 1
      %p77 = por %p75, %p76
      %p78 = scmp.ne.s32.totalorder %s69, %s70
      %p79 = scmp.eq.s32.totalorder %s17, 0
      %p80 = por %p78, %p79
      %p81 = scmp.ne.s32.totalorder %s69, %s70
      %p82 = scmp.eq.s32.totalorder %s18, 1
      %p83 = por %p81, %p82
      %p85 = scmp.ne.s32.totalorder %s70, %s84
      %p86 = scmp.eq.s32.totalorder %s18, 0
      %p87 = por %p85, %p86
      %s88 = ssub.s32 %s12, %s19
      %p89 = scmp.eq.s32.totalorder %s88, 0
      %s91 = sadd.s32 %s90, 1
      %s92 = scalar_select %p89, %s90, %s91
      %p95 = pneg %p89
      %p96 = scmp.eq.s32.totalorder %s12, 1
      %p97 = por %p95, %p96
      %p98 = scmp.ne.s32.totalorder %s90, %s93
      %p99 = scmp.eq.s32.totalorder %s12, 0
      %p100 = por %p98, %p99
      %p101 = scmp.ne.s32.totalorder %s90, %s93
      %p102 = scmp.eq.s32.totalorder %s17, 1
      %p103 = por %p101, %p102
      %p104 = scmp.ne.s32.totalorder %s93, %s94
      %p105 = scmp.eq.s32.totalorder %s17, 0
      %p106 = por %p104, %p105
      %p107 = scmp.ne.s32.totalorder %s93, %s94
      %p108 = scmp.eq.s32.totalorder %s18, 1
      %p109 = por %p107, %p108
      %p111 = scmp.ne.s32.totalorder %s94, %s110
      %p112 = scmp.eq.s32.totalorder %s18, 0
      %p113 = por %p111, %p112
      %p114 = scmp.le.s32.totalorder 1, %s12
      %p115 = scmp.lt.s32.totalorder %s12, 3
      %p116 = pnand %p114, %p115
      %p117 = pneg %p116
      // Predicated region
      $region9: #{resnet_block.1} parent=5 // pred_check
        _
      $region10: #{resnet_block.1} parent=5 // pred_check_branch
        %119 = sbr.rel (%p116) target = $region12
      $region11: #{resnet_block.1} parent=5 // pred_region
        %s120 = ssub.s32 %s12, 1
        // Predicated region
        $region13: #{resnet_block.1} parent=11 // pred_check
          %p121 = pneg %p59
        $region14: #{resnet_block.1} parent=11 // pred_check_branch
          %123 = sbr.rel (%p121) target = $region16
        $region15: #{resnet_block.1} parent=11 // pred_region
          _
        $region16: #{resnet_block.1} parent=11 // pred_fallthru
          _
        // Predicated region
        $region17: #{resnet_block.1} parent=11 // pred_check
          %p124 = pneg %p80
        $region18: #{resnet_block.1} parent=11 // pred_check_branch
          %126 = sbr.rel (%p124) target = $region20
        $region19: #{resnet_block.1} parent=11 // pred_region
          _
        $region20: #{resnet_block.1} parent=11 // pred_fallthru
          _
      $region12: #{resnet_block.1} parent=5 // pred_fallthru
        _
      %p127 = scmp.lt.s32.totalorder %s12, 2
      // Predicated region
      $region21: #{resnet_block.1} parent=5 // pred_check
        %p128 = pneg %p127
      $region22: #{resnet_block.1} parent=5 // pred_check_branch
        %130 = sbr.rel (%p128) target = $region24
      $region23: #{resnet_block.1} parent=5 // pred_region
        // Predicated region
        $region25: #{resnet_block.1} parent=23 // pred_check
          %p131 = pneg %p32
        $region26: #{resnet_block.1} parent=23 // pred_check_branch
          %133 = sbr.rel (%p131) target = $region28
        $region27: #{resnet_block.1} parent=23 // pred_region
          %p134 = scmp.lt.s32.totalorder %s12, 1
          %s135 = scalar_select %p134, %s12, 1
          %s136 = smul.addr %s135, 32
          %s137 = smul.addr %s136, 8
          %s138 = scalar_lea.vmem %s0, %s137
        $region28: #{resnet_block.1} parent=23 // pred_fallthru
          _
      $region24: #{resnet_block.1} parent=5 // pred_fallthru
        _
      %p139 = scmp.le.s32.totalorder 1, %s12
      %p140 = scmp.lt.s32.totalorder %s12, 3
      %p141 = pnand %p139, %p140
      %p142 = pneg %p141
      // Predicated region
      $region29: #{resnet_block.1} parent=5 // pred_check
        _
      $region30: #{resnet_block.1} parent=5 // pred_check_branch
        %144 = sbr.rel (%p141) target = $region32
      $region31: #{resnet_block.1} parent=5 // pred_region
        %s145 = ssub.s32 %s12, 1
        %p146 = scmp.lt.s32.totalorder %s17, 1
        %s147 = scalar_select %p146, %s17, 1
        %s148 = smul.addr %s147, 32
        %s149 = smul.addr %s148, 8
        %s150 = scalar_lea.vmem %s0, %s149
        %p151 = pneg %p38
        %p152 = pneg %p35
        %p153 = pneg %p59
        %p154 = pneg %p56
        %p155 = pneg %p80
        %p156 = pneg %p77
        %p157 = pneg %p106
        %p158 = pneg %p103
        %s159 = sand.u32 %s93, 1
        %s160 = scalar_lea.sflag [#allocation5], %s159
        %s161 = sand.u32 %s93, 1
        %s162 = smul.addr %s161, 256
        %s163 = scalar_lea.vmem [#allocation4], %s162
        %p164 = scmp.lt.s32.totalorder %s17, 1
        %s165 = scalar_select %p164, %s17, 1
        %s166 = smul.addr %s165, 32
        %s167 = smul.addr %s166, 8
        %s168 = scalar_lea.vmem %s0, %s167
        %v170 = vld [vmem:[%s168] sm:$0xff]
        %v171 = vld [vmem:[%s168 + $0x8] sm:$0xff]
        %v172 = vld [vmem:[%s168 + $0x10] sm:$0xff]
        %v173 = vld [vmem:[%s168 + $0x18] sm:$0xff]
        %v174 = vld [vmem:[%s168 + $0x20] sm:$0xff]
        %v175 = vld [vmem:[%s168 + $0x28] sm:$0xff]
        %v176 = vld [vmem:[%s168 + $0x30] sm:$0xff]
        %v177 = vld [vmem:[%s168 + $0x38] sm:$0xff]
        %v178 = vld [vmem:[%s168 + $0x40] sm:$0xff]
        %v179 = vld [vmem:[%s168 + $0x48] sm:$0xff]
        %v180 = vld [vmem:[%s168 + $0x50] sm:$0xff]
        %v181 = vld [vmem:[%s168 + $0x58] sm:$0xff]
        %v182 = vld [vmem:[%s168 + $0x60] sm:$0xff]
        %v183 = vld [vmem:[%s168 + $0x68] sm:$0xff]
        %v184 = vld [vmem:[%s168 + $0x70] sm:$0xff]
        %v185 = vld [vmem:[%s168 + $0x78] sm:$0xff]
        %v186 = vld [vmem:[%s168 + $0x80] sm:$0xff]
        %v187 = vld [vmem:[%s168 + $0x88] sm:$0xff]
        %v188 = vld [vmem:[%s168 + $0x90] sm:$0xff]
        %v189 = vld [vmem:[%s168 + $0x98] sm:$0xff]
        %v190 = vld [vmem:[%s168 + $0xa0] sm:$0xff]
        %v191 = vld [vmem:[%s168 + $0xa8] sm:$0xff]
        %v192 = vld [vmem:[%s168 + $0xb0] sm:$0xff]
        %v193 = vld [vmem:[%s168 + $0xb8] sm:$0xff]
        %v194 = vld [vmem:[%s168 + $0xc0] sm:$0xff]
        %v195 = vld [vmem:[%s168 + $0xc8] sm:$0xff]
        %v196 = vld [vmem:[%s168 + $0xd0] sm:$0xff]
        %v197 = vld [vmem:[%s168 + $0xd8] sm:$0xff]
        %v198 = vld [vmem:[%s168 + $0xe0] sm:$0xff]
        %v199 = vld [vmem:[%s168 + $0xe8] sm:$0xff]
        %v200 = vld [vmem:[%s168 + $0xf0] sm:$0xff]
        %v201 = vld [vmem:[%s168 + $0xf8] sm:$0xff]
        %v202 = vpack.c.bf16 %v171, %v170
        %v203 = vpack.c.bf16 %v173, %v172
        %v204 = vpack.c.bf16 %v175, %v174
        %v205 = vpack.c.bf16 %v177, %v176
        %v206 = vpack.c.bf16 %v179, %v178
        %v207 = vpack.c.bf16 %v181, %v180
        %v208 = vpack.c.bf16 %v183, %v182
        %v209 = vpack.c.bf16 %v185, %v184
        %v210 = vpack.c.bf16 %v187, %v186
        %v211 = vpack.c.bf16 %v189, %v188
        %v212 = vpack.c.bf16 %v191, %v190
        %v213 = vpack.c.bf16 %v193, %v192
        %v214 = vpack.c.bf16 %v195, %v194
        %v215 = vpack.c.bf16 %v197, %v196
        %v216 = vpack.c.bf16 %v199, %v198
        %v217 = vpack.c.bf16 %v201, %v200
        %v234 = vunpack.c.l.b16 %v202
        %v235 = vunpack.c.h.b16 %v202
        %v236 = vunpack.c.l.b16 %v203
        %v237 = vunpack.c.h.b16 %v203
        %v238 = vunpack.c.l.b16 %v204
        %v239 = vunpack.c.h.b16 %v204
        %v240 = vunpack.c.l.b16 %v205
        %v241 = vunpack.c.h.b16 %v205
        %v242 = vunpack.c.l.b16 %v206
        %v243 = vunpack.c.h.b16 %v206
        %v244 = vunpack.c.l.b16 %v207
        %v245 = vunpack.c.h.b16 %v207
        %v246 = vunpack.c.l.b16 %v208
        %v247 = vunpack.c.h.b16 %v208
        %v248 = vunpack.c.l.b16 %v209
        %v249 = vunpack.c.h.b16 %v209
        %v250 = vunpack.c.l.b16 %v210
        %v251 = vunpack.c.h.b16 %v210
        %v252 = vunpack.c.l.b16 %v211
        %v253 = vunpack.c.h.b16 %v211
        %v254 = vunpack.c.l.b16 %v212
        %v255 = vunpack.c.h.b16 %v212
        %v256 = vunpack.c.l.b16 %v213
        %v257 = vunpack.c.h.b16 %v213
        %v258 = vunpack.c.l.b16 %v214
        %v259 = vunpack.c.h.b16 %v214
        %v260 = vunpack.c.l.b16 %v215
        %v261 = vunpack.c.h.b16 %v215
        %v262 = vunpack.c.l.b16 %v216
        %v263 = vunpack.c.h.b16 %v216
        %v264 = vunpack.c.l.b16 %v217
        %v265 = vunpack.c.h.b16 %v217
        %v266 = vpack.c.b16 %v234, %v234
        %v267 = vpack.c.b16 %v235, %v235
        %v268 = vpack.c.b16 %v236, %v236
        %v269 = vpack.c.b16 %v237, %v237
        %v270 = vpack.c.b16 %v238, %v238
        %v271 = vpack.c.b16 %v239, %v239
        %v272 = vpack.c.b16 %v240, %v240
        %v273 = vpack.c.b16 %v241, %v241
        %v274 = vpack.c.b16 %v242, %v242
        %v275 = vpack.c.b16 %v243, %v243
        %v276 = vpack.c.b16 %v244, %v244
        %v277 = vpack.c.b16 %v245, %v245
        %v278 = vpack.c.b16 %v246, %v246
        %v279 = vpack.c.b16 %v247, %v247
        %v280 = vpack.c.b16 %v248, %v248
        %v281 = vpack.c.b16 %v249, %v249
        %v282 = vpack.c.b16 %v250, %v250
        %v283 = vpack.c.b16 %v251, %v251
        %v284 = vpack.c.b16 %v252, %v252
        %v285 = vpack.c.b16 %v253, %v253
        %v286 = vpack.c.b16 %v254, %v254
        %v287 = vpack.c.b16 %v255, %v255
        %v288 = vpack.c.b16 %v256, %v256
        %v289 = vpack.c.b16 %v257, %v257
        %v290 = vpack.c.b16 %v258, %v258
        %v291 = vpack.c.b16 %v259, %v259
        %v292 = vpack.c.b16 %v260, %v260
        %v293 = vpack.c.b16 %v261, %v261
        %v294 = vpack.c.b16 %v262, %v262
        %v295 = vpack.c.b16 %v263, %v263
        %v296 = vpack.c.b16 %v264, %v264
        %v297 = vpack.c.b16 %v265, %v265
        %vm298 = vsmask.f32 256
        %vm299 = vsmask.f32 4368
        %vm300 = vmor %vm298, %vm299
        %v302 = vshrl.u32 %v266, 16
        %v304 = vrot.slane %v302, 7
        %v305 = vshll.u32 %v266, 16
        %v307 = vor.u32 %v304, %v305
        %v308 = vrot.slane %v304, 4
        %v310 = vshrl.u32 %v267, 16
        %v312 = vrot.slane %v310, 7
        %v313 = vshll.u32 %v267, 16
        %v315 = vor.u32 %v312, %v313
        %v316 = vsel %vm300, %v308, %v315
        %v317 = vrot.slane %v312, 4
        %v319 = vshrl.u32 %v268, 16
        %v321 = vrot.slane %v319, 7
        %v322 = vshll.u32 %v268, 16
        %v324 = vor.u32 %v321, %v322
        %v325 = vrot.slane %v321, 4
        %v327 = vshrl.u32 %v269, 16
        %v329 = vrot.slane %v327, 7
        %v330 = vshll.u32 %v269, 16
        %v332 = vor.u32 %v329, %v330
        %v333 = vsel %vm300, %v325, %v332
        %v334 = vrot.slane %v329, 4
        %v336 = vshrl.u32 %v270, 16
        %v338 = vrot.slane %v336, 7
        %v339 = vshll.u32 %v270, 16
        %v341 = vor.u32 %v338, %v339
        %v342 = vrot.slane %v338, 4
        %v344 = vshrl.u32 %v271, 16
        %v346 = vrot.slane %v344, 7
        %v347 = vshll.u32 %v271, 16
        %v349 = vor.u32 %v346, %v347
        %v350 = vsel %vm300, %v342, %v349
        %v351 = vrot.slane %v346, 4
        %v353 = vshrl.u32 %v272, 16
        %v355 = vrot.slane %v353, 7
        %v356 = vshll.u32 %v272, 16
        %v358 = vor.u32 %v355, %v356
        %v359 = vrot.slane %v355, 4
        %v361 = vshrl.u32 %v273, 16
        %v363 = vrot.slane %v361, 7
        %v364 = vshll.u32 %v273, 16
        %v366 = vor.u32 %v363, %v364
        %v367 = vsel %vm300, %v359, %v366
        %v368 = vrot.slane %v363, 4
        %v370 = vshrl.u32 %v274, 16
        %v372 = vrot.slane %v370, 7
        %v373 = vshll.u32 %v274, 16
        %v375 = vor.u32 %v372, %v373
        %v376 = vrot.slane %v372, 4
        %v378 = vshrl.u32 %v275, 16
        %v380 = vrot.slane %v378, 7
        %v381 = vshll.u32 %v275, 16
        %v383 = vor.u32 %v380, %v381
        %v384 = vsel %vm300, %v376, %v383
        %v385 = vrot.slane %v380, 4
        %v387 = vshrl.u32 %v276, 16
        %v389 = vrot.slane %v387, 7
        %v390 = vshll.u32 %v276, 16
        %v392 = vor.u32 %v389, %v390
        %v393 = vrot.slane %v389, 4
        %v395 = vshrl.u32 %v277, 16
        %v397 = vrot.slane %v395, 7
        %v398 = vshll.u32 %v277, 16
        %v400 = vor.u32 %v397, %v398
        %v401 = vsel %vm300, %v393, %v400
        %v402 = vrot.slane %v397, 4
        %v404 = vshrl.u32 %v278, 16
        %v406 = vrot.slane %v404, 7
        %v407 = vshll.u32 %v278, 16
        %v409 = vor.u32 %v406, %v407
        %v410 = vrot.slane %v406, 4
        %v412 = vshrl.u32 %v279, 16
        %v414 = vrot.slane %v412, 7
        %v415 = vshll.u32 %v279, 16
        %v417 = vor.u32 %v414, %v415
        %v418 = vsel %vm300, %v410, %v417
        %v419 = vrot.slane %v414, 4
        %v421 = vshrl.u32 %v280, 16
        %v423 = vrot.slane %v421, 7
        %v424 = vshll.u32 %v280, 16
        %v426 = vor.u32 %v423, %v424
        %v427 = vrot.slane %v423, 4
        %v429 = vshrl.u32 %v281, 16
        %v431 = vrot.slane %v429, 7
        %v432 = vshll.u32 %v281, 16
        %v434 = vor.u32 %v431, %v432
        %v435 = vsel %vm300, %v427, %v434
        %v436 = vrot.slane %v431, 4
        %v438 = vshrl.u32 %v282, 16
        %v440 = vrot.slane %v438, 7
        %v441 = vshll.u32 %v282, 16
        %v443 = vor.u32 %v440, %v441
        %v444 = vrot.slane %v440, 4
        %v446 = vshrl.u32 %v283, 16
        %v448 = vrot.slane %v446, 7
        %v449 = vshll.u32 %v283, 16
        %v451 = vor.u32 %v448, %v449
        %v452 = vsel %vm300, %v444, %v451
        %v453 = vrot.slane %v448, 4
        %v455 = vshrl.u32 %v284, 16
        %v457 = vrot.slane %v455, 7
        %v458 = vshll.u32 %v284, 16
        %v460 = vor.u32 %v457, %v458
        %v461 = vrot.slane %v457, 4
        %v463 = vshrl.u32 %v285, 16
        %v465 = vrot.slane %v463, 7
        %v466 = vshll.u32 %v285, 16
        %v468 = vor.u32 %v465, %v466
        %v469 = vsel %vm300, %v461, %v468
        %v470 = vrot.slane %v465, 4
        %v472 = vshrl.u32 %v286, 16
        %v474 = vrot.slane %v472, 7
        %v475 = vshll.u32 %v286, 16
        %v477 = vor.u32 %v474, %v475
        %v478 = vrot.slane %v474, 4
        %v480 = vshrl.u32 %v287, 16
        %v482 = vrot.slane %v480, 7
        %v483 = vshll.u32 %v287, 16
        %v485 = vor.u32 %v482, %v483
        %v486 = vsel %vm300, %v478, %v485
        %v487 = vrot.slane %v482, 4
        %v489 = vshrl.u32 %v288, 16
        %v491 = vrot.slane %v489, 7
        %v492 = vshll.u32 %v288, 16
        %v494 = vor.u32 %v491, %v492
        %v495 = vrot.slane %v491, 4
        %v497 = vshrl.u32 %v289, 16
        %v499 = vrot.slane %v497, 7
        %v500 = vshll.u32 %v289, 16
        %v502 = vor.u32 %v499, %v500
        %v503 = vsel %vm300, %v495, %v502
        %v504 = vrot.slane %v499, 4
        %v506 = vshrl.u32 %v290, 16
        %v508 = vrot.slane %v506, 7
        %v509 = vshll.u32 %v290, 16
        %v511 = vor.u32 %v508, %v509
        %v512 = vrot.slane %v508, 4
        %v514 = vshrl.u32 %v291, 16
        %v516 = vrot.slane %v514, 7
        %v517 = vshll.u32 %v291, 16
        %v519 = vor.u32 %v516, %v517
        %v520 = vsel %vm300, %v512, %v519
        %v521 = vrot.slane %v516, 4
        %v523 = vshrl.u32 %v292, 16
        %v525 = vrot.slane %v523, 7
        %v526 = vshll.u32 %v292, 16
        %v528 = vor.u32 %v525, %v526
        %v529 = vrot.slane %v525, 4
        %v531 = vshrl.u32 %v293, 16
        %v533 = vrot.slane %v531, 7
        %v534 = vshll.u32 %v293, 16
        %v536 = vor.u32 %v533, %v534
        %v537 = vsel %vm300, %v529, %v536
        %v538 = vrot.slane %v533, 4
        %v540 = vshrl.u32 %v294, 16
        %v542 = vrot.slane %v540, 7
        %v543 = vshll.u32 %v294, 16
        %v545 = vor.u32 %v542, %v543
        %v546 = vrot.slane %v542, 4
        %v548 = vshrl.u32 %v295, 16
        %v550 = vrot.slane %v548, 7
        %v551 = vshll.u32 %v295, 16
        %v553 = vor.u32 %v550, %v551
        %v554 = vsel %vm300, %v546, %v553
        %v555 = vrot.slane %v550, 4
        %v557 = vshrl.u32 %v296, 16
        %v559 = vrot.slane %v557, 7
        %v560 = vshll.u32 %v296, 16
        %v562 = vor.u32 %v559, %v560
        %v563 = vrot.slane %v559, 4
        %v565 = vshrl.u32 %v297, 16
        %v567 = vrot.slane %v565, 7
        %v568 = vshll.u32 %v297, 16
        %v570 = vor.u32 %v567, %v568
        %v571 = vsel %vm300, %v563, %v570
        %v572 = vrot.slane %v567, 4
        %s621 = scalar_lea.vmem [#allocation2], 12
        %vm622 = vcmask 1043456
        %vm623 = vsmask.f32 7938
        %vm624 = vmand %vm622, %vm623
        %v625 = vld [vmem:[%s621] sm:$0xf]
        %v626 = vsel %vm624, %v307, %v625
        %627 = vst [vmem:[%s621] sm:$0xf] %v626
        %628 = vst [vmem:[%s621 + $0x4] sm:$0xf] %v316
        %vm629 = vcmask 1040384
        %vm630 = vmand %vm629, %vm298
        %v631 = vld [vmem:[%s621 + $0x8] sm:$0x1]
        %v632 = vsel %vm630, %v317, %v631
        %633 = vst [vmem:[%s621 + $0x8] sm:$0x1] %v632
        %v634 = vld [vmem:[%s621 + $0xc] sm:$0xf]
        %v635 = vsel %vm624, %v324, %v634
        %636 = vst [vmem:[%s621 + $0xc] sm:$0xf] %v635
        %637 = vst [vmem:[%s621 + $0x10] sm:$0xf] %v333
        %v638 = vld [vmem:[%s621 + $0x14] sm:$0x1]
        %v639 = vsel %vm630, %v334, %v638
        %640 = vst [vmem:[%s621 + $0x14] sm:$0x1] %v639
        %v641 = vld [vmem:[%s621 + $0x18] sm:$0xf]
        %v642 = vsel %vm624, %v341, %v641
        %643 = vst [vmem:[%s621 + $0x18] sm:$0xf] %v642
        %644 = vst [vmem:[%s621 + $0x1c] sm:$0xf] %v350
        %v645 = vld [vmem:[%s621 + $0x20] sm:$0x1]
        %v646 = vsel %vm630, %v351, %v645
        %647 = vst [vmem:[%s621 + $0x20] sm:$0x1] %v646
        %v648 = vld [vmem:[%s621 + $0x24] sm:$0xf]
        %v649 = vsel %vm624, %v358, %v648
        %650 = vst [vmem:[%s621 + $0x24] sm:$0xf] %v649
        %651 = vst [vmem:[%s621 + $0x28] sm:$0xf] %v367
        %v652 = vld [vmem:[%s621 + $0x2c] sm:$0x1]
        %v653 = vsel %vm630, %v368, %v652
        %654 = vst [vmem:[%s621 + $0x2c] sm:$0x1] %v653
        %v655 = vld [vmem:[%s621 + $0x30] sm:$0xf]
        %v656 = vsel %vm624, %v375, %v655
        %657 = vst [vmem:[%s621 + $0x30] sm:$0xf] %v656
        %658 = vst [vmem:[%s621 + $0x34] sm:$0xf] %v384
        %v659 = vld [vmem:[%s621 + $0x38] sm:$0x1]
        %v660 = vsel %vm630, %v385, %v659
        %661 = vst [vmem:[%s621 + $0x38] sm:$0x1] %v660
        %v662 = vld [vmem:[%s621 + $0x3c] sm:$0xf]
        %v663 = vsel %vm624, %v392, %v662
        %664 = vst [vmem:[%s621 + $0x3c] sm:$0xf] %v663
        %665 = vst [vmem:[%s621 + $0x40] sm:$0xf] %v401
        %v666 = vld [vmem:[%s621 + $0x44] sm:$0x1]
        %v667 = vsel %vm630, %v402, %v666
        %668 = vst [vmem:[%s621 + $0x44] sm:$0x1] %v667
        %v669 = vld [vmem:[%s621 + $0x48] sm:$0xf]
        %v670 = vsel %vm624, %v409, %v669
        %671 = vst [vmem:[%s621 + $0x48] sm:$0xf] %v670
        %672 = vst [vmem:[%s621 + $0x4c] sm:$0xf] %v418
        %v673 = vld [vmem:[%s621 + $0x50] sm:$0x1]
        %v674 = vsel %vm630, %v419, %v673
        %675 = vst [vmem:[%s621 + $0x50] sm:$0x1] %v674
        %v676 = vld [vmem:[%s621 + $0x54] sm:$0xf]
        %v677 = vsel %vm624, %v426, %v676
        %678 = vst [vmem:[%s621 + $0x54] sm:$0xf] %v677
        %679 = vst [vmem:[%s621 + $0x58] sm:$0xf] %v435
        %v680 = vld [vmem:[%s621 + $0x5c] sm:$0x1]
        %v681 = vsel %vm630, %v436, %v680
        %682 = vst [vmem:[%s621 + $0x5c] sm:$0x1] %v681
        %v683 = vld [vmem:[%s621 + $0x60] sm:$0xf]
        %v684 = vsel %vm624, %v443, %v683
        %685 = vst [vmem:[%s621 + $0x60] sm:$0xf] %v684
        %686 = vst [vmem:[%s621 + $0x64] sm:$0xf] %v452
        %v687 = vld [vmem:[%s621 + $0x68] sm:$0x1]
        %v688 = vsel %vm630, %v453, %v687
        %689 = vst [vmem:[%s621 + $0x68] sm:$0x1] %v688
        %v690 = vld [vmem:[%s621 + $0x6c] sm:$0xf]
        %v691 = vsel %vm624, %v460, %v690
        %692 = vst [vmem:[%s621 + $0x6c] sm:$0xf] %v691
        %693 = vst [vmem:[%s621 + $0x70] sm:$0xf] %v469
        %v694 = vld [vmem:[%s621 + $0x74] sm:$0x1]
        %v695 = vsel %vm630, %v470, %v694
        %696 = vst [vmem:[%s621 + $0x74] sm:$0x1] %v695
        %v697 = vld [vmem:[%s621 + $0x78] sm:$0xf]
        %v698 = vsel %vm624, %v477, %v697
        %699 = vst [vmem:[%s621 + $0x78] sm:$0xf] %v698
        %700 = vst [vmem:[%s621 + $0x7c] sm:$0xf] %v486
        %v701 = vld [vmem:[%s621 + $0x80] sm:$0x1]
        %v702 = vsel %vm630, %v487, %v701
        %703 = vst [vmem:[%s621 + $0x80] sm:$0x1] %v702
        %v704 = vld [vmem:[%s621 + $0x84] sm:$0xf]
        %v705 = vsel %vm624, %v494, %v704
        %706 = vst [vmem:[%s621 + $0x84] sm:$0xf] %v705
        %707 = vst [vmem:[%s621 + $0x88] sm:$0xf] %v503
        %v708 = vld [vmem:[%s621 + $0x8c] sm:$0x1]
        %v709 = vsel %vm630, %v504, %v708
        %710 = vst [vmem:[%s621 + $0x8c] sm:$0x1] %v709
        %v711 = vld [vmem:[%s621 + $0x90] sm:$0xf]
        %v712 = vsel %vm624, %v511, %v711
        %713 = vst [vmem:[%s621 + $0x90] sm:$0xf] %v712
        %714 = vst [vmem:[%s621 + $0x94] sm:$0xf] %v520
        %v715 = vld [vmem:[%s621 + $0x98] sm:$0x1]
        %v716 = vsel %vm630, %v521, %v715
        %717 = vst [vmem:[%s621 + $0x98] sm:$0x1] %v716
        %v718 = vld [vmem:[%s621 + $0x9c] sm:$0xf]
        %v719 = vsel %vm624, %v528, %v718
        %720 = vst [vmem:[%s621 + $0x9c] sm:$0xf] %v719
        %721 = vst [vmem:[%s621 + $0xa0] sm:$0xf] %v537
        %v722 = vld [vmem:[%s621 + $0xa4] sm:$0x1]
        %v723 = vsel %vm630, %v538, %v722
        %724 = vst [vmem:[%s621 + $0xa4] sm:$0x1] %v723
        %v725 = vld [vmem:[%s621 + $0xa8] sm:$0xf]
        %v726 = vsel %vm624, %v545, %v725
        %727 = vst [vmem:[%s621 + $0xa8] sm:$0xf] %v726
        %728 = vst [vmem:[%s621 + $0xac] sm:$0xf] %v554
        %v729 = vld [vmem:[%s621 + $0xb0] sm:$0x1]
        %v730 = vsel %vm630, %v555, %v729
        %731 = vst [vmem:[%s621 + $0xb0] sm:$0x1] %v730
        %v732 = vld [vmem:[%s621 + $0xb4] sm:$0xf]
        %v733 = vsel %vm624, %v562, %v732
        %734 = vst [vmem:[%s621 + $0xb4] sm:$0xf] %v733
        %735 = vst [vmem:[%s621 + $0xb8] sm:$0xf] %v571
        %v736 = vld [vmem:[%s621 + $0xbc] sm:$0x1]
        %v737 = vsel %vm630, %v572, %v736
        %738 = vst [vmem:[%s621 + $0xbc] sm:$0x1] %v737
        %v739 = vld [vmem:[#allocation2] sm:$0xf]
        %v740 = vsel %vm624, %v324, %v739
        %741 = vst [vmem:[#allocation2] sm:$0xf] %v740
        %742 = vst [vmem:[#allocation2 + $0x4] sm:$0xf] %v333
        %v743 = vld [vmem:[#allocation2 + $0x8] sm:$0x1]
        %v744 = vsel %vm630, %v334, %v743
        %745 = vst [vmem:[#allocation2 + $0x8] sm:$0x1] %v744
        %s746 = scalar_lea.vmem [#allocation2], 204
        %v747 = vld [vmem:[%s746] sm:$0xf]
        %v748 = vsel %vm624, %v545, %v747
        %749 = vst [vmem:[%s746] sm:$0xf] %v748
        %750 = vst [vmem:[%s746 + $0x4] sm:$0xf] %v554
        %v751 = vld [vmem:[%s746 + $0x8] sm:$0x1]
        %v752 = vsel %vm630, %v555, %v751
        %753 = vst [vmem:[%s746 + $0x8] sm:$0x1] %v752
        %v754 = vld [vmem:[#allocation2] sm:$0x2]
        %v755 = vld [vmem:[#allocation2 + $0xc] sm:$0x2]
        %v756 = vld [vmem:[#allocation2 + $0x18] sm:$0x2]
        %v757 = vld [vmem:[#allocation2 + $0x24] sm:$0x2]
        %v758 = vld [vmem:[#allocation2 + $0x30] sm:$0x2]
        %v759 = vld [vmem:[#allocation2 + $0x3c] sm:$0x2]
        %v760 = vld [vmem:[#allocation2 + $0x48] sm:$0x2]
        %v761 = vld [vmem:[#allocation2 + $0x54] sm:$0x2]
        %v762 = vld [vmem:[#allocation2 + $0x60] sm:$0x2]
        %v763 = vld [vmem:[#allocation2 + $0x6c] sm:$0x2]
        %v764 = vld [vmem:[#allocation2 + $0x78] sm:$0x2]
        %v765 = vld [vmem:[#allocation2 + $0x84] sm:$0x2]
        %v766 = vld [vmem:[#allocation2 + $0x90] sm:$0x2]
        %v767 = vld [vmem:[#allocation2 + $0x9c] sm:$0x2]
        %v768 = vld [vmem:[#allocation2 + $0xa8] sm:$0x2]
        %v769 = vld [vmem:[#allocation2 + $0xb4] sm:$0x2]
        %v770 = vld [vmem:[#allocation2 + $0xc0] sm:$0x2]
        %v771 = vld [vmem:[#allocation2 + $0xcc] sm:$0x2]
        %v790 = vrot.slane %v754, 5
        %v791 = vrot.slane %v790, 4
        %v792 = vrot.slane %v755, 5
        %v793 = vrot.slane %v792, 4
        %v794 = vrot.slane %v756, 5
        %v795 = vrot.slane %v794, 4
        %v796 = vrot.slane %v757, 5
        %v797 = vrot.slane %v796, 4
        %v798 = vrot.slane %v758, 5
        %v799 = vrot.slane %v798, 4
        %v800 = vrot.slane %v759, 5
        %v801 = vrot.slane %v800, 4
        %v802 = vrot.slane %v760, 5
        %v803 = vrot.slane %v802, 4
        %v804 = vrot.slane %v761, 5
        %v805 = vrot.slane %v804, 4
        %v806 = vrot.slane %v762, 5
        %v807 = vrot.slane %v806, 4
        %v808 = vrot.slane %v763, 5
        %v809 = vrot.slane %v808, 4
        %v810 = vrot.slane %v764, 5
        %v811 = vrot.slane %v810, 4
        %v812 = vrot.slane %v765, 5
        %v813 = vrot.slane %v812, 4
        %v814 = vrot.slane %v766, 5
        %v815 = vrot.slane %v814, 4
        %v816 = vrot.slane %v767, 5
        %v817 = vrot.slane %v816, 4
        %v818 = vrot.slane %v768, 5
        %v819 = vrot.slane %v818, 4
        %v820 = vrot.slane %v769, 5
        %v821 = vrot.slane %v820, 4
        %v822 = vrot.slane %v770, 5
        %v823 = vrot.slane %v822, 4
        %v824 = vrot.slane %v771, 5
        %v825 = vrot.slane %v824, 4
        %v844 = vld [vmem:[#allocation2] sm:$0x1]
        %v845 = vsel %vm630, %v791, %v844
        %846 = vst [vmem:[#allocation2] sm:$0x1] %v845
        %v847 = vld [vmem:[#allocation2 + $0xc] sm:$0x1]
        %v848 = vsel %vm630, %v793, %v847
        %849 = vst [vmem:[#allocation2 + $0xc] sm:$0x1] %v848
        %v850 = vld [vmem:[#allocation2 + $0x18] sm:$0x1]
        %v851 = vsel %vm630, %v795, %v850
        %852 = vst [vmem:[#allocation2 + $0x18] sm:$0x1] %v851
        %v853 = vld [vmem:[#allocation2 + $0x24] sm:$0x1]
        %v854 = vsel %vm630, %v797, %v853
        %855 = vst [vmem:[#allocation2 + $0x24] sm:$0x1] %v854
        %v856 = vld [vmem:[#allocation2 + $0x30] sm:$0x1]
        %v857 = vsel %vm630, %v799, %v856
        %858 = vst [vmem:[#allocation2 + $0x30] sm:$0x1] %v857
        %v859 = vld [vmem:[#allocation2 + $0x3c] sm:$0x1]
        %v860 = vsel %vm630, %v801, %v859
        %861 = vst [vmem:[#allocation2 + $0x3c] sm:$0x1] %v860
        %v862 = vld [vmem:[#allocation2 + $0x48] sm:$0x1]
        %v863 = vsel %vm630, %v803, %v862
        %864 = vst [vmem:[#allocation2 + $0x48] sm:$0x1] %v863
        %v865 = vld [vmem:[#allocation2 + $0x54] sm:$0x1]
        %v866 = vsel %vm630, %v805, %v865
        %867 = vst [vmem:[#allocation2 + $0x54] sm:$0x1] %v866
        %v868 = vld [vmem:[#allocation2 + $0x60] sm:$0x1]
        %v869 = vsel %vm630, %v807, %v868
        %870 = vst [vmem:[#allocation2 + $0x60] sm:$0x1] %v869
        %v871 = vld [vmem:[#allocation2 + $0x6c] sm:$0x1]
        %v872 = vsel %vm630, %v809, %v871
        %873 = vst [vmem:[#allocation2 + $0x6c] sm:$0x1] %v872
        %v874 = vld [vmem:[#allocation2 + $0x78] sm:$0x1]
        %v875 = vsel %vm630, %v811, %v874
        %876 = vst [vmem:[#allocation2 + $0x78] sm:$0x1] %v875
        %v877 = vld [vmem:[#allocation2 + $0x84] sm:$0x1]
        %v878 = vsel %vm630, %v813, %v877
        %879 = vst [vmem:[#allocation2 + $0x84] sm:$0x1] %v878
        %v880 = vld [vmem:[#allocation2 + $0x90] sm:$0x1]
        %v881 = vsel %vm630, %v815, %v880
        %882 = vst [vmem:[#allocation2 + $0x90] sm:$0x1] %v881
        %v883 = vld [vmem:[#allocation2 + $0x9c] sm:$0x1]
        %v884 = vsel %vm630, %v817, %v883
        %885 = vst [vmem:[#allocation2 + $0x9c] sm:$0x1] %v884
        %v886 = vld [vmem:[#allocation2 + $0xa8] sm:$0x1]
        %v887 = vsel %vm630, %v819, %v886
        %888 = vst [vmem:[#allocation2 + $0xa8] sm:$0x1] %v887
        %v889 = vld [vmem:[#allocation2 + $0xb4] sm:$0x1]
        %v890 = vsel %vm630, %v821, %v889
        %891 = vst [vmem:[#allocation2 + $0xb4] sm:$0x1] %v890
        %v892 = vld [vmem:[#allocation2 + $0xc0] sm:$0x1]
        %v893 = vsel %vm630, %v823, %v892
        %894 = vst [vmem:[#allocation2 + $0xc0] sm:$0x1] %v893
        %v895 = vld [vmem:[#allocation2 + $0xcc] sm:$0x1]
        %v896 = vsel %vm630, %v825, %v895
        %897 = vst [vmem:[#allocation2 + $0xcc] sm:$0x1] %v896
        %v898 = vld [vmem:[#allocation2 + $0x4] sm:$0x8]
        %v899 = vld [vmem:[#allocation2 + $0x10] sm:$0x8]
        %v900 = vld [vmem:[#allocation2 + $0x1c] sm:$0x8]
        %v901 = vld [vmem:[#allocation2 + $0x28] sm:$0x8]
        %v902 = vld [vmem:[#allocation2 + $0x34] sm:$0x8]
        %v903 = vld [vmem:[#allocation2 + $0x40] sm:$0x8]
        %v904 = vld [vmem:[#allocation2 + $0x4c] sm:$0x8]
        %v905 = vld [vmem:[#allocation2 + $0x58] sm:$0x8]
        %v906 = vld [vmem:[#allocation2 + $0x64] sm:$0x8]
        %v907 = vld [vmem:[#allocation2 + $0x70] sm:$0x8]
        %v908 = vld [vmem:[#allocation2 + $0x7c] sm:$0x8]
        %v909 = vld [vmem:[#allocation2 + $0x88] sm:$0x8]
        %v910 = vld [vmem:[#allocation2 + $0x94] sm:$0x8]
        %v911 = vld [vmem:[#allocation2 + $0xa0] sm:$0x8]
        %v912 = vld [vmem:[#allocation2 + $0xac] sm:$0x8]
        %v913 = vld [vmem:[#allocation2 + $0xb8] sm:$0x8]
        %v914 = vld [vmem:[#allocation2 + $0xc4] sm:$0x8]
        %v915 = vld [vmem:[#allocation2 + $0xd0] sm:$0x8]
        %v934 = vrot.slane %v898, 7
        %v935 = vrot.slane %v934, 4
        %v936 = vrot.slane %v899, 7
        %v937 = vrot.slane %v936, 4
        %v938 = vrot.slane %v900, 7
        %v939 = vrot.slane %v938, 4
        %v940 = vrot.slane %v901, 7
        %v941 = vrot.slane %v940, 4
        %v942 = vrot.slane %v902, 7
        %v943 = vrot.slane %v942, 4
        %v944 = vrot.slane %v903, 7
        %v945 = vrot.slane %v944, 4
        %v946 = vrot.slane %v904, 7
        %v947 = vrot.slane %v946, 4
        %v948 = vrot.slane %v905, 7
        %v949 = vrot.slane %v948, 4
        %v950 = vrot.slane %v906, 7
        %v951 = vrot.slane %v950, 4
        %v952 = vrot.slane %v907, 7
        %v953 = vrot.slane %v952, 4
        %v954 = vrot.slane %v908, 7
        %v955 = vrot.slane %v954, 4
        %v956 = vrot.slane %v909, 7
        %v957 = vrot.slane %v956, 4
        %v958 = vrot.slane %v910, 7
        %v959 = vrot.slane %v958, 4
        %v960 = vrot.slane %v911, 7
        %v961 = vrot.slane %v960, 4
        %v962 = vrot.slane %v912, 7
        %v963 = vrot.slane %v962, 4
        %v964 = vrot.slane %v913, 7
        %v965 = vrot.slane %v964, 4
        %v966 = vrot.slane %v914, 7
        %v967 = vrot.slane %v966, 4
        %v968 = vrot.slane %v915, 7
        %v969 = vrot.slane %v968, 4
        %vm988 = vmand %vm629, %vm623
        %v989 = vld [vmem:[#allocation2 + $0x8] sm:$0x1]
        %v990 = vsel %vm988, %v935, %v989
        %991 = vst [vmem:[#allocation2 + $0x8] sm:$0x1] %v990
        %v992 = vld [vmem:[#allocation2 + $0x14] sm:$0x1]
        %v993 = vsel %vm988, %v937, %v992
        %994 = vst [vmem:[#allocation2 + $0x14] sm:$0x1] %v993
        %v995 = vld [vmem:[#allocation2 + $0x20] sm:$0x1]
        %v996 = vsel %vm988, %v939, %v995
        %997 = vst [vmem:[#allocation2 + $0x20] sm:$0x1] %v996
        %v998 = vld [vmem:[#allocation2 + $0x2c] sm:$0x1]
        %v999 = vsel %vm988, %v941, %v998
        %1000 = vst [vmem:[#allocation2 + $0x2c] sm:$0x1] %v999
        %v1001 = vld [vmem:[#allocation2 + $0x38] sm:$0x1]
        %v1002 = vsel %vm988, %v943, %v1001
        %1003 = vst [vmem:[#allocation2 + $0x38] sm:$0x1] %v1002
        %v1004 = vld [vmem:[#allocation2 + $0x44] sm:$0x1]
        %v1005 = vsel %vm988, %v945, %v1004
        %1006 = vst [vmem:[#allocation2 + $0x44] sm:$0x1] %v1005
        %v1007 = vld [vmem:[#allocation2 + $0x50] sm:$0x1]
        %v1008 = vsel %vm988, %v947, %v1007
        %1009 = vst [vmem:[#allocation2 + $0x50] sm:$0x1] %v1008
        %v1010 = vld [vmem:[#allocation2 + $0x5c] sm:$0x1]
        %v1011 = vsel %vm988, %v949, %v1010
        %1012 = vst [vmem:[#allocation2 + $0x5c] sm:$0x1] %v1011
        %v1013 = vld [vmem:[#allocation2 + $0x68] sm:$0x1]
        %v1014 = vsel %vm988, %v951, %v1013
        %1015 = vst [vmem:[#allocation2 + $0x68] sm:$0x1] %v1014
        %v1016 = vld [vmem:[#allocation2 + $0x74] sm:$0x1]
        %v1017 = vsel %vm988, %v953, %v1016
        %1018 = vst [vmem:[#allocation2 + $0x74] sm:$0x1] %v1017
        %v1019 = vld [vmem:[#allocation2 + $0x80] sm:$0x1]
        %v1020 = vsel %vm988, %v955, %v1019
        %1021 = vst [vmem:[#allocation2 + $0x80] sm:$0x1] %v1020
        %v1022 = vld [vmem:[#allocation2 + $0x8c] sm:$0x1]
        %v1023 = vsel %vm988, %v957, %v1022
        %1024 = vst [vmem:[#allocation2 + $0x8c] sm:$0x1] %v1023
        %v1025 = vld [vmem:[#allocation2 + $0x98] sm:$0x1]
        %v1026 = vsel %vm988, %v959, %v1025
        %1027 = vst [vmem:[#allocation2 + $0x98] sm:$0x1] %v1026
        %v1028 = vld [vmem:[#allocation2 + $0xa4] sm:$0x1]
        %v1029 = vsel %vm988, %v961, %v1028
        %1030 = vst [vmem:[#allocation2 + $0xa4] sm:$0x1] %v1029
        %v1031 = vld [vmem:[#allocation2 + $0xb0] sm:$0x1]
        %v1032 = vsel %vm988, %v963, %v1031
        %1033 = vst [vmem:[#allocation2 + $0xb0] sm:$0x1] %v1032
        %v1034 = vld [vmem:[#allocation2 + $0xbc] sm:$0x1]
        %v1035 = vsel %vm988, %v965, %v1034
        %1036 = vst [vmem:[#allocation2 + $0xbc] sm:$0x1] %v1035
        %v1037 = vld [vmem:[#allocation2 + $0xc8] sm:$0x1]
        %v1038 = vsel %vm988, %v967, %v1037
        %1039 = vst [vmem:[#allocation2 + $0xc8] sm:$0x1] %v1038
        %v1040 = vld [vmem:[#allocation2 + $0xd4] sm:$0x1]
        %v1041 = vsel %vm988, %v969, %v1040
        %1042 = vst [vmem:[#allocation2 + $0xd4] sm:$0x1] %v1041
        %v1043 = vld [vmem:[#allocation2] sm:$0xf]
        %v1044 = vld [vmem:[#allocation2 + $0x4] sm:$0xf]
        %v1045 = vld [vmem:[#allocation2 + $0x8] sm:$0x1]
        %v1046 = vld [vmem:[#allocation2 + $0xc] sm:$0xf]
        %v1047 = vld [vmem:[#allocation2 + $0x10] sm:$0xf]
        %v1048 = vld [vmem:[#allocation2 + $0x14] sm:$0x1]
        %v1049 = vld [vmem:[#allocation2 + $0x18] sm:$0xf]
        %v1050 = vld [vmem:[#allocation2 + $0x1c] sm:$0xf]
        %v1051 = vld [vmem:[#allocation2 + $0x20] sm:$0x1]
        %v1052 = vld [vmem:[#allocation2 + $0x24] sm:$0xf]
        %v1053 = vld [vmem:[#allocation2 + $0x28] sm:$0xf]
        %v1054 = vld [vmem:[#allocation2 + $0x2c] sm:$0x1]
        %v1055 = vld [vmem:[#allocation2 + $0x30] sm:$0xf]
        %v1056 = vld [vmem:[#allocation2 + $0x34] sm:$0xf]
        %v1057 = vld [vmem:[#allocation2 + $0x38] sm:$0x1]
        %v1058 = vld [vmem:[#allocation2 + $0x3c] sm:$0xf]
        %v1059 = vld [vmem:[#allocation2 + $0x40] sm:$0xf]
        %v1060 = vld [vmem:[#allocation2 + $0x44] sm:$0x1]
        %v1061 = vld [vmem:[#allocation2 + $0x48] sm:$0xf]
        %v1062 = vld [vmem:[#allocation2 + $0x4c] sm:$0xf]
        %v1063 = vld [vmem:[#allocation2 + $0x50] sm:$0x1]
        %v1064 = vld [vmem:[#allocation2 + $0x54] sm:$0xf]
        %v1065 = vld [vmem:[#allocation2 + $0x58] sm:$0xf]
        %v1066 = vld [vmem:[#allocation2 + $0x5c] sm:$0x1]
        %v1067 = vld [vmem:[#allocation2 + $0x60] sm:$0xf]
        %v1068 = vld [vmem:[#allocation2 + $0x64] sm:$0xf]
        %v1069 = vld [vmem:[#allocation2 + $0x68] sm:$0x1]
        %v1070 = vld [vmem:[#allocation2 + $0x6c] sm:$0xf]
        %v1071 = vld [vmem:[#allocation2 + $0x70] sm:$0xf]
        %v1072 = vld [vmem:[#allocation2 + $0x74] sm:$0x1]
        %v1073 = vld [vmem:[#allocation2 + $0x78] sm:$0xf]
        %v1074 = vld [vmem:[#allocation2 + $0x7c] sm:$0xf]
        %v1075 = vld [vmem:[#allocation2 + $0x80] sm:$0x1]
        %v1076 = vld [vmem:[#allocation2 + $0x84] sm:$0xf]
        %v1077 = vld [vmem:[#allocation2 + $0x88] sm:$0xf]
        %v1078 = vld [vmem:[#allocation2 + $0x8c] sm:$0x1]
        %v1079 = vld [vmem:[#allocation2 + $0x90] sm:$0xf]
        %v1080 = vld [vmem:[#allocation2 + $0x94] sm:$0xf]
        %v1081 = vld [vmem:[#allocation2 + $0x98] sm:$0x1]
        %v1082 = vld [vmem:[#allocation2 + $0x9c] sm:$0xf]
        %v1083 = vld [vmem:[#allocation2 + $0xa0] sm:$0xf]
        %v1084 = vld [vmem:[#allocation2 + $0xa4] sm:$0x1]
        %v1085 = vld [vmem:[#allocation2 + $0xa8] sm:$0xf]
        %v1086 = vld [vmem:[#allocation2 + $0xac] sm:$0xf]
        %v1087 = vld [vmem:[#allocation2 + $0xb0] sm:$0x1]
        %v1088 = vld [vmem:[#allocation2 + $0xb4] sm:$0xf]
        %v1089 = vld [vmem:[#allocation2 + $0xb8] sm:$0xf]
        %v1090 = vld [vmem:[#allocation2 + $0xbc] sm:$0x1]
        %v1091 = vld [vmem:[#allocation2 + $0xc0] sm:$0xf]
        %v1092 = vld [vmem:[#allocation2 + $0xc4] sm:$0xf]
        %v1093 = vld [vmem:[#allocation2 + $0xc8] sm:$0x1]
        %v1094 = vld [vmem:[#allocation2 + $0xcc] sm:$0xf]
        %v1095 = vld [vmem:[#allocation2 + $0xd0] sm:$0xf]
        %v1096 = vld [vmem:[#allocation2 + $0xd4] sm:$0x1]
        %vm1097 = vsmask.f32 3328
        %vm1098 = vsmask.f32 7440
        %vm1099 = vmor %vm1097, %vm1098
        %v1101 = vshrl.u32 %v1043, 16
        %v1103 = vrot.slane %v1101, 4
        %v1104 = vshll.u32 %v1043, 16
        %v1106 = vrot.slane %v1104, 5
        %v1107 = vor.u32 %v1103, %v1106
        %v1108 = vrot.slane %v1107, 4
        %v1110 = vshll.u32 %v1044, 16
        %v1112 = vrot.slane %v1110, 5
        %v1113 = vsel %vm1099, %v1108, %v1112
        %v1114 = vshrl.u32 %v1044, 16
        %v1116 = vrot.slane %v1114, 4
        %v1117 = vor.u32 %v1116, %v1112
        %v1118 = vrot.slane %v1117, 4
        %v1120 = vshll.u32 %v1045, 16
        %v1122 = vrot.slane %v1120, 5
        %v1123 = vsel %vm1099, %v1118, %v1122
        %v1125 = vshrl.u32 %v1046, 16
        %v1127 = vrot.slane %v1125, 4
        %v1128 = vshll.u32 %v1046, 16
        %v1130 = vrot.slane %v1128, 5
        %v1131 = vor.u32 %v1127, %v1130
        %v1132 = vrot.slane %v1131, 4
        %v1134 = vshll.u32 %v1047, 16
        %v1136 = vrot.slane %v1134, 5
        %v1137 = vsel %vm1099, %v1132, %v1136
        %v1138 = vshrl.u32 %v1047, 16
        %v1140 = vrot.slane %v1138, 4
        %v1141 = vor.u32 %v1140, %v1136
        %v1142 = vrot.slane %v1141, 4
        %v1144 = vshll.u32 %v1048, 16
        %v1146 = vrot.slane %v1144, 5
        %v1147 = vsel %vm1099, %v1142, %v1146
        %v1149 = vshrl.u32 %v1049, 16
        %v1151 = vrot.slane %v1149, 4
        %v1152 = vshll.u32 %v1049, 16
        %v1154 = vrot.slane %v1152, 5
        %v1155 = vor.u32 %v1151, %v1154
        %v1156 = vrot.slane %v1155, 4
        %v1158 = vshll.u32 %v1050, 16
        %v1160 = vrot.slane %v1158, 5
        %v1161 = vsel %vm1099, %v1156, %v1160
        %v1162 = vshrl.u32 %v1050, 16
        %v1164 = vrot.slane %v1162, 4
        %v1165 = vor.u32 %v1164, %v1160
        %v1166 = vrot.slane %v1165, 4
        %v1168 = vshll.u32 %v1051, 16
        %v1170 = vrot.slane %v1168, 5
        %v1171 = vsel %vm1099, %v1166, %v1170
        %v1173 = vshrl.u32 %v1052, 16
        %v1175 = vrot.slane %v1173, 4
        %v1176 = vshll.u32 %v1052, 16
        %v1178 = vrot.slane %v1176, 5
        %v1179 = vor.u32 %v1175, %v1178
        %v1180 = vrot.slane %v1179, 4
        %v1182 = vshll.u32 %v1053, 16
        %v1184 = vrot.slane %v1182, 5
        %v1185 = vsel %vm1099, %v1180, %v1184
        %v1186 = vshrl.u32 %v1053, 16
        %v1188 = vrot.slane %v1186, 4
        %v1189 = vor.u32 %v1188, %v1184
        %v1190 = vrot.slane %v1189, 4
        %v1192 = vshll.u32 %v1054, 16
        %v1194 = vrot.slane %v1192, 5
        %v1195 = vsel %vm1099, %v1190, %v1194
        %v1197 = vshrl.u32 %v1055, 16
        %v1199 = vrot.slane %v1197, 4
        %v1200 = vshll.u32 %v1055, 16
        %v1202 = vrot.slane %v1200, 5
        %v1203 = vor.u32 %v1199, %v1202
        %v1204 = vrot.slane %v1203, 4
        %v1206 = vshll.u32 %v1056, 16
        %v1208 = vrot.slane %v1206, 5
        %v1209 = vsel %vm1099, %v1204, %v1208
        %v1210 = vshrl.u32 %v1056, 16
        %v1212 = vrot.slane %v1210, 4
        %v1213 = vor.u32 %v1212, %v1208
        %v1214 = vrot.slane %v1213, 4
        %v1216 = vshll.u32 %v1057, 16
        %v1218 = vrot.slane %v1216, 5
        %v1219 = vsel %vm1099, %v1214, %v1218
        %v1221 = vshrl.u32 %v1058, 16
        %v1223 = vrot.slane %v1221, 4
        %v1224 = vshll.u32 %v1058, 16
        %v1226 = vrot.slane %v1224, 5
        %v1227 = vor.u32 %v1223, %v1226
        %v1228 = vrot.slane %v1227, 4
        %v1230 = vshll.u32 %v1059, 16
        %v1232 = vrot.slane %v1230, 5
        %v1233 = vsel %vm1099, %v1228, %v1232
        %v1234 = vshrl.u32 %v1059, 16
        %v1236 = vrot.slane %v1234, 4
        %v1237 = vor.u32 %v1236, %v1232
        %v1238 = vrot.slane %v1237, 4
        %v1240 = vshll.u32 %v1060, 16
        %v1242 = vrot.slane %v1240, 5
        %v1243 = vsel %vm1099, %v1238, %v1242
        %v1245 = vshrl.u32 %v1061, 16
        %v1247 = vrot.slane %v1245, 4
        %v1248 = vshll.u32 %v1061, 16
        %v1250 = vrot.slane %v1248, 5
        %v1251 = vor.u32 %v1247, %v1250
        %v1252 = vrot.slane %v1251, 4
        %v1254 = vshll.u32 %v1062, 16
        %v1256 = vrot.slane %v1254, 5
        %v1257 = vsel %vm1099, %v1252, %v1256
        %v1258 = vshrl.u32 %v1062, 16
        %v1260 = vrot.slane %v1258, 4
        %v1261 = vor.u32 %v1260, %v1256
        %v1262 = vrot.slane %v1261, 4
        %v1264 = vshll.u32 %v1063, 16
        %v1266 = vrot.slane %v1264, 5
        %v1267 = vsel %vm1099, %v1262, %v1266
        %v1269 = vshrl.u32 %v1064, 16
        %v1271 = vrot.slane %v1269, 4
        %v1272 = vshll.u32 %v1064, 16
        %v1274 = vrot.slane %v1272, 5
        %v1275 = vor.u32 %v1271, %v1274
        %v1276 = vrot.slane %v1275, 4
        %v1278 = vshll.u32 %v1065, 16
        %v1280 = vrot.slane %v1278, 5
        %v1281 = vsel %vm1099, %v1276, %v1280
        %v1282 = vshrl.u32 %v1065, 16
        %v1284 = vrot.slane %v1282, 4
        %v1285 = vor.u32 %v1284, %v1280
        %v1286 = vrot.slane %v1285, 4
        %v1288 = vshll.u32 %v1066, 16
        %v1290 = vrot.slane %v1288, 5
        %v1291 = vsel %vm1099, %v1286, %v1290
        %v1293 = vshrl.u32 %v1067, 16
        %v1295 = vrot.slane %v1293, 4
        %v1296 = vshll.u32 %v1067, 16
        %v1298 = vrot.slane %v1296, 5
        %v1299 = vor.u32 %v1295, %v1298
        %v1300 = vrot.slane %v1299, 4
        %v1302 = vshll.u32 %v1068, 16
        %v1304 = vrot.slane %v1302, 5
        %v1305 = vsel %vm1099, %v1300, %v1304
        %v1306 = vshrl.u32 %v1068, 16
        %v1308 = vrot.slane %v1306, 4
        %v1309 = vor.u32 %v1308, %v1304
        %v1310 = vrot.slane %v1309, 4
        %v1312 = vshll.u32 %v1069, 16
        %v1314 = vrot.slane %v1312, 5
        %v1315 = vsel %vm1099, %v1310, %v1314
        %v1317 = vshrl.u32 %v1070, 16
        %v1319 = vrot.slane %v1317, 4
        %v1320 = vshll.u32 %v1070, 16
        %v1322 = vrot.slane %v1320, 5
        %v1323 = vor.u32 %v1319, %v1322
        %v1324 = vrot.slane %v1323, 4
        %v1326 = vshll.u32 %v1071, 16
        %v1328 = vrot.slane %v1326, 5
        %v1329 = vsel %vm1099, %v1324, %v1328
        %v1330 = vshrl.u32 %v1071, 16
        %v1332 = vrot.slane %v1330, 4
        %v1333 = vor.u32 %v1332, %v1328
        %v1334 = vrot.slane %v1333, 4
        %v1336 = vshll.u32 %v1072, 16
        %v1338 = vrot.slane %v1336, 5
        %v1339 = vsel %vm1099, %v1334, %v1338
        %v1341 = vshrl.u32 %v1073, 16
        %v1343 = vrot.slane %v1341, 4
        %v1344 = vshll.u32 %v1073, 16
        %v1346 = vrot.slane %v1344, 5
        %v1347 = vor.u32 %v1343, %v1346
        %v1348 = vrot.slane %v1347, 4
        %v1350 = vshll.u32 %v1074, 16
        %v1352 = vrot.slane %v1350, 5
        %v1353 = vsel %vm1099, %v1348, %v1352
        %v1354 = vshrl.u32 %v1074, 16
        %v1356 = vrot.slane %v1354, 4
        %v1357 = vor.u32 %v1356, %v1352
        %v1358 = vrot.slane %v1357, 4
        %v1360 = vshll.u32 %v1075, 16
        %v1362 = vrot.slane %v1360, 5
        %v1363 = vsel %vm1099, %v1358, %v1362
        %v1365 = vshrl.u32 %v1076, 16
        %v1367 = vrot.slane %v1365, 4
        %v1368 = vshll.u32 %v1076, 16
        %v1370 = vrot.slane %v1368, 5
        %v1371 = vor.u32 %v1367, %v1370
        %v1372 = vrot.slane %v1371, 4
        %v1374 = vshll.u32 %v1077, 16
        %v1376 = vrot.slane %v1374, 5
        %v1377 = vsel %vm1099, %v1372, %v1376
        %v1378 = vshrl.u32 %v1077, 16
        %v1380 = vrot.slane %v1378, 4
        %v1381 = vor.u32 %v1380, %v1376
        %v1382 = vrot.slane %v1381, 4
        %v1384 = vshll.u32 %v1078, 16
        %v1386 = vrot.slane %v1384, 5
        %v1387 = vsel %vm1099, %v1382, %v1386
        %v1389 = vshrl.u32 %v1079, 16
        %v1391 = vrot.slane %v1389, 4
        %v1392 = vshll.u32 %v1079, 16
        %v1394 = vrot.slane %v1392, 5
        %v1395 = vor.u32 %v1391, %v1394
        %v1396 = vrot.slane %v1395, 4
        %v1398 = vshll.u32 %v1080, 16
        %v1400 = vrot.slane %v1398, 5
        %v1401 = vsel %vm1099, %v1396, %v1400
        %v1402 = vshrl.u32 %v1080, 16
        %v1404 = vrot.slane %v1402, 4
        %v1405 = vor.u32 %v1404, %v1400
        %v1406 = vrot.slane %v1405, 4
        %v1408 = vshll.u32 %v1081, 16
        %v1410 = vrot.slane %v1408, 5
        %v1411 = vsel %vm1099, %v1406, %v1410
        %v1413 = vshrl.u32 %v1082, 16
        %v1415 = vrot.slane %v1413, 4
        %v1416 = vshll.u32 %v1082, 16
        %v1418 = vrot.slane %v1416, 5
        %v1419 = vor.u32 %v1415, %v1418
        %v1420 = vrot.slane %v1419, 4
        %v1422 = vshll.u32 %v1083, 16
        %v1424 = vrot.slane %v1422, 5
        %v1425 = vsel %vm1099, %v1420, %v1424
        %v1426 = vshrl.u32 %v1083, 16
        %v1428 = vrot.slane %v1426, 4
        %v1429 = vor.u32 %v1428, %v1424
        %v1430 = vrot.slane %v1429, 4
        %v1432 = vshll.u32 %v1084, 16
        %v1434 = vrot.slane %v1432, 5
        %v1435 = vsel %vm1099, %v1430, %v1434
        %v1437 = vshrl.u32 %v1085, 16
        %v1439 = vrot.slane %v1437, 4
        %v1440 = vshll.u32 %v1085, 16
        %v1442 = vrot.slane %v1440, 5
        %v1443 = vor.u32 %v1439, %v1442
        %v1444 = vrot.slane %v1443, 4
        %v1446 = vshll.u32 %v1086, 16
        %v1448 = vrot.slane %v1446, 5
        %v1449 = vsel %vm1099, %v1444, %v1448
        %v1450 = vshrl.u32 %v1086, 16
        %v1452 = vrot.slane %v1450, 4
        %v1453 = vor.u32 %v1452, %v1448
        %v1454 = vrot.slane %v1453, 4
        %v1456 = vshll.u32 %v1087, 16
        %v1458 = vrot.slane %v1456, 5
        %v1459 = vsel %vm1099, %v1454, %v1458
        %v1461 = vshrl.u32 %v1088, 16
        %v1463 = vrot.slane %v1461, 4
        %v1464 = vshll.u32 %v1088, 16
        %v1466 = vrot.slane %v1464, 5
        %v1467 = vor.u32 %v1463, %v1466
        %v1468 = vrot.slane %v1467, 4
        %v1470 = vshll.u32 %v1089, 16
        %v1472 = vrot.slane %v1470, 5
        %v1473 = vsel %vm1099, %v1468, %v1472
        %v1474 = vshrl.u32 %v1089, 16
        %v1476 = vrot.slane %v1474, 4
        %v1477 = vor.u32 %v1476, %v1472
        %v1478 = vrot.slane %v1477, 4
        %v1480 = vshll.u32 %v1090, 16
        %v1482 = vrot.slane %v1480, 5
        %v1483 = vsel %vm1099, %v1478, %v1482
        %vm1532 = vcmask 1042432
        %vm1533 = vcmask 1046532
        %vm1534 = vmor %vm1532, %vm1533
        %v1535 = vrot.slane %v1043, 5
        %v1536 = vrot.slane %v1535, 4
        %v1537 = vrot.slane %v1044, 5
        %v1538 = vsel %vm1534, %v1536, %v1537
        %v1539 = vrot.slane %v1537, 4
        %v1540 = vrot.slane %v1045, 5
        %v1541 = vsel %vm1534, %v1539, %v1540
        %v1542 = vrot.slane %v1046, 5
        %v1543 = vrot.slane %v1542, 4
        %v1544 = vrot.slane %v1047, 5
        %v1545 = vsel %vm1534, %v1543, %v1544
        %v1546 = vrot.slane %v1544, 4
        %v1547 = vrot.slane %v1048, 5
        %v1548 = vsel %vm1534, %v1546, %v1547
        %v1549 = vrot.slane %v1049, 5
        %v1550 = vrot.slane %v1549, 4
        %v1551 = vrot.slane %v1050, 5
        %v1552 = vsel %vm1534, %v1550, %v1551
        %v1553 = vrot.slane %v1551, 4
        %v1554 = vrot.slane %v1051, 5
        %v1555 = vsel %vm1534, %v1553, %v1554
        %v1556 = vrot.slane %v1052, 5
        %v1557 = vrot.slane %v1556, 4
        %v1558 = vrot.slane %v1053, 5
        %v1559 = vsel %vm1534, %v1557, %v1558
        %v1560 = vrot.slane %v1558, 4
        %v1561 = vrot.slane %v1054, 5
        %v1562 = vsel %vm1534, %v1560, %v1561
        %v1563 = vrot.slane %v1055, 5
        %v1564 = vrot.slane %v1563, 4
        %v1565 = vrot.slane %v1056, 5
        %v1566 = vsel %vm1534, %v1564, %v1565
        %v1567 = vrot.slane %v1565, 4
        %v1568 = vrot.slane %v1057, 5
        %v1569 = vsel %vm1534, %v1567, %v1568
        %v1570 = vrot.slane %v1058, 5
        %v1571 = vrot.slane %v1570, 4
        %v1572 = vrot.slane %v1059, 5
        %v1573 = vsel %vm1534, %v1571, %v1572
        %v1574 = vrot.slane %v1572, 4
        %v1575 = vrot.slane %v1060, 5
        %v1576 = vsel %vm1534, %v1574, %v1575
        %v1577 = vrot.slane %v1061, 5
        %v1578 = vrot.slane %v1577, 4
        %v1579 = vrot.slane %v1062, 5
        %v1580 = vsel %vm1534, %v1578, %v1579
        %v1581 = vrot.slane %v1579, 4
        %v1582 = vrot.slane %v1063, 5
        %v1583 = vsel %vm1534, %v1581, %v1582
        %v1584 = vrot.slane %v1064, 5
        %v1585 = vrot.slane %v1584, 4
        %v1586 = vrot.slane %v1065, 5
        %v1587 = vsel %vm1534, %v1585, %v1586
        %v1588 = vrot.slane %v1586, 4
        %v1589 = vrot.slane %v1066, 5
        %v1590 = vsel %vm1534, %v1588, %v1589
        %v1591 = vrot.slane %v1067, 5
        %v1592 = vrot.slane %v1591, 4
        %v1593 = vrot.slane %v1068, 5
        %v1594 = vsel %vm1534, %v1592, %v1593
        %v1595 = vrot.slane %v1593, 4
        %v1596 = vrot.slane %v1069, 5
        %v1597 = vsel %vm1534, %v1595, %v1596
        %v1598 = vrot.slane %v1070, 5
        %v1599 = vrot.slane %v1598, 4
        %v1600 = vrot.slane %v1071, 5
        %v1601 = vsel %vm1534, %v1599, %v1600
        %v1602 = vrot.slane %v1600, 4
        %v1603 = vrot.slane %v1072, 5
        %v1604 = vsel %vm1534, %v1602, %v1603
        %v1605 = vrot.slane %v1073, 5
        %v1606 = vrot.slane %v1605, 4
        %v1607 = vrot.slane %v1074, 5
        %v1608 = vsel %vm1534, %v1606, %v1607
        %v1609 = vrot.slane %v1607, 4
        %v1610 = vrot.slane %v1075, 5
        %v1611 = vsel %vm1534, %v1609, %v1610
        %v1612 = vrot.slane %v1076, 5
        %v1613 = vrot.slane %v1612, 4
        %v1614 = vrot.slane %v1077, 5
        %v1615 = vsel %vm1534, %v1613, %v1614
        %v1616 = vrot.slane %v1614, 4
        %v1617 = vrot.slane %v1078, 5
        %v1618 = vsel %vm1534, %v1616, %v1617
        %v1619 = vrot.slane %v1079, 5
        %v1620 = vrot.slane %v1619, 4
        %v1621 = vrot.slane %v1080, 5
        %v1622 = vsel %vm1534, %v1620, %v1621
        %v1623 = vrot.slane %v1621, 4
        %v1624 = vrot.slane %v1081, 5
        %v1625 = vsel %vm1534, %v1623, %v1624
        %v1626 = vrot.slane %v1082, 5
        %v1627 = vrot.slane %v1626, 4
        %v1628 = vrot.slane %v1083, 5
        %v1629 = vsel %vm1534, %v1627, %v1628
        %v1630 = vrot.slane %v1628, 4
        %v1631 = vrot.slane %v1084, 5
        %v1632 = vsel %vm1534, %v1630, %v1631
        %v1633 = vrot.slane %v1085, 5
        %v1634 = vrot.slane %v1633, 4
        %v1635 = vrot.slane %v1086, 5
        %v1636 = vsel %vm1534, %v1634, %v1635
        %v1637 = vrot.slane %v1635, 4
        %v1638 = vrot.slane %v1087, 5
        %v1639 = vsel %vm1534, %v1637, %v1638
        %v1640 = vrot.slane %v1088, 5
        %v1641 = vrot.slane %v1640, 4
        %v1642 = vrot.slane %v1089, 5
        %v1643 = vsel %vm1534, %v1641, %v1642
        %v1644 = vrot.slane %v1642, 4
        %v1645 = vrot.slane %v1090, 5
        %v1646 = vsel %vm1534, %v1644, %v1645
        %v1648 = vshrl.u32 %v1091, 16
        %v1650 = vrot.slane %v1648, 4
        %v1651 = vshll.u32 %v1091, 16
        %v1653 = vrot.slane %v1651, 5
        %v1654 = vor.u32 %v1650, %v1653
        %v1655 = vrot.slane %v1654, 4
        %v1657 = vshll.u32 %v1092, 16
        %v1659 = vrot.slane %v1657, 5
        %v1660 = vsel %vm1099, %v1655, %v1659
        %v1661 = vshrl.u32 %v1092, 16
        %v1663 = vrot.slane %v1661, 4
        %v1664 = vor.u32 %v1663, %v1659
        %v1665 = vrot.slane %v1664, 4
        %v1667 = vshll.u32 %v1093, 16
        %v1669 = vrot.slane %v1667, 5
        %v1670 = vsel %vm1099, %v1665, %v1669
        %v1674 = vrot.slane %v1091, 5
        %v1675 = vrot.slane %v1674, 4
        %v1676 = vrot.slane %v1092, 5
        %v1677 = vsel %vm1534, %v1675, %v1676
        %v1678 = vrot.slane %v1676, 4
        %v1679 = vrot.slane %v1093, 5
        %v1680 = vsel %vm1534, %v1678, %v1679
        %v1682 = vshrl.u32 %v1094, 16
        %v1684 = vrot.slane %v1682, 4
        %v1685 = vshll.u32 %v1094, 16
        %v1687 = vrot.slane %v1685, 5
        %v1688 = vor.u32 %v1684, %v1687
        %v1689 = vrot.slane %v1688, 4
        %v1691 = vshll.u32 %v1095, 16
        %v1693 = vrot.slane %v1691, 5
        %v1694 = vsel %vm1099, %v1689, %v1693
        %v1695 = vshrl.u32 %v1095, 16
        %v1697 = vrot.slane %v1695, 4
        %v1698 = vor.u32 %v1697, %v1693
        %v1699 = vrot.slane %v1698, 4
        %v1701 = vshll.u32 %v1096, 16
        %v1703 = vrot.slane %v1701, 5
        %v1704 = vsel %vm1099, %v1699, %v1703
        %v1708 = vrot.slane %v1094, 5
        %v1709 = vrot.slane %v1708, 4
        %v1710 = vrot.slane %v1095, 5
        %v1711 = vsel %vm1534, %v1709, %v1710
        %v1712 = vrot.slane %v1710, 4
        %v1713 = vrot.slane %v1096, 5
        %v1714 = vsel %vm1534, %v1712, %v1713
        %v1715 = vunpack.c.l.b16 %v1043
        %v1716 = vunpack.c.l.b16 %v1044
        %v1717 = vunpack.c.l.b16 %v1046
        %v1718 = vunpack.c.l.b16 %v1047
        %v1719 = vunpack.c.l.b16 %v1049
        %v1720 = vunpack.c.l.b16 %v1050
        %v1721 = vunpack.c.l.b16 %v1052
        %v1722 = vunpack.c.l.b16 %v1053
        %v1723 = vunpack.c.l.b16 %v1055
        %v1724 = vunpack.c.l.b16 %v1056
        %v1725 = vunpack.c.l.b16 %v1058
        %v1726 = vunpack.c.l.b16 %v1059
        %v1727 = vunpack.c.l.b16 %v1061
        %v1728 = vunpack.c.l.b16 %v1062
        %v1729 = vunpack.c.l.b16 %v1064
        %v1730 = vunpack.c.l.b16 %v1065
        %v1731 = vunpack.c.l.b16 %v1067
        %v1732 = vunpack.c.l.b16 %v1068
        %v1733 = vunpack.c.l.b16 %v1070
        %v1734 = vunpack.c.l.b16 %v1071
        %v1735 = vunpack.c.l.b16 %v1073
        %v1736 = vunpack.c.l.b16 %v1074
        %v1737 = vunpack.c.l.b16 %v1076
        %v1738 = vunpack.c.l.b16 %v1077
        %v1739 = vunpack.c.l.b16 %v1079
        %v1740 = vunpack.c.l.b16 %v1080
        %v1741 = vunpack.c.l.b16 %v1082
        %v1742 = vunpack.c.l.b16 %v1083
        %v1743 = vunpack.c.l.b16 %v1085
        %v1744 = vunpack.c.l.b16 %v1086
        %v1745 = vunpack.c.l.b16 %v1088
        %v1746 = vunpack.c.l.b16 %v1089
        %v1747 = vpack.c.b16 %v1716, %v1715
        %v1748 = vpack.c.b16 %v1718, %v1717
        %v1749 = vpack.c.b16 %v1720, %v1719
        %v1750 = vpack.c.b16 %v1722, %v1721
        %v1751 = vpack.c.b16 %v1724, %v1723
        %v1752 = vpack.c.b16 %v1726, %v1725
        %v1753 = vpack.c.b16 %v1728, %v1727
        %v1754 = vpack.c.b16 %v1730, %v1729
        %v1755 = vpack.c.b16 %v1732, %v1731
        %v1756 = vpack.c.b16 %v1734, %v1733
        %v1757 = vpack.c.b16 %v1736, %v1735
        %v1758 = vpack.c.b16 %v1738, %v1737
        %v1759 = vpack.c.b16 %v1740, %v1739
        %v1760 = vpack.c.b16 %v1742, %v1741
        %v1761 = vpack.c.b16 %v1744, %v1743
        %v1762 = vpack.c.b16 %v1746, %v1745
        %v1779 = vunpack.c.l.b16 %v1113
        %v1780 = vunpack.c.l.b16 %v1123
        %v1781 = vunpack.c.l.b16 %v1137
        %v1782 = vunpack.c.l.b16 %v1147
        %v1783 = vunpack.c.l.b16 %v1161
        %v1784 = vunpack.c.l.b16 %v1171
        %v1785 = vunpack.c.l.b16 %v1185
        %v1786 = vunpack.c.l.b16 %v1195
        %v1787 = vunpack.c.l.b16 %v1209
        %v1788 = vunpack.c.l.b16 %v1219
        %v1789 = vunpack.c.l.b16 %v1233
        %v1790 = vunpack.c.l.b16 %v1243
        %v1791 = vunpack.c.l.b16 %v1257
        %v1792 = vunpack.c.l.b16 %v1267
        %v1793 = vunpack.c.l.b16 %v1281
        %v1794 = vunpack.c.l.b16 %v1291
        %v1795 = vunpack.c.l.b16 %v1305
        %v1796 = vunpack.c.l.b16 %v1315
        %v1797 = vunpack.c.l.b16 %v1329
        %v1798 = vunpack.c.l.b16 %v1339
        %v1799 = vunpack.c.l.b16 %v1353
        %v1800 = vunpack.c.l.b16 %v1363
        %v1801 = vunpack.c.l.b16 %v1377
        %v1802 = vunpack.c.l.b16 %v1387
        %v1803 = vunpack.c.l.b16 %v1401
        %v1804 = vunpack.c.l.b16 %v1411
        %v1805 = vunpack.c.l.b16 %v1425
        %v1806 = vunpack.c.l.b16 %v1435
        %v1807 = vunpack.c.l.b16 %v1449
        %v1808 = vunpack.c.l.b16 %v1459
        %v1809 = vunpack.c.l.b16 %v1473
        %v1810 = vunpack.c.l.b16 %v1483
        %v1811 = vpack.c.b16 %v1780, %v1779
        %v1812 = vpack.c.b16 %v1782, %v1781
        %v1813 = vpack.c.b16 %v1784, %v1783
        %v1814 = vpack.c.b16 %v1786, %v1785
        %v1815 = vpack.c.b16 %v1788, %v1787
        %v1816 = vpack.c.b16 %v1790, %v1789
        %v1817 = vpack.c.b16 %v1792, %v1791
        %v1818 = vpack.c.b16 %v1794, %v1793
        %v1819 = vpack.c.b16 %v1796, %v1795
        %v1820 = vpack.c.b16 %v1798, %v1797
        %v1821 = vpack.c.b16 %v1800, %v1799
        %v1822 = vpack.c.b16 %v1802, %v1801
        %v1823 = vpack.c.b16 %v1804, %v1803
        %v1824 = vpack.c.b16 %v1806, %v1805
        %v1825 = vpack.c.b16 %v1808, %v1807
        %v1826 = vpack.c.b16 %v1810, %v1809
        %v1843 = vunpack.c.l.b16 %v1538
        %v1844 = vunpack.c.l.b16 %v1541
        %v1845 = vunpack.c.l.b16 %v1545
        %v1846 = vunpack.c.l.b16 %v1548
        %v1847 = vunpack.c.l.b16 %v1552
        %v1848 = vunpack.c.l.b16 %v1555
        %v1849 = vunpack.c.l.b16 %v1559
        %v1850 = vunpack.c.l.b16 %v1562
        %v1851 = vunpack.c.l.b16 %v1566
        %v1852 = vunpack.c.l.b16 %v1569
        %v1853 = vunpack.c.l.b16 %v1573
        %v1854 = vunpack.c.l.b16 %v1576
        %v1855 = vunpack.c.l.b16 %v1580
        %v1856 = vunpack.c.l.b16 %v1583
        %v1857 = vunpack.c.l.b16 %v1587
        %v1858 = vunpack.c.l.b16 %v1590
        %v1859 = vunpack.c.l.b16 %v1594
        %v1860 = vunpack.c.l.b16 %v1597
        %v1861 = vunpack.c.l.b16 %v1601
        %v1862 = vunpack.c.l.b16 %v1604
        %v1863 = vunpack.c.l.b16 %v1608
        %v1864 = vunpack.c.l.b16 %v1611
        %v1865 = vunpack.c.l.b16 %v1615
        %v1866 = vunpack.c.l.b16 %v1618
        %v1867 = vunpack.c.l.b16 %v1622
        %v1868 = vunpack.c.l.b16 %v1625
        %v1869 = vunpack.c.l.b16 %v1629
        %v1870 = vunpack.c.l.b16 %v1632
        %v1871 = vunpack.c.l.b16 %v1636
        %v1872 = vunpack.c.l.b16 %v1639
        %v1873 = vunpack.c.l.b16 %v1643
        %v1874 = vunpack.c.l.b16 %v1646
        %v1875 = vpack.c.b16 %v1844, %v1843
        %v1876 = vpack.c.b16 %v1846, %v1845
        %v1877 = vpack.c.b16 %v1848, %v1847
        %v1878 = vpack.c.b16 %v1850, %v1849
        %v1879 = vpack.c.b16 %v1852, %v1851
        %v1880 = vpack.c.b16 %v1854, %v1853
        %v1881 = vpack.c.b16 %v1856, %v1855
        %v1882 = vpack.c.b16 %v1858, %v1857
        %v1883 = vpack.c.b16 %v1860, %v1859
        %v1884 = vpack.c.b16 %v1862, %v1861
        %v1885 = vpack.c.b16 %v1864, %v1863
        %v1886 = vpack.c.b16 %v1866, %v1865
        %v1887 = vpack.c.b16 %v1868, %v1867
        %v1888 = vpack.c.b16 %v1870, %v1869
        %v1889 = vpack.c.b16 %v1872, %v1871
        %v1890 = vpack.c.b16 %v1874, %v1873
        %v1907 = vunpack.c.l.b16 %v1091
        %v1908 = vunpack.c.l.b16 %v1092
        %v1909 = vpack.c.b16 %v1908, %v1907
        %v1911 = vunpack.c.l.b16 %v1660
        %v1912 = vunpack.c.l.b16 %v1670
        %v1913 = vpack.c.b16 %v1912, %v1911
        %v1915 = vunpack.c.l.b16 %v1677
        %v1916 = vunpack.c.l.b16 %v1680
        %v1917 = vpack.c.b16 %v1916, %v1915
        %v1919 = vunpack.c.l.b16 %v1094
        %v1920 = vunpack.c.l.b16 %v1095
        %v1921 = vpack.c.b16 %v1920, %v1919
        %v1923 = vunpack.c.l.b16 %v1694
        %v1924 = vunpack.c.l.b16 %v1704
        %v1925 = vpack.c.b16 %v1924, %v1923
        %v1927 = vunpack.c.l.b16 %v1711
        %v1928 = vunpack.c.l.b16 %v1714
        %v1929 = vpack.c.b16 %v1928, %v1927
        %v1931 = vld [vmem:[%s1] sm:$0xf]
        %v1932 = vld [vmem:[%s1 + $0x4] sm:$0xf]
        %v1933 = vld [vmem:[%s1 + $0x8] sm:$0xf]
        %v1934 = vld [vmem:[%s1 + $0xc] sm:$0xf]
        %v1935 = vld [vmem:[%s1 + $0x10] sm:$0xf]
        %v1936 = vld [vmem:[%s1 + $0x14] sm:$0xf]
        %v1937 = vld [vmem:[%s1 + $0x18] sm:$0xf]
        %v1938 = vld [vmem:[%s1 + $0x1c] sm:$0xf]
        %v1939 = vld [vmem:[%s1 + $0x20] sm:$0xf]
        %v1940 = vld [vmem:[%s1 + $0x24] sm:$0xf]
        %v1941 = vld [vmem:[%s1 + $0x28] sm:$0xf]
        %v1942 = vld [vmem:[%s1 + $0x2c] sm:$0xf]
        %v1943 = vld [vmem:[%s1 + $0x30] sm:$0xf]
        %v1944 = vld [vmem:[%s1 + $0x34] sm:$0xf]
        %v1945 = vld [vmem:[%s1 + $0x38] sm:$0xf]
        %v1946 = vld [vmem:[%s1 + $0x3c] sm:$0xf]
        %v1947 = vld [vmem:[%s1 + $0x40] sm:$0xf]
        %v1948 = vld [vmem:[%s1 + $0x44] sm:$0xf]
        %v1949 = vld [vmem:[%s1 + $0x48] sm:$0xf]
        %v1950 = vld [vmem:[%s1 + $0x4c] sm:$0xf]
        %v1951 = vld [vmem:[%s1 + $0x50] sm:$0xf]
        %v1952 = vld [vmem:[%s1 + $0x54] sm:$0xf]
        %v1953 = vld [vmem:[%s1 + $0x58] sm:$0xf]
        %v1954 = vld [vmem:[%s1 + $0x5c] sm:$0xf]
        %v1955 = vld [vmem:[%s1 + $0x60] sm:$0xf]
        %v1956 = vld [vmem:[%s1 + $0x64] sm:$0xf]
        %v1957 = vld [vmem:[%s1 + $0x68] sm:$0xf]
        %v1958 = vld [vmem:[%s1 + $0x6c] sm:$0xf]
        %v1959 = vld [vmem:[%s1 + $0x70] sm:$0xf]
        %v1960 = vld [vmem:[%s1 + $0x74] sm:$0xf]
        %v1961 = vld [vmem:[%s1 + $0x78] sm:$0xf]
        %v1962 = vld [vmem:[%s1 + $0x7c] sm:$0xf]
        %v1963 = vld [vmem:[%s1 + $0x80] sm:$0xf]
        %v1964 = vld [vmem:[%s1 + $0x84] sm:$0xf]
        %v1965 = vld [vmem:[%s1 + $0x88] sm:$0xf]
        %v1966 = vld [vmem:[%s1 + $0x8c] sm:$0xf]
        %v1967 = vld [vmem:[%s1 + $0x90] sm:$0xf]
        %v1968 = vld [vmem:[%s1 + $0x94] sm:$0xf]
        %v1969 = vld [vmem:[%s1 + $0x98] sm:$0xf]
        %v1970 = vld [vmem:[%s1 + $0x9c] sm:$0xf]
        %v1971 = vld [vmem:[%s1 + $0xa0] sm:$0xf]
        %v1972 = vld [vmem:[%s1 + $0xa4] sm:$0xf]
        %v1973 = vld [vmem:[%s1 + $0xa8] sm:$0xf]
        %v1974 = vld [vmem:[%s1 + $0xac] sm:$0xf]
        %v1975 = vld [vmem:[%s1 + $0xb0] sm:$0xf]
        %v1976 = vld [vmem:[%s1 + $0xb4] sm:$0xf]
        %v1977 = vld [vmem:[%s1 + $0xb8] sm:$0xf]
        %v1978 = vld [vmem:[%s1 + $0xbc] sm:$0xf]
        %v1979 = vld [vmem:[%s1 + $0xc0] sm:$0xf]
        %v1980 = vld [vmem:[%s1 + $0xc4] sm:$0xf]
        %v1981 = vld [vmem:[%s1 + $0xc8] sm:$0xf]
        %v1982 = vld [vmem:[%s1 + $0xcc] sm:$0xf]
        %v1983 = vld [vmem:[%s1 + $0xd0] sm:$0xf]
        %v1984 = vld [vmem:[%s1 + $0xd4] sm:$0xf]
        %v1985 = vld [vmem:[%s1 + $0xd8] sm:$0xf]
        %v1986 = vld [vmem:[%s1 + $0xdc] sm:$0xf]
        %v1987 = vld [vmem:[%s1 + $0xe0] sm:$0xf]
        %v1988 = vld [vmem:[%s1 + $0xe4] sm:$0xf]
        %v1989 = vld [vmem:[%s1 + $0xe8] sm:$0xf]
        %v1990 = vld [vmem:[%s1 + $0xec] sm:$0xf]
        %v1991 = vld [vmem:[%s1 + $0xf0] sm:$0xf]
        %v1992 = vld [vmem:[%s1 + $0xf4] sm:$0xf]
        %v1993 = vld [vmem:[%s1 + $0xf8] sm:$0xf]
        %v1994 = vld [vmem:[%s1 + $0xfc] sm:$0xf]
        %v1995 = vld [vmem:[%s1 + $0x100] sm:$0xf]
        %v1996 = vld [vmem:[%s1 + $0x104] sm:$0xf]
        %v1997 = vld [vmem:[%s1 + $0x108] sm:$0xf]
        %v1998 = vld [vmem:[%s1 + $0x10c] sm:$0xf]
        %v1999 = vld [vmem:[%s1 + $0x110] sm:$0xf]
        %v2000 = vld [vmem:[%s1 + $0x114] sm:$0xf]
        %v2001 = vld [vmem:[%s1 + $0x118] sm:$0xf]
        %v2002 = vld [vmem:[%s1 + $0x11c] sm:$0xf]
        %v2003 = vld [vmem:[%s1 + $0x120] sm:$0xf]
        %v2004 = vld [vmem:[%s1 + $0x124] sm:$0xf]
        %v2005 = vld [vmem:[%s1 + $0x128] sm:$0xf]
        %v2006 = vld [vmem:[%s1 + $0x12c] sm:$0xf]
        %v2007 = vld [vmem:[%s1 + $0x130] sm:$0xf]
        %v2008 = vld [vmem:[%s1 + $0x134] sm:$0xf]
        %v2009 = vld [vmem:[%s1 + $0x138] sm:$0xf]
        %v2010 = vld [vmem:[%s1 + $0x13c] sm:$0xf]
        %v2011 = vld [vmem:[%s1 + $0x140] sm:$0xf]
        %v2012 = vld [vmem:[%s1 + $0x144] sm:$0xf]
        %v2013 = vld [vmem:[%s1 + $0x148] sm:$0xf]
        %v2014 = vld [vmem:[%s1 + $0x14c] sm:$0xf]
        %v2015 = vld [vmem:[%s1 + $0x150] sm:$0xf]
        %v2016 = vld [vmem:[%s1 + $0x154] sm:$0xf]
        %v2017 = vld [vmem:[%s1 + $0x158] sm:$0xf]
        %v2018 = vld [vmem:[%s1 + $0x15c] sm:$0xf]
        %v2019 = vld [vmem:[%s1 + $0x160] sm:$0xf]
        %v2020 = vld [vmem:[%s1 + $0x164] sm:$0xf]
        %v2021 = vld [vmem:[%s1 + $0x168] sm:$0xf]
        %v2022 = vld [vmem:[%s1 + $0x16c] sm:$0xf]
        %v2023 = vld [vmem:[%s1 + $0x170] sm:$0xf]
        %v2024 = vld [vmem:[%s1 + $0x174] sm:$0xf]
        %v2025 = vld [vmem:[%s1 + $0x178] sm:$0xf]
        %v2026 = vld [vmem:[%s1 + $0x17c] sm:$0xf]
        %v2027 = vld [vmem:[%s1 + $0x180] sm:$0xf]
        %v2028 = vld [vmem:[%s1 + $0x184] sm:$0xf]
        %v2029 = vld [vmem:[%s1 + $0x188] sm:$0xf]
        %v2030 = vld [vmem:[%s1 + $0x18c] sm:$0xf]
        %v2031 = vld [vmem:[%s1 + $0x190] sm:$0xf]
        %v2032 = vld [vmem:[%s1 + $0x194] sm:$0xf]
        %v2033 = vld [vmem:[%s1 + $0x198] sm:$0xf]
        %v2034 = vld [vmem:[%s1 + $0x19c] sm:$0xf]
        %v2035 = vld [vmem:[%s1 + $0x1a0] sm:$0xf]
        %v2036 = vld [vmem:[%s1 + $0x1a4] sm:$0xf]
        %v2037 = vld [vmem:[%s1 + $0x1a8] sm:$0xf]
        %v2038 = vld [vmem:[%s1 + $0x1ac] sm:$0xf]
        %v2039 = vld [vmem:[%s1 + $0x1b0] sm:$0xf]
        %v2040 = vld [vmem:[%s1 + $0x1b4] sm:$0xf]
        %v2041 = vld [vmem:[%s1 + $0x1b8] sm:$0xf]
        %v2042 = vld [vmem:[%s1 + $0x1bc] sm:$0xf]
        %v2043 = vld [vmem:[%s1 + $0x1c0] sm:$0xf]
        %v2044 = vld [vmem:[%s1 + $0x1c4] sm:$0xf]
        %v2045 = vld [vmem:[%s1 + $0x1c8] sm:$0xf]
        %v2046 = vld [vmem:[%s1 + $0x1cc] sm:$0xf]
        %v2047 = vld [vmem:[%s1 + $0x1d0] sm:$0xf]
        %v2048 = vld [vmem:[%s1 + $0x1d4] sm:$0xf]
        %v2049 = vld [vmem:[%s1 + $0x1d8] sm:$0xf]
        %v2050 = vld [vmem:[%s1 + $0x1dc] sm:$0xf]
        %v2051 = vld [vmem:[%s1 + $0x1e0] sm:$0xf]
        %v2052 = vld [vmem:[%s1 + $0x1e4] sm:$0xf]
        %v2053 = vld [vmem:[%s1 + $0x1e8] sm:$0xf]
        %v2054 = vld [vmem:[%s1 + $0x1ec] sm:$0xf]
        %v2055 = vld [vmem:[%s1 + $0x1f0] sm:$0xf]
        %v2056 = vld [vmem:[%s1 + $0x1f4] sm:$0xf]
        %v2057 = vld [vmem:[%s1 + $0x1f8] sm:$0xf]
        %v2058 = vld [vmem:[%s1 + $0x1fc] sm:$0xf]
        %v2059 = vld [vmem:[%s1 + $0x200] sm:$0xf]
        %v2060 = vld [vmem:[%s1 + $0x204] sm:$0xf]
        %v2061 = vld [vmem:[%s1 + $0x208] sm:$0xf]
        %v2062 = vld [vmem:[%s1 + $0x20c] sm:$0xf]
        %v2063 = vld [vmem:[%s1 + $0x210] sm:$0xf]
        %v2064 = vld [vmem:[%s1 + $0x214] sm:$0xf]
        %v2065 = vld [vmem:[%s1 + $0x218] sm:$0xf]
        %v2066 = vld [vmem:[%s1 + $0x21c] sm:$0xf]
        %v2067 = vld [vmem:[%s1 + $0x220] sm:$0xf]
        %v2068 = vld [vmem:[%s1 + $0x224] sm:$0xf]
        %v2069 = vld [vmem:[%s1 + $0x228] sm:$0xf]
        %v2070 = vld [vmem:[%s1 + $0x22c] sm:$0xf]
        %v2071 = vld [vmem:[%s1 + $0x230] sm:$0xf]
        %v2072 = vld [vmem:[%s1 + $0x234] sm:$0xf]
        %v2073 = vld [vmem:[%s1 + $0x238] sm:$0xf]
        %v2074 = vld [vmem:[%s1 + $0x23c] sm:$0xf]
        %v2219 = vunpack.c.l.b16 %v1931
        %v2220 = vunpack.c.l.b16 %v1932
        %v2221 = vunpack.c.l.b16 %v1933
        %v2222 = vunpack.c.l.b16 %v1934
        %v2223 = vunpack.c.l.b16 %v1935
        %v2224 = vunpack.c.l.b16 %v1936
        %v2225 = vunpack.c.l.b16 %v1937
        %v2226 = vunpack.c.l.b16 %v1938
        %v2227 = vunpack.c.l.b16 %v1939
        %v2228 = vunpack.c.l.b16 %v1940
        %v2229 = vunpack.c.l.b16 %v1941
        %v2230 = vunpack.c.l.b16 %v1942
        %v2231 = vunpack.c.l.b16 %v1943
        %v2232 = vunpack.c.l.b16 %v1944
        %v2233 = vunpack.c.l.b16 %v1945
        %v2234 = vunpack.c.l.b16 %v1946
        %v2235 = vunpack.c.l.b16 %v1947
        %v2236 = vunpack.c.l.b16 %v1948
        %v2237 = vunpack.c.l.b16 %v1949
        %v2238 = vunpack.c.l.b16 %v1950
        %v2239 = vunpack.c.l.b16 %v1951
        %v2240 = vunpack.c.l.b16 %v1952
        %v2241 = vunpack.c.l.b16 %v1953
        %v2242 = vunpack.c.l.b16 %v1954
        %v2243 = vunpack.c.l.b16 %v1955
        %v2244 = vunpack.c.l.b16 %v1956
        %v2245 = vunpack.c.l.b16 %v1957
        %v2246 = vunpack.c.l.b16 %v1958
        %v2247 = vunpack.c.l.b16 %v1959
        %v2248 = vunpack.c.l.b16 %v1960
        %v2249 = vunpack.c.l.b16 %v1961
        %v2250 = vunpack.c.l.b16 %v1962
        %v2251 = vunpack.c.l.b16 %v1963
        %v2252 = vunpack.c.l.b16 %v1964
        %v2253 = vunpack.c.l.b16 %v1965
        %v2254 = vunpack.c.l.b16 %v1966
        %v2255 = vunpack.c.l.b16 %v1967
        %v2256 = vunpack.c.l.b16 %v1968
        %v2257 = vunpack.c.l.b16 %v1969
        %v2258 = vunpack.c.l.b16 %v1970
        %v2259 = vunpack.c.l.b16 %v1971
        %v2260 = vunpack.c.l.b16 %v1972
        %v2261 = vunpack.c.l.b16 %v1973
        %v2262 = vunpack.c.l.b16 %v1974
        %v2263 = vunpack.c.l.b16 %v1975
        %v2264 = vunpack.c.l.b16 %v1976
        %v2265 = vunpack.c.l.b16 %v1977
        %v2266 = vunpack.c.l.b16 %v1978
        %v2267 = vunpack.c.l.b16 %v1979
        %v2268 = vunpack.c.l.b16 %v1980
        %v2269 = vunpack.c.l.b16 %v1981
        %v2270 = vunpack.c.l.b16 %v1982
        %v2271 = vunpack.c.l.b16 %v1983
        %v2272 = vunpack.c.l.b16 %v1984
        %v2273 = vunpack.c.l.b16 %v1985
        %v2274 = vunpack.c.l.b16 %v1986
        %v2275 = vunpack.c.l.b16 %v1987
        %v2276 = vunpack.c.l.b16 %v1988
        %v2277 = vunpack.c.l.b16 %v1989
        %v2278 = vunpack.c.l.b16 %v1990
        %v2279 = vunpack.c.l.b16 %v1991
        %v2280 = vunpack.c.l.b16 %v1992
        %v2281 = vunpack.c.l.b16 %v1993
        %v2282 = vunpack.c.l.b16 %v1994
        %v2283 = vunpack.c.l.b16 %v1995
        %v2284 = vunpack.c.l.b16 %v1996
        %v2285 = vunpack.c.l.b16 %v1997
        %v2286 = vunpack.c.l.b16 %v1998
        %v2287 = vunpack.c.l.b16 %v1999
        %v2288 = vunpack.c.l.b16 %v2000
        %v2289 = vunpack.c.l.b16 %v2001
        %v2290 = vunpack.c.l.b16 %v2002
        %v2291 = vunpack.c.l.b16 %v2003
        %v2292 = vunpack.c.l.b16 %v2004
        %v2293 = vunpack.c.l.b16 %v2005
        %v2294 = vunpack.c.l.b16 %v2006
        %v2295 = vunpack.c.l.b16 %v2007
        %v2296 = vunpack.c.l.b16 %v2008
        %v2297 = vunpack.c.l.b16 %v2009
        %v2298 = vunpack.c.l.b16 %v2010
        %v2299 = vunpack.c.l.b16 %v2011
        %v2300 = vunpack.c.l.b16 %v2012
        %v2301 = vunpack.c.l.b16 %v2013
        %v2302 = vunpack.c.l.b16 %v2014
        %v2303 = vunpack.c.l.b16 %v2015
        %v2304 = vunpack.c.l.b16 %v2016
        %v2305 = vunpack.c.l.b16 %v2017
        %v2306 = vunpack.c.l.b16 %v2018
        %v2307 = vunpack.c.l.b16 %v2019
        %v2308 = vunpack.c.l.b16 %v2020
        %v2309 = vunpack.c.l.b16 %v2021
        %v2310 = vunpack.c.l.b16 %v2022
        %v2311 = vunpack.c.l.b16 %v2023
        %v2312 = vunpack.c.l.b16 %v2024
        %v2313 = vunpack.c.l.b16 %v2025
        %v2314 = vunpack.c.l.b16 %v2026
        %v2315 = vunpack.c.l.b16 %v2027
        %v2316 = vunpack.c.l.b16 %v2028
        %v2317 = vunpack.c.l.b16 %v2029
        %v2318 = vunpack.c.l.b16 %v2030
        %v2319 = vunpack.c.l.b16 %v2031
        %v2320 = vunpack.c.l.b16 %v2032
        %v2321 = vunpack.c.l.b16 %v2033
        %v2322 = vunpack.c.l.b16 %v2034
        %v2323 = vunpack.c.l.b16 %v2035
        %v2324 = vunpack.c.l.b16 %v2036
        %v2325 = vunpack.c.l.b16 %v2037
        %v2326 = vunpack.c.l.b16 %v2038
        %v2327 = vunpack.c.l.b16 %v2039
        %v2328 = vunpack.c.l.b16 %v2040
        %v2329 = vunpack.c.l.b16 %v2041
        %v2330 = vunpack.c.l.b16 %v2042
        %v2331 = vunpack.c.l.b16 %v2043
        %v2332 = vunpack.c.l.b16 %v2044
        %v2333 = vunpack.c.l.b16 %v2045
        %v2334 = vunpack.c.l.b16 %v2046
        %v2335 = vunpack.c.l.b16 %v2047
        %v2336 = vunpack.c.l.b16 %v2048
        %v2337 = vunpack.c.l.b16 %v2049
        %v2338 = vunpack.c.l.b16 %v2050
        %v2339 = vunpack.c.l.b16 %v2051
        %v2340 = vunpack.c.l.b16 %v2052
        %v2341 = vunpack.c.l.b16 %v2053
        %v2342 = vunpack.c.l.b16 %v2054
        %v2343 = vunpack.c.l.b16 %v2055
        %v2344 = vunpack.c.l.b16 %v2056
        %v2345 = vunpack.c.l.b16 %v2057
        %v2346 = vunpack.c.l.b16 %v2058
        %v2347 = vunpack.c.l.b16 %v2059
        %v2348 = vunpack.c.l.b16 %v2060
        %v2349 = vunpack.c.l.b16 %v2061
        %v2350 = vunpack.c.l.b16 %v2062
        %v2351 = vunpack.c.l.b16 %v2063
        %v2352 = vunpack.c.l.b16 %v2064
        %v2353 = vunpack.c.l.b16 %v2065
        %v2354 = vunpack.c.l.b16 %v2066
        %v2355 = vunpack.c.l.b16 %v2067
        %v2356 = vunpack.c.l.b16 %v2068
        %v2357 = vunpack.c.l.b16 %v2069
        %v2358 = vunpack.c.l.b16 %v2070
        %v2359 = vunpack.c.l.b16 %v2071
        %v2360 = vunpack.c.l.b16 %v2072
        %v2361 = vunpack.c.l.b16 %v2073
        %v2362 = vunpack.c.l.b16 %v2074
        %v2363 = vpack.c.b16 %v2220, %v2219
        %v2364 = vpack.c.b16 %v2222, %v2221
        %v2365 = vpack.c.b16 %v2224, %v2223
        %v2366 = vpack.c.b16 %v2226, %v2225
        %v2367 = vpack.c.b16 %v2228, %v2227
        %v2368 = vpack.c.b16 %v2230, %v2229
        %v2369 = vpack.c.b16 %v2232, %v2231
        %v2370 = vpack.c.b16 %v2234, %v2233
        %v2371 = vpack.c.b16 %v2236, %v2235
        %v2372 = vpack.c.b16 %v2238, %v2237
        %v2373 = vpack.c.b16 %v2240, %v2239
        %v2374 = vpack.c.b16 %v2242, %v2241
        %v2375 = vpack.c.b16 %v2244, %v2243
        %v2376 = vpack.c.b16 %v2246, %v2245
        %v2377 = vpack.c.b16 %v2248, %v2247
        %v2378 = vpack.c.b16 %v2250, %v2249
        %v2379 = vpack.c.b16 %v2252, %v2251
        %v2380 = vpack.c.b16 %v2254, %v2253
        %v2381 = vpack.c.b16 %v2256, %v2255
        %v2382 = vpack.c.b16 %v2258, %v2257
        %v2383 = vpack.c.b16 %v2260, %v2259
        %v2384 = vpack.c.b16 %v2262, %v2261
        %v2385 = vpack.c.b16 %v2264, %v2263
        %v2386 = vpack.c.b16 %v2266, %v2265
        %v2387 = vpack.c.b16 %v2268, %v2267
        %v2388 = vpack.c.b16 %v2270, %v2269
        %v2389 = vpack.c.b16 %v2272, %v2271
        %v2390 = vpack.c.b16 %v2274, %v2273
        %v2391 = vpack.c.b16 %v2276, %v2275
        %v2392 = vpack.c.b16 %v2278, %v2277
        %v2393 = vpack.c.b16 %v2280, %v2279
        %v2394 = vpack.c.b16 %v2282, %v2281
        %v2395 = vpack.c.b16 %v2284, %v2283
        %v2396 = vpack.c.b16 %v2286, %v2285
        %v2397 = vpack.c.b16 %v2288, %v2287
        %v2398 = vpack.c.b16 %v2290, %v2289
        %v2399 = vpack.c.b16 %v2292, %v2291
        %v2400 = vpack.c.b16 %v2294, %v2293
        %v2401 = vpack.c.b16 %v2296, %v2295
        %v2402 = vpack.c.b16 %v2298, %v2297
        %v2403 = vpack.c.b16 %v2300, %v2299
        %v2404 = vpack.c.b16 %v2302, %v2301
        %v2405 = vpack.c.b16 %v2304, %v2303
        %v2406 = vpack.c.b16 %v2306, %v2305
        %v2407 = vpack.c.b16 %v2308, %v2307
        %v2408 = vpack.c.b16 %v2310, %v2309
        %v2409 = vpack.c.b16 %v2312, %v2311
        %v2410 = vpack.c.b16 %v2314, %v2313
        %v2411 = vpack.c.b16 %v2316, %v2315
        %v2412 = vpack.c.b16 %v2318, %v2317
        %v2413 = vpack.c.b16 %v2320, %v2319
        %v2414 = vpack.c.b16 %v2322, %v2321
        %v2415 = vpack.c.b16 %v2324, %v2323
        %v2416 = vpack.c.b16 %v2326, %v2325
        %v2417 = vpack.c.b16 %v2328, %v2327
        %v2418 = vpack.c.b16 %v2330, %v2329
        %v2419 = vpack.c.b16 %v2332, %v2331
        %v2420 = vpack.c.b16 %v2334, %v2333
        %v2421 = vpack.c.b16 %v2336, %v2335
        %v2422 = vpack.c.b16 %v2338, %v2337
        %v2423 = vpack.c.b16 %v2340, %v2339
        %v2424 = vpack.c.b16 %v2342, %v2341
        %v2425 = vpack.c.b16 %v2344, %v2343
        %v2426 = vpack.c.b16 %v2346, %v2345
        %v2427 = vpack.c.b16 %v2348, %v2347
        %v2428 = vpack.c.b16 %v2350, %v2349
        %v2429 = vpack.c.b16 %v2352, %v2351
        %v2430 = vpack.c.b16 %v2354, %v2353
        %v2431 = vpack.c.b16 %v2356, %v2355
        %v2432 = vpack.c.b16 %v2358, %v2357
        %v2433 = vpack.c.b16 %v2360, %v2359
        %v2434 = vpack.c.b16 %v2362, %v2361
        %2507 = vmatprep.subr.bf16.mxu0 0
        %2508 = vmatpush1.bf16.msra.mxu0 %v2363
        %2509 = vmatprep.subr.bf16.mxu0 0
        %2510 = vmatpush1.bf16.msra.mxu0 %v2364
        %2511 = vmatprep.subr.bf16.mxu0 0
        %2512 = vmatpush1.bf16.msra.mxu0 %v2365
        %2513 = vmatprep.subr.bf16.mxu0 0
        %2514 = vmatpush1.bf16.msra.mxu0 %v2366
        %2515 = vmatprep.subr.bf16.mxu0 0
        %2516 = vmatpush1.bf16.msra.mxu0 %v2367
        %2517 = vmatprep.subr.bf16.mxu0 0
        %2518 = vmatpush1.bf16.msra.mxu0 %v2368
        %2519 = vmatprep.subr.bf16.mxu0 0
        %2520 = vmatpush1.bf16.msra.mxu0 %v2369
        %2521 = vmatprep.subr.bf16.mxu0 0
        %2522 = vmatpush1.bf16.msra.mxu0 %v2370
        %2523 = vmatprep.subr.bf16.mxu0 0
        %2524 = vmatpush1.bf16.msra.mxu0 %v2371
        %2525 = vmatprep.subr.bf16.mxu0 0
        %2526 = vmatpush1.bf16.msra.mxu0 %v2372
        %2527 = vmatprep.subr.bf16.mxu0 0
        %2528 = vmatpush1.bf16.msra.mxu0 %v2373
        %2529 = vmatprep.subr.bf16.mxu0 0
        %2530 = vmatpush1.bf16.msra.mxu0 %v2374
        %2531 = vmatprep.subr.bf16.mxu0 0
        %2532 = vmatpush1.bf16.msra.mxu0 %v2375
        %2533 = vmatprep.subr.bf16.mxu0 0
        %2534 = vmatpush1.bf16.msra.mxu0 %v2376
        %2535 = vmatprep.subr.bf16.mxu0 0
        %2536 = vmatpush1.bf16.msra.mxu0 %v2377
        %2537 = vmatprep.subr.bf16.mxu0 0
        %2538 = vmatpush1.bf16.msra.mxu0 %v2378
        %2539 = vmatprep.mubr.bf16.mxu0 %v1811
        %2540 = vmatmul.mubr.bf16.gmra.mrb[0].mxu0 %v1747
        %v2541 = vpop.f32.mrb[0].mxu0
        %v2542 = vadd.f32 0.0, %v2541
        %v2543 = vpop.f32.mrb[0].mxu0
        %v2544 = vpop.f32.mrb[0].mxu0
        %v2545 = vadd.f32 0.0, %v2544
        %v2546 = vpop.f32.mrb[0].mxu0
        %2547 = vmatprep.mubr.bf16.mxu0 %v1812
        %2548 = vmatmul.mubr.bf16.gmra.mrb[0].mxu0 %v1748
        %v2549 = vpop.f32.mrb[0].mxu0
        %v2550 = vadd.f32 0.0, %v2549
        %v2551 = vpop.f32.mrb[0].mxu0
        %v2552 = vpop.f32.mrb[0].mxu0
        %v2553 = vadd.f32 0.0, %v2552
        %v2554 = vpop.f32.mrb[0].mxu0
        %2555 = vmatprep.mubr.bf16.mxu0 %v1813
        %2556 = vmatmul.mubr.bf16.gmra.mrb[0].mxu0 %v1749
        %v2557 = vpop.f32.mrb[0].mxu0
        %v2558 = vadd.f32 0.0, %v2557
        %v2559 = vpop.f32.mrb[0].mxu0
        %v2560 = vpop.f32.mrb[0].mxu0
        %v2561 = vadd.f32 0.0, %v2560
        %v2562 = vpop.f32.mrb[0].mxu0
        %2563 = vmatprep.mubr.bf16.mxu0 %v1814
        %2564 = vmatmul.mubr.bf16.gmra.mrb[0].mxu0 %v1750
        %v2565 = vpop.f32.mrb[0].mxu0
        %v2566 = vadd.f32 0.0, %v2565
        %v2567 = vpop.f32.mrb[0].mxu0
        %v2568 = vpop.f32.mrb[0].mxu0
        %v2569 = vadd.f32 0.0, %v2568
        %v2570 = vpop.f32.mrb[0].mxu0
        %2571 = vmatprep.mubr.bf16.mxu0 %v1815
        %2572 = vmatmul.mubr.bf16.gmra.mrb[0].mxu0 %v1751
        %v2573 = vpop.f32.mrb[0].mxu0
        %v2574 = vadd.f32 0.0, %v2573
        %v2575 = vpop.f32.mrb[0].mxu0
        %v2576 = vpop.f32.mrb[0].mxu0
        %v2577 = vadd.f32 0.0, %v2576
        %v2578 = vpop.f32.mrb[0].mxu0
        %2579 = vmatprep.mubr.bf16.mxu0 %v1816
        %2580 = vmatmul.mubr.bf16.gmra.mrb[0].mxu0 %v1752
        %v2581 = vpop.f32.mrb[0].mxu0
        %v2582 = vadd.f32 0.0, %v2581
        %v2583 = vpop.f32.mrb[0].mxu0
        %v2584 = vpop.f32.mrb[0].mxu0
        %v2585 = vadd.f32 0.0, %v2584
        %v2586 = vpop.f32.mrb[0].mxu0
        %2587 = vmatprep.mubr.bf16.mxu0 %v1817
        %2588 = vmatmul.mubr.bf16.gmra.mrb[0].mxu0 %v1753
        %v2589 = vpop.f32.mrb[0].mxu0
        %v2590 = vadd.f32 0.0, %v2589
        %v2591 = vpop.f32.mrb[0].mxu0
        %v2592 = vpop.f32.mrb[0].mxu0
        %v2593 = vadd.f32 0.0, %v2592
        %v2594 = vpop.f32.mrb[0].mxu0
        %2595 = vmatprep.mubr.bf16.mxu0 %v1818
        %2596 = vmatmul.mubr.bf16.gmra.mrb[0].mxu0 %v1754
        %v2597 = vpop.f32.mrb[0].mxu0
        %v2598 = vadd.f32 0.0, %v2597
        %v2599 = vpop.f32.mrb[0].mxu0
        %v2600 = vpop.f32.mrb[0].mxu0
        %v2601 = vadd.f32 0.0, %v2600
        %v2602 = vpop.f32.mrb[0].mxu0
        %2603 = vmatprep.mubr.bf16.mxu0 %v1819
        %2604 = vmatmul.mubr.bf16.gmra.mrb[0].mxu0 %v1755
        %v2605 = vpop.f32.mrb[0].mxu0
        %v2606 = vadd.f32 0.0, %v2605
        %v2607 = vpop.f32.mrb[0].mxu0
        %v2608 = vpop.f32.mrb[0].mxu0
        %v2609 = vadd.f32 0.0, %v2608
        %v2610 = vpop.f32.mrb[0].mxu0
        %2611 = vmatprep.mubr.bf16.mxu0 %v1820
        %2612 = vmatmul.mubr.bf16.gmra.mrb[0].mxu0 %v1756
        %v2613 = vpop.f32.mrb[0].mxu0
        %v2614 = vadd.f32 0.0, %v2613
        %v2615 = vpop.f32.mrb[0].mxu0
        %v2616 = vpop.f32.mrb[0].mxu0
        %v2617 = vadd.f32 0.0, %v2616
        %v2618 = vpop.f32.mrb[0].mxu0
        %2619 = vmatprep.mubr.bf16.mxu0 %v1821
        %2620 = vmatmul.mubr.bf16.gmra.mrb[0].mxu0 %v1757
        %v2621 = vpop.f32.mrb[0].mxu0
        %v2622 = vadd.f32 0.0, %v2621
        %v2623 = vpop.f32.mrb[0].mxu0
        %v2624 = vpop.f32.mrb[0].mxu0
        %v2625 = vadd.f32 0.0, %v2624
        %v2626 = vpop.f32.mrb[0].mxu0
        %2627 = vmatprep.mubr.bf16.mxu0 %v1822
        %2628 = vmatmul.mubr.bf16.gmra.mrb[0].mxu0 %v1758
        %v2629 = vpop.f32.mrb[0].mxu0
        %v2630 = vadd.f32 0.0, %v2629
        %v2631 = vpop.f32.mrb[0].mxu0
        %v2632 = vpop.f32.mrb[0].mxu0
        %v2633 = vadd.f32 0.0, %v2632
        %v2634 = vpop.f32.mrb[0].mxu0
        %2635 = vmatprep.mubr.bf16.mxu0 %v1823
        %2636 = vmatmul.mubr.bf16.gmra.mrb[0].mxu0 %v1759
        %v2637 = vpop.f32.mrb[0].mxu0
        %v2638 = vadd.f32 0.0, %v2637
        %v2639 = vpop.f32.mrb[0].mxu0
        %v2640 = vpop.f32.mrb[0].mxu0
        %v2641 = vadd.f32 0.0, %v2640
        %v2642 = vpop.f32.mrb[0].mxu0
        %2643 = vmatprep.mubr.bf16.mxu0 %v1824
        %2644 = vmatmul.mubr.bf16.gmra.mrb[0].mxu0 %v1760
        %v2645 = vpop.f32.mrb[0].mxu0
        %v2646 = vadd.f32 0.0, %v2645
        %v2647 = vpop.f32.mrb[0].mxu0
        %v2648 = vpop.f32.mrb[0].mxu0
        %v2649 = vadd.f32 0.0, %v2648
        %v2650 = vpop.f32.mrb[0].mxu0
        %2651 = vmatprep.mubr.bf16.mxu0 %v1825
        %2652 = vmatmul.mubr.bf16.gmra.mrb[0].mxu0 %v1761
        %v2653 = vpop.f32.mrb[0].mxu0
        %v2654 = vadd.f32 0.0, %v2653
        %v2655 = vpop.f32.mrb[0].mxu0
        %v2656 = vpop.f32.mrb[0].mxu0
        %v2657 = vadd.f32 0.0, %v2656
        %v2658 = vpop.f32.mrb[0].mxu0
        %2659 = vmatprep.mubr.bf16.mxu0 %v1826
        %2660 = vmatmul.mubr.bf16.gmra.mrb[0].mxu0 %v1762
        %v2661 = vpop.f32.mrb[0].mxu0
        %v2662 = vadd.f32 0.0, %v2661
        %v2663 = vpop.f32.mrb[0].mxu0
        %v2664 = vpop.f32.mrb[0].mxu0
        %v2665 = vadd.f32 0.0, %v2664
        %v2666 = vpop.f32.mrb[0].mxu0
        %2667 = vdwg.mxu0
        %2668 = vmatprep.subr.bf16.mxu0 0
        %2669 = vmatpush1.bf16.msra.mxu0 %v2379
        %2670 = vmatprep.subr.bf16.mxu0 0
        %2671 = vmatpush1.bf16.msra.mxu0 %v2380
        %2672 = vmatprep.subr.bf16.mxu0 0
        %2673 = vmatpush1.bf16.msra.mxu0 %v2381
        %2674 = vmatprep.subr.bf16.mxu0 0
        %2675 = vmatpush1.bf16.msra.mxu0 %v2382
        %2676 = vmatprep.subr.bf16.mxu0 0
        %2677 = vmatpush1.bf16.msra.mxu0 %v2383
        %2678 = vmatprep.subr.bf16.mxu0 0
        %2679 = vmatpush1.bf16.msra.mxu0 %v2384
        %2680 = vmatprep.subr.bf16.mxu0 0
        %2681 = vmatpush1.bf16.msra.mxu0 %v2385
        %2682 = vmatprep.subr.bf16.mxu0 0
        %2683 = vmatpush1.bf16.msra.mxu0 %v2386
        %2684 = vmatprep.subr.bf16.mxu0 0
        %2685 = vmatpush1.bf16.msra.mxu0 %v2387
        %2686 = vmatprep.subr.bf16.mxu0 0
        %2687 = vmatpush1.bf16.msra.mxu0 %v2388
        %2688 = vmatprep.subr.bf16.mxu0 0
        %2689 = vmatpush1.bf16.msra.mxu0 %v2389
        %2690 = vmatprep.subr.bf16.mxu0 0
        %2691 = vmatpush1.bf16.msra.mxu0 %v2390
        %2692 = vmatprep.subr.bf16.mxu0 0
        %2693 = vmatpush1.bf16.msra.mxu0 %v2391
        %2694 = vmatprep.subr.bf16.mxu0 0
        %2695 = vmatpush1.bf16.msra.mxu0 %v2392
        %2696 = vmatprep.subr.bf16.mxu0 0
        %2697 = vmatpush1.bf16.msra.mxu0 %v2393
        %2698 = vmatprep.subr.bf16.mxu0 0
        %2699 = vmatpush1.bf16.msra.mxu0 %v2394
        %2700 = vmatprep.mubr.bf16.mxu0 %v1748
        %2701 = vmatmul.mubr.bf16.gmra.mrb[0].mxu0 %v1875
        %v2702 = vpop.f32.mrb[0].mxu0
        %v2703 = vadd.f32 %v2542, %v2702
        %v2704 = vpop.f32.mrb[0].mxu0
        %v2705 = vpop.f32.mrb[0].mxu0
        %v2706 = vadd.f32 %v2545, %v2705
        %v2707 = vpop.f32.mrb[0].mxu0
        %2708 = vmatprep.mubr.bf16.mxu0 %v1749
        %2709 = vmatmul.mubr.bf16.gmra.mrb[0].mxu0 %v1876
        %v2710 = vpop.f32.mrb[0].mxu0
        %v2711 = vadd.f32 %v2550, %v2710
        %v2712 = vpop.f32.mrb[0].mxu0
        %v2713 = vpop.f32.mrb[0].mxu0
        %v2714 = vadd.f32 %v2553, %v2713
        %v2715 = vpop.f32.mrb[0].mxu0
        %2716 = vmatprep.mubr.bf16.mxu0 %v1750
        %2717 = vmatmul.mubr.bf16.gmra.mrb[0].mxu0 %v1877
        %v2718 = vpop.f32.mrb[0].mxu0
        %v2719 = vadd.f32 %v2558, %v2718
        %v2720 = vpop.f32.mrb[0].mxu0
        %v2721 = vpop.f32.mrb[0].mxu0
        %v2722 = vadd.f32 %v2561, %v2721
        %v2723 = vpop.f32.mrb[0].mxu0
        %2724 = vmatprep.mubr.bf16.mxu0 %v1751
        %2725 = vmatmul.mubr.bf16.gmra.mrb[0].mxu0 %v1878
        %v2726 = vpop.f32.mrb[0].mxu0
        %v2727 = vadd.f32 %v2566, %v2726
        %v2728 = vpop.f32.mrb[0].mxu0
        %v2729 = vpop.f32.mrb[0].mxu0
        %v2730 = vadd.f32 %v2569, %v2729
        %v2731 = vpop.f32.mrb[0].mxu0
        %2732 = vmatprep.mubr.bf16.mxu0 %v1752
        %2733 = vmatmul.mubr.bf16.gmra.mrb[0].mxu0 %v1879
        %v2734 = vpop.f32.mrb[0].mxu0
        %v2735 = vadd.f32 %v2574, %v2734
        %v2736 = vpop.f32.mrb[0].mxu0
        %v2737 = vpop.f32.mrb[0].mxu0
        %v2738 = vadd.f32 %v2577, %v2737
        %v2739 = vpop.f32.mrb[0].mxu0
        %2740 = vmatprep.mubr.bf16.mxu0 %v1753
        %2741 = vmatmul.mubr.bf16.gmra.mrb[0].mxu0 %v1880
        %v2742 = vpop.f32.mrb[0].mxu0
        %v2743 = vadd.f32 %v2582, %v2742
        %v2744 = vpop.f32.mrb[0].mxu0
        %v2745 = vpop.f32.mrb[0].mxu0
        %v2746 = vadd.f32 %v2585, %v2745
        %v2747 = vpop.f32.mrb[0].mxu0
        %2748 = vmatprep.mubr.bf16.mxu0 %v1754
        %2749 = vmatmul.mubr.bf16.gmra.mrb[0].mxu0 %v1881
        %v2750 = vpop.f32.mrb[0].mxu0
        %v2751 = vadd.f32 %v2590, %v2750
        %v2752 = vpop.f32.mrb[0].mxu0
        %v2753 = vpop.f32.mrb[0].mxu0
        %v2754 = vadd.f32 %v2593, %v2753
        %v2755 = vpop.f32.mrb[0].mxu0
        %2756 = vmatprep.mubr.bf16.mxu0 %v1755
        %2757 = vmatmul.mubr.bf16.gmra.mrb[0].mxu0 %v1882
        %v2758 = vpop.f32.mrb[0].mxu0
        %v2759 = vadd.f32 %v2598, %v2758
        %v2760 = vpop.f32.mrb[0].mxu0
        %v2761 = vpop.f32.mrb[0].mxu0
        %v2762 = vadd.f32 %v2601, %v2761
        %v2763 = vpop.f32.mrb[0].mxu0
        %2764 = vmatprep.mubr.bf16.mxu0 %v1756
        %2765 = vmatmul.mubr.bf16.gmra.mrb[0].mxu0 %v1883
        %v2766 = vpop.f32.mrb[0].mxu0
        %v2767 = vadd.f32 %v2606, %v2766
        %v2768 = vpop.f32.mrb[0].mxu0
        %v2769 = vpop.f32.mrb[0].mxu0
        %v2770 = vadd.f32 %v2609, %v2769
        %v2771 = vpop.f32.mrb[0].mxu0
        %2772 = vmatprep.mubr.bf16.mxu0 %v1757
        %2773 = vmatmul.mubr.bf16.gmra.mrb[0].mxu0 %v1884
        %v2774 = vpop.f32.mrb[0].mxu0
        %v2775 = vadd.f32 %v2614, %v2774
        %v2776 = vpop.f32.mrb[0].mxu0
        %v2777 = vpop.f32.mrb[0].mxu0
        %v2778 = vadd.f32 %v2617, %v2777
        %v2779 = vpop.f32.mrb[0].mxu0
        %2780 = vmatprep.mubr.bf16.mxu0 %v1758
        %2781 = vmatmul.mubr.bf16.gmra.mrb[0].mxu0 %v1885
        %v2782 = vpop.f32.mrb[0].mxu0
        %v2783 = vadd.f32 %v2622, %v2782
        %v2784 = vpop.f32.mrb[0].mxu0
        %v2785 = vpop.f32.mrb[0].mxu0
        %v2786 = vadd.f32 %v2625, %v2785
        %v2787 = vpop.f32.mrb[0].mxu0
        %2788 = vmatprep.mubr.bf16.mxu0 %v1759
        %2789 = vmatmul.mubr.bf16.gmra.mrb[0].mxu0 %v1886
        %v2790 = vpop.f32.mrb[0].mxu0
        %v2791 = vadd.f32 %v2630, %v2790
        %v2792 = vpop.f32.mrb[0].mxu0
        %v2793 = vpop.f32.mrb[0].mxu0
        %v2794 = vadd.f32 %v2633, %v2793
        %v2795 = vpop.f32.mrb[0].mxu0
        %2796 = vmatprep.mubr.bf16.mxu0 %v1760
        %2797 = vmatmul.mubr.bf16.gmra.mrb[0].mxu0 %v1887
        %v2798 = vpop.f32.mrb[0].mxu0
        %v2799 = vadd.f32 %v2638, %v2798
        %v2800 = vpop.f32.mrb[0].mxu0
        %v2801 = vpop.f32.mrb[0].mxu0
        %v2802 = vadd.f32 %v2641, %v2801
        %v2803 = vpop.f32.mrb[0].mxu0
        %2804 = vmatprep.mubr.bf16.mxu0 %v1761
        %2805 = vmatmul.mubr.bf16.gmra.mrb[0].mxu0 %v1888
        %v2806 = vpop.f32.mrb[0].mxu0
        %v2807 = vadd.f32 %v2646, %v2806
        %v2808 = vpop.f32.mrb[0].mxu0
        %v2809 = vpop.f32.mrb[0].mxu0
        %v2810 = vadd.f32 %v2649, %v2809
        %v2811 = vpop.f32.mrb[0].mxu0
        %2812 = vmatprep.mubr.bf16.mxu0 %v1762
        %2813 = vmatmul.mubr.bf16.gmra.mrb[0].mxu0 %v1889
        %v2814 = vpop.f32.mrb[0].mxu0
        %v2815 = vadd.f32 %v2654, %v2814
        %v2816 = vpop.f32.mrb[0].mxu0
        %v2817 = vpop.f32.mrb[0].mxu0
        %v2818 = vadd.f32 %v2657, %v2817
        %v2819 = vpop.f32.mrb[0].mxu0
        %2820 = vmatprep.mubr.bf16.mxu0 %v1909
        %2821 = vmatmul.mubr.bf16.gmra.mrb[0].mxu0 %v1890
        %v2822 = vpop.f32.mrb[0].mxu0
        %v2823 = vadd.f32 %v2662, %v2822
        %v2824 = vpop.f32.mrb[0].mxu0
        %v2825 = vpop.f32.mrb[0].mxu0
        %v2826 = vadd.f32 %v2665, %v2825
        %v2827 = vpop.f32.mrb[0].mxu0
        %2828 = vdwg.mxu0
        %2829 = vmatprep.subr.bf16.mxu0 0
        %2830 = vmatpush1.bf16.msra.mxu0 %v2395
        %2831 = vmatprep.subr.bf16.mxu0 0
        %2832 = vmatpush1.bf16.msra.mxu0 %v2396
        %2833 = vmatprep.subr.bf16.mxu0 0
        %2834 = vmatpush1.bf16.msra.mxu0 %v2397
        %2835 = vmatprep.subr.bf16.mxu0 0
        %2836 = vmatpush1.bf16.msra.mxu0 %v2398
        %2837 = vmatprep.subr.bf16.mxu0 0
        %2838 = vmatpush1.bf16.msra.mxu0 %v2399
        %2839 = vmatprep.subr.bf16.mxu0 0
        %2840 = vmatpush1.bf16.msra.mxu0 %v2400
        %2841 = vmatprep.subr.bf16.mxu0 0
        %2842 = vmatpush1.bf16.msra.mxu0 %v2401
        %2843 = vmatprep.subr.bf16.mxu0 0
        %2844 = vmatpush1.bf16.msra.mxu0 %v2402
        %2845 = vmatprep.subr.bf16.mxu0 0
        %2846 = vmatpush1.bf16.msra.mxu0 %v2403
        %2847 = vmatprep.subr.bf16.mxu0 0
        %2848 = vmatpush1.bf16.msra.mxu0 %v2404
        %2849 = vmatprep.subr.bf16.mxu0 0
        %2850 = vmatpush1.bf16.msra.mxu0 %v2405
        %2851 = vmatprep.subr.bf16.mxu0 0
        %2852 = vmatpush1.bf16.msra.mxu0 %v2406
        %2853 = vmatprep.subr.bf16.mxu0 0
        %2854 = vmatpush1.bf16.msra.mxu0 %v2407
        %2855 = vmatprep.subr.bf16.mxu0 0
        %2856 = vmatpush1.bf16.msra.mxu0 %v2408
        %2857 = vmatprep.subr.bf16.mxu0 0
        %2858 = vmatpush1.bf16.msra.mxu0 %v2409
        %2859 = vmatprep.subr.bf16.mxu0 0
        %2860 = vmatpush1.bf16.msra.mxu0 %v2410
        %2861 = vmatprep.mubr.bf16.mxu0 %v1876
        %2862 = vmatmul.mubr.bf16.gmra.mrb[0].mxu0 %v1812
        %v2863 = vpop.f32.mrb[0].mxu0
        %v2864 = vadd.f32 %v2703, %v2863
        %v2865 = vpop.f32.mrb[0].mxu0
        %v2866 = vpop.f32.mrb[0].mxu0
        %v2867 = vadd.f32 %v2706, %v2866
        %v2868 = vpop.f32.mrb[0].mxu0
        %2869 = vmatprep.mubr.bf16.mxu0 %v1877
        %2870 = vmatmul.mubr.bf16.gmra.mrb[0].mxu0 %v1813
        %v2871 = vpop.f32.mrb[0].mxu0
        %v2872 = vadd.f32 %v2711, %v2871
        %v2873 = vpop.f32.mrb[0].mxu0
        %v2874 = vpop.f32.mrb[0].mxu0
        %v2875 = vadd.f32 %v2714, %v2874
        %v2876 = vpop.f32.mrb[0].mxu0
        %2877 = vmatprep.mubr.bf16.mxu0 %v1878
        %2878 = vmatmul.mubr.bf16.gmra.mrb[0].mxu0 %v1814
        %v2879 = vpop.f32.mrb[0].mxu0
        %v2880 = vadd.f32 %v2719, %v2879
        %v2881 = vpop.f32.mrb[0].mxu0
        %v2882 = vpop.f32.mrb[0].mxu0
        %v2883 = vadd.f32 %v2722, %v2882
        %v2884 = vpop.f32.mrb[0].mxu0
        %2885 = vmatprep.mubr.bf16.mxu0 %v1879
        %2886 = vmatmul.mubr.bf16.gmra.mrb[0].mxu0 %v1815
        %v2887 = vpop.f32.mrb[0].mxu0
        %v2888 = vadd.f32 %v2727, %v2887
        %v2889 = vpop.f32.mrb[0].mxu0
        %v2890 = vpop.f32.mrb[0].mxu0
        %v2891 = vadd.f32 %v2730, %v2890
        %v2892 = vpop.f32.mrb[0].mxu0
        %2893 = vmatprep.mubr.bf16.mxu0 %v1880
        %2894 = vmatmul.mubr.bf16.gmra.mrb[0].mxu0 %v1816
        %v2895 = vpop.f32.mrb[0].mxu0
        %v2896 = vadd.f32 %v2735, %v2895
        %v2897 = vpop.f32.mrb[0].mxu0
        %v2898 = vpop.f32.mrb[0].mxu0
        %v2899 = vadd.f32 %v2738, %v2898
        %v2900 = vpop.f32.mrb[0].mxu0
        %2901 = vmatprep.mubr.bf16.mxu0 %v1881
        %2902 = vmatmul.mubr.bf16.gmra.mrb[0].mxu0 %v1817
        %v2903 = vpop.f32.mrb[0].mxu0
        %v2904 = vadd.f32 %v2743, %v2903
        %v2905 = vpop.f32.mrb[0].mxu0
        %v2906 = vpop.f32.mrb[0].mxu0
        %v2907 = vadd.f32 %v2746, %v2906
        %v2908 = vpop.f32.mrb[0].mxu0
        %2909 = vmatprep.mubr.bf16.mxu0 %v1882
        %2910 = vmatmul.mubr.bf16.gmra.mrb[0].mxu0 %v1818
        %v2911 = vpop.f32.mrb[0].mxu0
        %v2912 = vadd.f32 %v2751, %v2911
        %v2913 = vpop.f32.mrb[0].mxu0
        %v2914 = vpop.f32.mrb[0].mxu0
        %v2915 = vadd.f32 %v2754, %v2914
        %v2916 = vpop.f32.mrb[0].mxu0
        %2917 = vmatprep.mubr.bf16.mxu0 %v1883
        %2918 = vmatmul.mubr.bf16.gmra.mrb[0].mxu0 %v1819
        %v2919 = vpop.f32.mrb[0].mxu0
        %v2920 = vadd.f32 %v2759, %v2919
        %v2921 = vpop.f32.mrb[0].mxu0
        %v2922 = vpop.f32.mrb[0].mxu0
        %v2923 = vadd.f32 %v2762, %v2922
        %v2924 = vpop.f32.mrb[0].mxu0
        %2925 = vmatprep.mubr.bf16.mxu0 %v1884
        %2926 = vmatmul.mubr.bf16.gmra.mrb[0].mxu0 %v1820
        %v2927 = vpop.f32.mrb[0].mxu0
        %v2928 = vadd.f32 %v2767, %v2927
        %v2929 = vpop.f32.mrb[0].mxu0
        %v2930 = vpop.f32.mrb[0].mxu0
        %v2931 = vadd.f32 %v2770, %v2930
        %v2932 = vpop.f32.mrb[0].mxu0
        %2933 = vmatprep.mubr.bf16.mxu0 %v1885
        %2934 = vmatmul.mubr.bf16.gmra.mrb[0].mxu0 %v1821
        %v2935 = vpop.f32.mrb[0].mxu0
        %v2936 = vadd.f32 %v2775, %v2935
        %v2937 = vpop.f32.mrb[0].mxu0
        %v2938 = vpop.f32.mrb[0].mxu0
        %v2939 = vadd.f32 %v2778, %v2938
        %v2940 = vpop.f32.mrb[0].mxu0
        %2941 = vmatprep.mubr.bf16.mxu0 %v1886
        %2942 = vmatmul.mubr.bf16.gmra.mrb[0].mxu0 %v1822
        %v2943 = vpop.f32.mrb[0].mxu0
        %v2944 = vadd.f32 %v2783, %v2943
        %v2945 = vpop.f32.mrb[0].mxu0
        %v2946 = vpop.f32.mrb[0].mxu0
        %v2947 = vadd.f32 %v2786, %v2946
        %v2948 = vpop.f32.mrb[0].mxu0
        %2949 = vmatprep.mubr.bf16.mxu0 %v1887
        %2950 = vmatmul.mubr.bf16.gmra.mrb[0].mxu0 %v1823
        %v2951 = vpop.f32.mrb[0].mxu0
        %v2952 = vadd.f32 %v2791, %v2951
        %v2953 = vpop.f32.mrb[0].mxu0
        %v2954 = vpop.f32.mrb[0].mxu0
        %v2955 = vadd.f32 %v2794, %v2954
        %v2956 = vpop.f32.mrb[0].mxu0
        %2957 = vmatprep.mubr.bf16.mxu0 %v1888
        %2958 = vmatmul.mubr.bf16.gmra.mrb[0].mxu0 %v1824
        %v2959 = vpop.f32.mrb[0].mxu0
        %v2960 = vadd.f32 %v2799, %v2959
        %v2961 = vpop.f32.mrb[0].mxu0
        %v2962 = vpop.f32.mrb[0].mxu0
        %v2963 = vadd.f32 %v2802, %v2962
        %v2964 = vpop.f32.mrb[0].mxu0
        %2965 = vmatprep.mubr.bf16.mxu0 %v1889
        %2966 = vmatmul.mubr.bf16.gmra.mrb[0].mxu0 %v1825
        %v2967 = vpop.f32.mrb[0].mxu0
        %v2968 = vadd.f32 %v2807, %v2967
        %v2969 = vpop.f32.mrb[0].mxu0
        %v2970 = vpop.f32.mrb[0].mxu0
        %v2971 = vadd.f32 %v2810, %v2970
        %v2972 = vpop.f32.mrb[0].mxu0
        %2973 = vmatprep.mubr.bf16.mxu0 %v1890
        %2974 = vmatmul.mubr.bf16.gmra.mrb[0].mxu0 %v1826
        %v2975 = vpop.f32.mrb[0].mxu0
        %v2976 = vadd.f32 %v2815, %v2975
        %v2977 = vpop.f32.mrb[0].mxu0
        %v2978 = vpop.f32.mrb[0].mxu0
        %v2979 = vadd.f32 %v2818, %v2978
        %v2980 = vpop.f32.mrb[0].mxu0
        %2981 = vmatprep.mubr.bf16.mxu0 %v1917
        %2982 = vmatmul.mubr.bf16.gmra.mrb[0].mxu0 %v1913
        %v2983 = vpop.f32.mrb[0].mxu0
        %v2984 = vadd.f32 %v2823, %v2983
        %v2985 = vpop.f32.mrb[0].mxu0
        %v2986 = vpop.f32.mrb[0].mxu0
        %v2987 = vadd.f32 %v2826, %v2986
        %v2988 = vpop.f32.mrb[0].mxu0
        %2989 = vdwg.mxu0
        %2990 = vmatprep.subr.bf16.mxu0 0
        %2991 = vmatpush1.bf16.msra.mxu0 %v2411
        %2992 = vmatprep.subr.bf16.mxu0 0
        %2993 = vmatpush1.bf16.msra.mxu0 %v2412
        %2994 = vmatprep.subr.bf16.mxu0 0
        %2995 = vmatpush1.bf16.msra.mxu0 %v2413
        %2996 = vmatprep.subr.bf16.mxu0 0
        %2997 = vmatpush1.bf16.msra.mxu0 %v2414
        %2998 = vmatprep.subr.bf16.mxu0 0
        %2999 = vmatpush1.bf16.msra.mxu0 %v2415
        %3000 = vmatprep.subr.bf16.mxu0 0
        %3001 = vmatpush1.bf16.msra.mxu0 %v2416
        %3002 = vmatprep.subr.bf16.mxu0 0
        %3003 = vmatpush1.bf16.msra.mxu0 %v2417
        %3004 = vmatprep.subr.bf16.mxu0 0
        %3005 = vmatpush1.bf16.msra.mxu0 %v2418
        %3006 = vmatprep.subr.bf16.mxu0 0
        %3007 = vmatpush1.bf16.msra.mxu0 %v2419
        %3008 = vmatprep.subr.bf16.mxu0 0
        %3009 = vmatpush1.bf16.msra.mxu0 %v2420
        %3010 = vmatprep.subr.bf16.mxu0 0
        %3011 = vmatpush1.bf16.msra.mxu0 %v2421
        %3012 = vmatprep.subr.bf16.mxu0 0
        %3013 = vmatpush1.bf16.msra.mxu0 %v2422
        %3014 = vmatprep.subr.bf16.mxu0 0
        %3015 = vmatpush1.bf16.msra.mxu0 %v2423
        %3016 = vmatprep.subr.bf16.mxu0 0
        %3017 = vmatpush1.bf16.msra.mxu0 %v2424
        %3018 = vmatprep.subr.bf16.mxu0 0
        %3019 = vmatpush1.bf16.msra.mxu0 %v2425
        %3020 = vmatprep.subr.bf16.mxu0 0
        %3021 = vmatpush1.bf16.msra.mxu0 %v2426
        %3022 = vmatprep.mubr.bf16.mxu0 %v1813
        %3023 = vmatmul.mubr.bf16.gmra.mrb[0].mxu0 %v1749
        %v3024 = vpop.f32.mrb[0].mxu0
        %v3025 = vadd.f32 %v2864, %v3024
        %v3026 = vpop.f32.mrb[0].mxu0
        %v3027 = vpop.f32.mrb[0].mxu0
        %v3028 = vadd.f32 %v2867, %v3027
        %v3029 = vpop.f32.mrb[0].mxu0
        %3030 = vmatprep.mubr.bf16.mxu0 %v1814
        %3031 = vmatmul.mubr.bf16.gmra.mrb[0].mxu0 %v1750
        %v3032 = vpop.f32.mrb[0].mxu0
        %v3033 = vadd.f32 %v2872, %v3032
        %v3034 = vpop.f32.mrb[0].mxu0
        %v3035 = vpop.f32.mrb[0].mxu0
        %v3036 = vadd.f32 %v2875, %v3035
        %v3037 = vpop.f32.mrb[0].mxu0
        %3038 = vmatprep.mubr.bf16.mxu0 %v1815
        %3039 = vmatmul.mubr.bf16.gmra.mrb[0].mxu0 %v1751
        %v3040 = vpop.f32.mrb[0].mxu0
        %v3041 = vadd.f32 %v2880, %v3040
        %v3042 = vpop.f32.mrb[0].mxu0
        %v3043 = vpop.f32.mrb[0].mxu0
        %v3044 = vadd.f32 %v2883, %v3043
        %v3045 = vpop.f32.mrb[0].mxu0
        %3046 = vmatprep.mubr.bf16.mxu0 %v1816
        %3047 = vmatmul.mubr.bf16.gmra.mrb[0].mxu0 %v1752
        %v3048 = vpop.f32.mrb[0].mxu0
        %v3049 = vadd.f32 %v2888, %v3048
        %v3050 = vpop.f32.mrb[0].mxu0
        %v3051 = vpop.f32.mrb[0].mxu0
        %v3052 = vadd.f32 %v2891, %v3051
        %v3053 = vpop.f32.mrb[0].mxu0
        %3054 = vmatprep.mubr.bf16.mxu0 %v1817
        %3055 = vmatmul.mubr.bf16.gmra.mrb[0].mxu0 %v1753
        %v3056 = vpop.f32.mrb[0].mxu0
        %v3057 = vadd.f32 %v2896, %v3056
        %v3058 = vpop.f32.mrb[0].mxu0
        %v3059 = vpop.f32.mrb[0].mxu0
        %v3060 = vadd.f32 %v2899, %v3059
        %v3061 = vpop.f32.mrb[0].mxu0
        %3062 = vmatprep.mubr.bf16.mxu0 %v1818
        %3063 = vmatmul.mubr.bf16.gmra.mrb[0].mxu0 %v1754
        %v3064 = vpop.f32.mrb[0].mxu0
        %v3065 = vadd.f32 %v2904, %v3064
        %v3066 = vpop.f32.mrb[0].mxu0
        %v3067 = vpop.f32.mrb[0].mxu0
        %v3068 = vadd.f32 %v2907, %v3067
        %v3069 = vpop.f32.mrb[0].mxu0
        %3070 = vmatprep.mubr.bf16.mxu0 %v1819
        %3071 = vmatmul.mubr.bf16.gmra.mrb[0].mxu0 %v1755
        %v3072 = vpop.f32.mrb[0].mxu0
        %v3073 = vadd.f32 %v2912, %v3072
        %v3074 = vpop.f32.mrb[0].mxu0
        %v3075 = vpop.f32.mrb[0].mxu0
        %v3076 = vadd.f32 %v2915, %v3075
        %v3077 = vpop.f32.mrb[0].mxu0
        %3078 = vmatprep.mubr.bf16.mxu0 %v1820
        %3079 = vmatmul.mubr.bf16.gmra.mrb[0].mxu0 %v1756
        %v3080 = vpop.f32.mrb[0].mxu0
        %v3081 = vadd.f32 %v2920, %v3080
        %v3082 = vpop.f32.mrb[0].mxu0
        %v3083 = vpop.f32.mrb[0].mxu0
        %v3084 = vadd.f32 %v2923, %v3083
        %v3085 = vpop.f32.mrb[0].mxu0
        %3086 = vmatprep.mubr.bf16.mxu0 %v1821
        %3087 = vmatmul.mubr.bf16.gmra.mrb[0].mxu0 %v1757
        %v3088 = vpop.f32.mrb[0].mxu0
        %v3089 = vadd.f32 %v2928, %v3088
        %v3090 = vpop.f32.mrb[0].mxu0
        %v3091 = vpop.f32.mrb[0].mxu0
        %v3092 = vadd.f32 %v2931, %v3091
        %v3093 = vpop.f32.mrb[0].mxu0
        %3094 = vmatprep.mubr.bf16.mxu0 %v1822
        %3095 = vmatmul.mubr.bf16.gmra.mrb[0].mxu0 %v1758
        %v3096 = vpop.f32.mrb[0].mxu0
        %v3097 = vadd.f32 %v2936, %v3096
        %v3098 = vpop.f32.mrb[0].mxu0
        %v3099 = vpop.f32.mrb[0].mxu0
        %v3100 = vadd.f32 %v2939, %v3099
        %v3101 = vpop.f32.mrb[0].mxu0
        %3102 = vmatprep.mubr.bf16.mxu0 %v1823
        %3103 = vmatmul.mubr.bf16.gmra.mrb[0].mxu0 %v1759
        %v3104 = vpop.f32.mrb[0].mxu0
        %v3105 = vadd.f32 %v2944, %v3104
        %v3106 = vpop.f32.mrb[0].mxu0
        %v3107 = vpop.f32.mrb[0].mxu0
        %v3108 = vadd.f32 %v2947, %v3107
        %v3109 = vpop.f32.mrb[0].mxu0
        %3110 = vmatprep.mubr.bf16.mxu0 %v1824
        %3111 = vmatmul.mubr.bf16.gmra.mrb[0].mxu0 %v1760
        %v3112 = vpop.f32.mrb[0].mxu0
        %v3113 = vadd.f32 %v2952, %v3112
        %v3114 = vpop.f32.mrb[0].mxu0
        %v3115 = vpop.f32.mrb[0].mxu0
        %v3116 = vadd.f32 %v2955, %v3115
        %v3117 = vpop.f32.mrb[0].mxu0
        %3118 = vmatprep.mubr.bf16.mxu0 %v1825
        %3119 = vmatmul.mubr.bf16.gmra.mrb[0].mxu0 %v1761
        %v3120 = vpop.f32.mrb[0].mxu0
        %v3121 = vadd.f32 %v2960, %v3120
        %v3122 = vpop.f32.mrb[0].mxu0
        %v3123 = vpop.f32.mrb[0].mxu0
        %v3124 = vadd.f32 %v2963, %v3123
        %v3125 = vpop.f32.mrb[0].mxu0
        %3126 = vmatprep.mubr.bf16.mxu0 %v1826
        %3127 = vmatmul.mubr.bf16.gmra.mrb[0].mxu0 %v1762
        %v3128 = vpop.f32.mrb[0].mxu0
        %v3129 = vadd.f32 %v2968, %v3128
        %v3130 = vpop.f32.mrb[0].mxu0
        %v3131 = vpop.f32.mrb[0].mxu0
        %v3132 = vadd.f32 %v2971, %v3131
        %v3133 = vpop.f32.mrb[0].mxu0
        %3134 = vmatprep.mubr.bf16.mxu0 %v1913
        %3135 = vmatmul.mubr.bf16.gmra.mrb[0].mxu0 %v1909
        %v3136 = vpop.f32.mrb[0].mxu0
        %v3137 = vadd.f32 %v2976, %v3136
        %v3138 = vpop.f32.mrb[0].mxu0
        %v3139 = vpop.f32.mrb[0].mxu0
        %v3140 = vadd.f32 %v2979, %v3139
        %v3141 = vpop.f32.mrb[0].mxu0
        %3142 = vmatprep.mubr.bf16.mxu0 %v1925
        %3143 = vmatmul.mubr.bf16.gmra.mrb[0].mxu0 %v1921
        %v3144 = vpop.f32.mrb[0].mxu0
        %v3145 = vadd.f32 %v2984, %v3144
        %v3146 = vpop.f32.mrb[0].mxu0
        %v3147 = vpop.f32.mrb[0].mxu0
        %v3148 = vadd.f32 %v2987, %v3147
        %v3149 = vpop.f32.mrb[0].mxu0
        %3150 = vdwg.mxu0
        %3151 = vmatprep.subr.bf16.mxu0 0
        %3152 = vmatpush1.bf16.msra.mxu0 %v2427
        %3153 = vmatprep.subr.bf16.mxu0 0
        %3154 = vmatpush1.bf16.msra.mxu0 %v2428
        %3155 = vmatprep.subr.bf16.mxu0 0
        %3156 = vmatpush1.bf16.msra.mxu0 %v2429
        %3157 = vmatprep.subr.bf16.mxu0 0
        %3158 = vmatpush1.bf16.msra.mxu0 %v2430
        %3159 = vmatprep.subr.bf16.mxu0 0
        %3160 = vmatpush1.bf16.msra.mxu0 %v2431
        %3161 = vmatprep.subr.bf16.mxu0 0
        %3162 = vmatpush1.bf16.msra.mxu0 %v2432
        %3163 = vmatprep.subr.bf16.mxu0 0
        %3164 = vmatpush1.bf16.msra.mxu0 %v2433
        %3165 = vmatprep.subr.bf16.mxu0 0
        %3166 = vmatpush1.bf16.msra.mxu0 %v2434
        %3167 = vmatprep.subr.bf16.mxu0 0
        %3168 = vmatpush1.bf16.msra.mxu0 0
        %3169 = vmatprep.subr.bf16.mxu0 0
        %3170 = vmatpush1.bf16.msra.mxu0 0
        %3171 = vmatprep.subr.bf16.mxu0 0
        %3172 = vmatpush1.bf16.msra.mxu0 0
        %3173 = vmatprep.subr.bf16.mxu0 0
        %3174 = vmatpush1.bf16.msra.mxu0 0
        %3175 = vmatprep.subr.bf16.mxu0 0
        %3176 = vmatpush1.bf16.msra.mxu0 0
        %3177 = vmatprep.subr.bf16.mxu0 0
        %3178 = vmatpush1.bf16.msra.mxu0 0
        %3179 = vmatprep.subr.bf16.mxu0 0
        %3180 = vmatpush1.bf16.msra.mxu0 0
        %3181 = vmatprep.subr.bf16.mxu0 0
        %3182 = vmatpush1.bf16.msra.mxu0 0
        %3183 = vmatprep.mubr.bf16.mxu0 0
        %3184 = vmatmul.mubr.bf16.gmra.mrb[0].mxu0 %v1877
        %v3185 = vpop.f32.mrb[0].mxu0
        %v3186 = vadd.f32 %v3025, %v3185
        %v3187 = vpop.f32.mrb[0].mxu0
        %v3188 = vpop.f32.mrb[0].mxu0
        %v3189 = vadd.f32 %v3028, %v3188
        %v3190 = vpop.f32.mrb[0].mxu0
        %3191 = vmatprep.mubr.bf16.mxu0 0
        %3192 = vmatmul.mubr.bf16.gmra.mrb[0].mxu0 %v1878
        %v3193 = vpop.f32.mrb[0].mxu0
        %v3194 = vadd.f32 %v3033, %v3193
        %v3195 = vpop.f32.mrb[0].mxu0
        %v3196 = vpop.f32.mrb[0].mxu0
        %v3197 = vadd.f32 %v3036, %v3196
        %v3198 = vpop.f32.mrb[0].mxu0
        %3199 = vmatprep.mubr.bf16.mxu0 0
        %3200 = vmatmul.mubr.bf16.gmra.mrb[0].mxu0 %v1879
        %v3201 = vpop.f32.mrb[0].mxu0
        %v3202 = vadd.f32 %v3041, %v3201
        %v3203 = vpop.f32.mrb[0].mxu0
        %v3204 = vpop.f32.mrb[0].mxu0
        %v3205 = vadd.f32 %v3044, %v3204
        %v3206 = vpop.f32.mrb[0].mxu0
        %3207 = vmatprep.mubr.bf16.mxu0 0
        %3208 = vmatmul.mubr.bf16.gmra.mrb[0].mxu0 %v1880
        %v3209 = vpop.f32.mrb[0].mxu0
        %v3210 = vadd.f32 %v3049, %v3209
        %v3211 = vpop.f32.mrb[0].mxu0
        %v3212 = vpop.f32.mrb[0].mxu0
        %v3213 = vadd.f32 %v3052, %v3212
        %v3214 = vpop.f32.mrb[0].mxu0
        %3215 = vmatprep.mubr.bf16.mxu0 0
        %3216 = vmatmul.mubr.bf16.gmra.mrb[0].mxu0 %v1881
        %v3217 = vpop.f32.mrb[0].mxu0
        %v3218 = vadd.f32 %v3057, %v3217
        %v3219 = vpop.f32.mrb[0].mxu0
        %v3220 = vpop.f32.mrb[0].mxu0
        %v3221 = vadd.f32 %v3060, %v3220
        %v3222 = vpop.f32.mrb[0].mxu0
        %3223 = vmatprep.mubr.bf16.mxu0 0
        %3224 = vmatmul.mubr.bf16.gmra.mrb[0].mxu0 %v1882
        %v3225 = vpop.f32.mrb[0].mxu0
        %v3226 = vadd.f32 %v3065, %v3225
        %v3227 = vpop.f32.mrb[0].mxu0
        %v3228 = vpop.f32.mrb[0].mxu0
        %v3229 = vadd.f32 %v3068, %v3228
        %v3230 = vpop.f32.mrb[0].mxu0
        %3231 = vmatprep.mubr.bf16.mxu0 0
        %3232 = vmatmul.mubr.bf16.gmra.mrb[0].mxu0 %v1883
        %v3233 = vpop.f32.mrb[0].mxu0
        %v3234 = vadd.f32 %v3073, %v3233
        %v3235 = vpop.f32.mrb[0].mxu0
        %v3236 = vpop.f32.mrb[0].mxu0
        %v3237 = vadd.f32 %v3076, %v3236
        %v3238 = vpop.f32.mrb[0].mxu0
        %3239 = vmatprep.mubr.bf16.mxu0 0
        %3240 = vmatmul.mubr.bf16.gmra.mrb[0].mxu0 %v1884
        %v3241 = vpop.f32.mrb[0].mxu0
        %v3242 = vadd.f32 %v3081, %v3241
        %v3243 = vpop.f32.mrb[0].mxu0
        %v3244 = vpop.f32.mrb[0].mxu0
        %v3245 = vadd.f32 %v3084, %v3244
        %v3246 = vpop.f32.mrb[0].mxu0
        %3247 = vmatprep.mubr.bf16.mxu0 0
        %3248 = vmatmul.mubr.bf16.gmra.mrb[0].mxu0 %v1885
        %v3249 = vpop.f32.mrb[0].mxu0
        %v3250 = vadd.f32 %v3089, %v3249
        %v3251 = vpop.f32.mrb[0].mxu0
        %v3252 = vpop.f32.mrb[0].mxu0
        %v3253 = vadd.f32 %v3092, %v3252
        %v3254 = vpop.f32.mrb[0].mxu0
        %3255 = vmatprep.mubr.bf16.mxu0 0
        %3256 = vmatmul.mubr.bf16.gmra.mrb[0].mxu0 %v1886
        %v3257 = vpop.f32.mrb[0].mxu0
        %v3258 = vadd.f32 %v3097, %v3257
        %v3259 = vpop.f32.mrb[0].mxu0
        %v3260 = vpop.f32.mrb[0].mxu0
        %v3261 = vadd.f32 %v3100, %v3260
        %v3262 = vpop.f32.mrb[0].mxu0
        %3263 = vmatprep.mubr.bf16.mxu0 0
        %3264 = vmatmul.mubr.bf16.gmra.mrb[0].mxu0 %v1887
        %v3265 = vpop.f32.mrb[0].mxu0
        %v3266 = vadd.f32 %v3105, %v3265
        %v3267 = vpop.f32.mrb[0].mxu0
        %v3268 = vpop.f32.mrb[0].mxu0
        %v3269 = vadd.f32 %v3108, %v3268
        %v3270 = vpop.f32.mrb[0].mxu0
        %3271 = vmatprep.mubr.bf16.mxu0 0
        %3272 = vmatmul.mubr.bf16.gmra.mrb[0].mxu0 %v1888
        %v3273 = vpop.f32.mrb[0].mxu0
        %v3274 = vadd.f32 %v3113, %v3273
        %v3275 = vpop.f32.mrb[0].mxu0
        %v3276 = vpop.f32.mrb[0].mxu0
        %v3277 = vadd.f32 %v3116, %v3276
        %v3278 = vpop.f32.mrb[0].mxu0
        %3279 = vmatprep.mubr.bf16.mxu0 0
        %3280 = vmatmul.mubr.bf16.gmra.mrb[0].mxu0 %v1889
        %v3281 = vpop.f32.mrb[0].mxu0
        %v3282 = vadd.f32 %v3121, %v3281
        %v3283 = vpop.f32.mrb[0].mxu0
        %v3284 = vpop.f32.mrb[0].mxu0
        %v3285 = vadd.f32 %v3124, %v3284
        %v3286 = vpop.f32.mrb[0].mxu0
        %3287 = vmatprep.mubr.bf16.mxu0 0
        %3288 = vmatmul.mubr.bf16.gmra.mrb[0].mxu0 %v1890
        %v3289 = vpop.f32.mrb[0].mxu0
        %v3290 = vadd.f32 %v3129, %v3289
        %v3291 = vpop.f32.mrb[0].mxu0
        %v3292 = vpop.f32.mrb[0].mxu0
        %v3293 = vadd.f32 %v3132, %v3292
        %v3294 = vpop.f32.mrb[0].mxu0
        %3295 = vmatprep.mubr.bf16.mxu0 0
        %3296 = vmatmul.mubr.bf16.gmra.mrb[0].mxu0 %v1917
        %v3297 = vpop.f32.mrb[0].mxu0
        %v3298 = vadd.f32 %v3137, %v3297
        %v3299 = vpop.f32.mrb[0].mxu0
        %v3300 = vpop.f32.mrb[0].mxu0
        %v3301 = vadd.f32 %v3140, %v3300
        %v3302 = vpop.f32.mrb[0].mxu0
        %3303 = vmatprep.mubr.bf16.mxu0 0
        %3304 = vmatmul.mubr.bf16.gmra.mrb[0].mxu0 %v1929
        %v3305 = vpop.f32.mrb[0].mxu0
        %v3306 = vadd.f32 %v3145, %v3305
        %v3307 = vpop.f32.mrb[0].mxu0
        %v3308 = vpop.f32.mrb[0].mxu0
        %v3309 = vadd.f32 %v3148, %v3308
        %v3310 = vpop.f32.mrb[0].mxu0
        %3311 = vdwg.mxu0
        %v3312 = vadd.f32 %v3186, %v3189
        %v3313 = vadd.f32 %v3312, %v3194
        %v3314 = vadd.f32 %v3313, %v3197
        %v3315 = vadd.f32 %v3314, %v3202
        %v3316 = vadd.f32 %v3315, %v3205
        %v3317 = vadd.f32 %v3316, %v3210
        %v3318 = vadd.f32 %v3317, %v3213
        %v3319 = vadd.f32 %v3318, %v3218
        %v3320 = vadd.f32 %v3319, %v3221
        %v3321 = vadd.f32 %v3320, %v3226
        %v3322 = vadd.f32 %v3321, %v3229
        %v3323 = vadd.f32 %v3322, %v3234
        %v3324 = vadd.f32 %v3323, %v3237
        %v3325 = vadd.f32 %v3324, %v3242
        %v3326 = vadd.f32 %v3325, %v3245
        %v3327 = vadd.f32 %v3326, %v3250
        %v3328 = vadd.f32 %v3327, %v3253
        %v3329 = vadd.f32 %v3328, %v3258
        %v3330 = vadd.f32 %v3329, %v3261
        %v3331 = vadd.f32 %v3330, %v3266
        %v3332 = vadd.f32 %v3331, %v3269
        %v3333 = vadd.f32 %v3332, %v3274
        %v3334 = vadd.f32 %v3333, %v3277
        %v3335 = vadd.f32 %v3334, %v3282
        %v3336 = vadd.f32 %v3335, %v3285
        %v3337 = vadd.f32 %v3336, %v3290
        %v3338 = vadd.f32 %v3337, %v3293
        %v3339 = vadd.f32 %v3338, %v3298
        %v3340 = vadd.f32 %v3339, %v3301
        %v3341 = vadd.f32 %v3340, %v3306
        %v3342 = vadd.f32 %v3341, %v3309
        %v3343 = vrot.slane %v3342, 4
        %v3344 = vadd.f32 %v3342, %v3343
        %v3345 = vrot.slane %v3344, 2
        %v3346 = vadd.f32 %v3344, %v3345
        %v3347 = vrot.slane %v3346, 1
        %v3348 = vadd.f32 %v3346, %v3347
        %v3349 = vmul.f32 %v3186, %v3186
        %v3350 = vmul.f32 %v3189, %v3189
        %v3351 = vmul.f32 %v3194, %v3194
        %v3352 = vmul.f32 %v3197, %v3197
        %v3353 = vmul.f32 %v3202, %v3202
        %v3354 = vmul.f32 %v3205, %v3205
        %v3355 = vmul.f32 %v3210, %v3210
        %v3356 = vmul.f32 %v3213, %v3213
        %v3357 = vmul.f32 %v3218, %v3218
        %v3358 = vmul.f32 %v3221, %v3221
        %v3359 = vmul.f32 %v3226, %v3226
        %v3360 = vmul.f32 %v3229, %v3229
        %v3361 = vmul.f32 %v3234, %v3234
        %v3362 = vmul.f32 %v3237, %v3237
        %v3363 = vmul.f32 %v3242, %v3242
        %v3364 = vmul.f32 %v3245, %v3245
        %v3365 = vmul.f32 %v3250, %v3250
        %v3366 = vmul.f32 %v3253, %v3253
        %v3367 = vmul.f32 %v3258, %v3258
        %v3368 = vmul.f32 %v3261, %v3261
        %v3369 = vmul.f32 %v3266, %v3266
        %v3370 = vmul.f32 %v3269, %v3269
        %v3371 = vmul.f32 %v3274, %v3274
        %v3372 = vmul.f32 %v3277, %v3277
        %v3373 = vmul.f32 %v3282, %v3282
        %v3374 = vmul.f32 %v3285, %v3285
        %v3375 = vmul.f32 %v3290, %v3290
        %v3376 = vmul.f32 %v3293, %v3293
        %v3377 = vmul.f32 %v3298, %v3298
        %v3378 = vmul.f32 %v3301, %v3301
        %v3379 = vmul.f32 %v3306, %v3306
        %v3380 = vmul.f32 %v3309, %v3309
        %v3381 = vadd.f32 %v3349, %v3350
        %v3382 = vadd.f32 %v3381, %v3351
        %v3383 = vadd.f32 %v3382, %v3352
        %v3384 = vadd.f32 %v3383, %v3353
        %v3385 = vadd.f32 %v3384, %v3354
        %v3386 = vadd.f32 %v3385, %v3355
        %v3387 = vadd.f32 %v3386, %v3356
        %v3388 = vadd.f32 %v3387, %v3357
        %v3389 = vadd.f32 %v3388, %v3358
        %v3390 = vadd.f32 %v3389, %v3359
        %v3391 = vadd.f32 %v3390, %v3360
        %v3392 = vadd.f32 %v3391, %v3361
        %v3393 = vadd.f32 %v3392, %v3362
        %v3394 = vadd.f32 %v3393, %v3363
        %v3395 = vadd.f32 %v3394, %v3364
        %v3396 = vadd.f32 %v3395, %v3365
        %v3397 = vadd.f32 %v3396, %v3366
        %v3398 = vadd.f32 %v3397, %v3367
        %v3399 = vadd.f32 %v3398, %v3368
        %v3400 = vadd.f32 %v3399, %v3369
        %v3401 = vadd.f32 %v3400, %v3370
        %v3402 = vadd.f32 %v3401, %v3371
        %v3403 = vadd.f32 %v3402, %v3372
        %v3404 = vadd.f32 %v3403, %v3373
        %v3405 = vadd.f32 %v3404, %v3374
        %v3406 = vadd.f32 %v3405, %v3375
        %v3407 = vadd.f32 %v3406, %v3376
        %v3408 = vadd.f32 %v3407, %v3377
        %v3409 = vadd.f32 %v3408, %v3378
        %v3410 = vadd.f32 %v3409, %v3379
        %v3411 = vadd.f32 %v3410, %v3380
        %v3412 = vrot.slane %v3411, 4
        %v3413 = vadd.f32 %v3411, %v3412
        %v3414 = vrot.slane %v3413, 2
        %v3415 = vadd.f32 %v3413, %v3414
        %v3416 = vrot.slane %v3415, 1
        %v3417 = vadd.f32 %v3415, %v3416
        %v3418 = vmul.f32 %v3348, 0.00390625
        %v3419 = vmul.f32 %v3417, 0.00390625
        %v3420 = vmul.f32 %v3418, %v3418
        %v3421 = vsub.f32 %v3419, %v3420
        %v3422 = vmax.f32 %v3421, 0.0
        %v3423 = vsub.f32 %v3186, %v3418
        %v3424 = vsub.f32 %v3189, %v3418
        %v3425 = vsub.f32 %v3194, %v3418
        %v3426 = vsub.f32 %v3197, %v3418
        %v3427 = vsub.f32 %v3202, %v3418
        %v3428 = vsub.f32 %v3205, %v3418
        %v3429 = vsub.f32 %v3210, %v3418
        %v3430 = vsub.f32 %v3213, %v3418
        %v3431 = vsub.f32 %v3218, %v3418
        %v3432 = vsub.f32 %v3221, %v3418
        %v3433 = vsub.f32 %v3226, %v3418
        %v3434 = vsub.f32 %v3229, %v3418
        %v3435 = vsub.f32 %v3234, %v3418
        %v3436 = vsub.f32 %v3237, %v3418
        %v3437 = vsub.f32 %v3242, %v3418
        %v3438 = vsub.f32 %v3245, %v3418
        %v3439 = vsub.f32 %v3250, %v3418
        %v3440 = vsub.f32 %v3253, %v3418
        %v3441 = vsub.f32 %v3258, %v3418
        %v3442 = vsub.f32 %v3261, %v3418
        %v3443 = vsub.f32 %v3266, %v3418
        %v3444 = vsub.f32 %v3269, %v3418
        %v3445 = vsub.f32 %v3274, %v3418
        %v3446 = vsub.f32 %v3277, %v3418
        %v3447 = vsub.f32 %v3282, %v3418
        %v3448 = vsub.f32 %v3285, %v3418
        %v3449 = vsub.f32 %v3290, %v3418
        %v3450 = vsub.f32 %v3293, %v3418
        %v3451 = vsub.f32 %v3298, %v3418
        %v3452 = vsub.f32 %v3301, %v3418
        %v3453 = vsub.f32 %v3306, %v3418
        %v3454 = vsub.f32 %v3309, %v3418
        %v3455 = vadd.f32 %v3422, 1e-05
        %v3456 = vrsqrt.pop %v3455
        %v3457 = vmul.f32 %v3423, %v3456
        %v3458 = vmul.f32 %v3424, %v3456
        %v3459 = vmul.f32 %v3425, %v3456
        %v3460 = vmul.f32 %v3426, %v3456
        %v3461 = vmul.f32 %v3427, %v3456
        %v3462 = vmul.f32 %v3428, %v3456
        %v3463 = vmul.f32 %v3429, %v3456
        %v3464 = vmul.f32 %v3430, %v3456
        %v3465 = vmul.f32 %v3431, %v3456
        %v3466 = vmul.f32 %v3432, %v3456
        %v3467 = vmul.f32 %v3433, %v3456
        %v3468 = vmul.f32 %v3434, %v3456
        %v3469 = vmul.f32 %v3435, %v3456
        %v3470 = vmul.f32 %v3436, %v3456
        %v3471 = vmul.f32 %v3437, %v3456
        %v3472 = vmul.f32 %v3438, %v3456
        %v3473 = vmul.f32 %v3439, %v3456
        %v3474 = vmul.f32 %v3440, %v3456
        %v3475 = vmul.f32 %v3441, %v3456
        %v3476 = vmul.f32 %v3442, %v3456
        %v3477 = vmul.f32 %v3443, %v3456
        %v3478 = vmul.f32 %v3444, %v3456
        %v3479 = vmul.f32 %v3445, %v3456
        %v3480 = vmul.f32 %v3446, %v3456
        %v3481 = vmul.f32 %v3447, %v3456
        %v3482 = vmul.f32 %v3448, %v3456
        %v3483 = vmul.f32 %v3449, %v3456
        %v3484 = vmul.f32 %v3450, %v3456
        %v3485 = vmul.f32 %v3451, %v3456
        %v3486 = vmul.f32 %v3452, %v3456
        %v3487 = vmul.f32 %v3453, %v3456
        %v3488 = vmul.f32 %v3454, %v3456
        %v3489 = vmax.f32 %v3457, 0.0
        %v3490 = vmax.f32 %v3458, 0.0
        %v3491 = vmax.f32 %v3459, 0.0
        %v3492 = vmax.f32 %v3460, 0.0
        %v3493 = vmax.f32 %v3461, 0.0
        %v3494 = vmax.f32 %v3462, 0.0
        %v3495 = vmax.f32 %v3463, 0.0
        %v3496 = vmax.f32 %v3464, 0.0
        %v3497 = vmax.f32 %v3465, 0.0
        %v3498 = vmax.f32 %v3466, 0.0
        %v3499 = vmax.f32 %v3467, 0.0
        %v3500 = vmax.f32 %v3468, 0.0
        %v3501 = vmax.f32 %v3469, 0.0
        %v3502 = vmax.f32 %v3470, 0.0
        %v3503 = vmax.f32 %v3471, 0.0
        %v3504 = vmax.f32 %v3472, 0.0
        %v3505 = vmax.f32 %v3473, 0.0
        %v3506 = vmax.f32 %v3474, 0.0
        %v3507 = vmax.f32 %v3475, 0.0
        %v3508 = vmax.f32 %v3476, 0.0
        %v3509 = vmax.f32 %v3477, 0.0
        %v3510 = vmax.f32 %v3478, 0.0
        %v3511 = vmax.f32 %v3479, 0.0
        %v3512 = vmax.f32 %v3480, 0.0
        %v3513 = vmax.f32 %v3481, 0.0
        %v3514 = vmax.f32 %v3482, 0.0
        %v3515 = vmax.f32 %v3483, 0.0
        %v3516 = vmax.f32 %v3484, 0.0
        %v3517 = vmax.f32 %v3485, 0.0
        %v3518 = vmax.f32 %v3486, 0.0
        %v3519 = vmax.f32 %v3487, 0.0
        %v3520 = vmax.f32 %v3488, 0.0
        %v3521 = vpack.c.bf16 %v3490, %v3489
        %v3522 = vpack.c.bf16 %v3492, %v3491
        %v3523 = vpack.c.bf16 %v3494, %v3493
        %v3524 = vpack.c.bf16 %v3496, %v3495
        %v3525 = vpack.c.bf16 %v3498, %v3497
        %v3526 = vpack.c.bf16 %v3500, %v3499
        %v3527 = vpack.c.bf16 %v3502, %v3501
        %v3528 = vpack.c.bf16 %v3504, %v3503
        %v3529 = vpack.c.bf16 %v3506, %v3505
        %v3530 = vpack.c.bf16 %v3508, %v3507
        %v3531 = vpack.c.bf16 %v3510, %v3509
        %v3532 = vpack.c.bf16 %v3512, %v3511
        %v3533 = vpack.c.bf16 %v3514, %v3513
        %v3534 = vpack.c.bf16 %v3516, %v3515
        %v3535 = vpack.c.bf16 %v3518, %v3517
        %v3536 = vpack.c.bf16 %v3520, %v3519
        %v3553 = vunpack.c.l.b16 %v3521
        %v3554 = vunpack.c.h.b16 %v3521
        %v3555 = vunpack.c.l.b16 %v3522
        %v3556 = vunpack.c.h.b16 %v3522
        %v3557 = vunpack.c.l.b16 %v3523
        %v3558 = vunpack.c.h.b16 %v3523
        %v3559 = vunpack.c.l.b16 %v3524
        %v3560 = vunpack.c.h.b16 %v3524
        %v3561 = vunpack.c.l.b16 %v3525
        %v3562 = vunpack.c.h.b16 %v3525
        %v3563 = vunpack.c.l.b16 %v3526
        %v3564 = vunpack.c.h.b16 %v3526
        %v3565 = vunpack.c.l.b16 %v3527
        %v3566 = vunpack.c.h.b16 %v3527
        %v3567 = vunpack.c.l.b16 %v3528
        %v3568 = vunpack.c.h.b16 %v3528
        %v3569 = vunpack.c.l.b16 %v3529
        %v3570 = vunpack.c.h.b16 %v3529
        %v3571 = vunpack.c.l.b16 %v3530
        %v3572 = vunpack.c.h.b16 %v3530
        %v3573 = vunpack.c.l.b16 %v3531
        %v3574 = vunpack.c.h.b16 %v3531
        %v3575 = vunpack.c.l.b16 %v3532
        %v3576 = vunpack.c.h.b16 %v3532
        %v3577 = vunpack.c.l.b16 %v3533
        %v3578 = vunpack.c.h.b16 %v3533
        %v3579 = vunpack.c.l.b16 %v3534
        %v3580 = vunpack.c.h.b16 %v3534
        %v3581 = vunpack.c.l.b16 %v3535
        %v3582 = vunpack.c.h.b16 %v3535
        %v3583 = vunpack.c.l.b16 %v3536
        %v3584 = vunpack.c.h.b16 %v3536
        %v3585 = vpack.c.b16 %v3553, %v3553
        %v3586 = vpack.c.b16 %v3554, %v3554
        %v3587 = vpack.c.b16 %v3555, %v3555
        %v3588 = vpack.c.b16 %v3556, %v3556
        %v3589 = vpack.c.b16 %v3557, %v3557
        %v3590 = vpack.c.b16 %v3558, %v3558
        %v3591 = vpack.c.b16 %v3559, %v3559
        %v3592 = vpack.c.b16 %v3560, %v3560
        %v3593 = vpack.c.b16 %v3561, %v3561
        %v3594 = vpack.c.b16 %v3562, %v3562
        %v3595 = vpack.c.b16 %v3563, %v3563
        %v3596 = vpack.c.b16 %v3564, %v3564
        %v3597 = vpack.c.b16 %v3565, %v3565
        %v3598 = vpack.c.b16 %v3566, %v3566
        %v3599 = vpack.c.b16 %v3567, %v3567
        %v3600 = vpack.c.b16 %v3568, %v3568
        %v3601 = vpack.c.b16 %v3569, %v3569
        %v3602 = vpack.c.b16 %v3570, %v3570
        %v3603 = vpack.c.b16 %v3571, %v3571
        %v3604 = vpack.c.b16 %v3572, %v3572
        %v3605 = vpack.c.b16 %v3573, %v3573
        %v3606 = vpack.c.b16 %v3574, %v3574
        %v3607 = vpack.c.b16 %v3575, %v3575
        %v3608 = vpack.c.b16 %v3576, %v3576
        %v3609 = vpack.c.b16 %v3577, %v3577
        %v3610 = vpack.c.b16 %v3578, %v3578
        %v3611 = vpack.c.b16 %v3579, %v3579
        %v3612 = vpack.c.b16 %v3580, %v3580
        %v3613 = vpack.c.b16 %v3581, %v3581
        %v3614 = vpack.c.b16 %v3582, %v3582
        %v3615 = vpack.c.b16 %v3583, %v3583
        %v3616 = vpack.c.b16 %v3584, %v3584
        %v3618 = vshrl.u32 %v3585, 16
        %v3620 = vrot.slane %v3618, 7
        %v3621 = vshll.u32 %v3585, 16
        %v3623 = vor.u32 %v3620, %v3621
        %v3624 = vrot.slane %v3620, 4
        %v3626 = vshrl.u32 %v3586, 16
        %v3628 = vrot.slane %v3626, 7
        %v3629 = vshll.u32 %v3586, 16
        %v3631 = vor.u32 %v3628, %v3629
        %v3632 = vsel %vm300, %v3624, %v3631
        %v3633 = vrot.slane %v3628, 4
        %v3635 = vshrl.u32 %v3587, 16
        %v3637 = vrot.slane %v3635, 7
        %v3638 = vshll.u32 %v3587, 16
        %v3640 = vor.u32 %v3637, %v3638
        %v3641 = vrot.slane %v3637, 4
        %v3643 = vshrl.u32 %v3588, 16
        %v3645 = vrot.slane %v3643, 7
        %v3646 = vshll.u32 %v3588, 16
        %v3648 = vor.u32 %v3645, %v3646
        %v3649 = vsel %vm300, %v3641, %v3648
        %v3650 = vrot.slane %v3645, 4
        %v3652 = vshrl.u32 %v3589, 16
        %v3654 = vrot.slane %v3652, 7
        %v3655 = vshll.u32 %v3589, 16
        %v3657 = vor.u32 %v3654, %v3655
        %v3658 = vrot.slane %v3654, 4
        %v3660 = vshrl.u32 %v3590, 16
        %v3662 = vrot.slane %v3660, 7
        %v3663 = vshll.u32 %v3590, 16
        %v3665 = vor.u32 %v3662, %v3663
        %v3666 = vsel %vm300, %v3658, %v3665
        %v3667 = vrot.slane %v3662, 4
        %v3669 = vshrl.u32 %v3591, 16
        %v3671 = vrot.slane %v3669, 7
        %v3672 = vshll.u32 %v3591, 16
        %v3674 = vor.u32 %v3671, %v3672
        %v3675 = vrot.slane %v3671, 4
        %v3677 = vshrl.u32 %v3592, 16
        %v3679 = vrot.slane %v3677, 7
        %v3680 = vshll.u32 %v3592, 16
        %v3682 = vor.u32 %v3679, %v3680
        %v3683 = vsel %vm300, %v3675, %v3682
        %v3684 = vrot.slane %v3679, 4
        %v3686 = vshrl.u32 %v3593, 16
        %v3688 = vrot.slane %v3686, 7
        %v3689 = vshll.u32 %v3593, 16
        %v3691 = vor.u32 %v3688, %v3689
        %v3692 = vrot.slane %v3688, 4
        %v3694 = vshrl.u32 %v3594, 16
        %v3696 = vrot.slane %v3694, 7
        %v3697 = vshll.u32 %v3594, 16
        %v3699 = vor.u32 %v3696, %v3697
        %v3700 = vsel %vm300, %v3692, %v3699
        %v3701 = vrot.slane %v3696, 4
        %v3703 = vshrl.u32 %v3595, 16
        %v3705 = vrot.slane %v3703, 7
        %v3706 = vshll.u32 %v3595, 16
        %v3708 = vor.u32 %v3705, %v3706
        %v3709 = vrot.slane %v3705, 4
        %v3711 = vshrl.u32 %v3596, 16
        %v3713 = vrot.slane %v3711, 7
        %v3714 = vshll.u32 %v3596, 16
        %v3716 = vor.u32 %v3713, %v3714
        %v3717 = vsel %vm300, %v3709, %v3716
        %v3718 = vrot.slane %v3713, 4
        %v3720 = vshrl.u32 %v3597, 16
        %v3722 = vrot.slane %v3720, 7
        %v3723 = vshll.u32 %v3597, 16
        %v3725 = vor.u32 %v3722, %v3723
        %v3726 = vrot.slane %v3722, 4
        %v3728 = vshrl.u32 %v3598, 16
        %v3730 = vrot.slane %v3728, 7
        %v3731 = vshll.u32 %v3598, 16
        %v3733 = vor.u32 %v3730, %v3731
        %v3734 = vsel %vm300, %v3726, %v3733
        %v3735 = vrot.slane %v3730, 4
        %v3737 = vshrl.u32 %v3599, 16
        %v3739 = vrot.slane %v3737, 7
        %v3740 = vshll.u32 %v3599, 16
        %v3742 = vor.u32 %v3739, %v3740
        %v3743 = vrot.slane %v3739, 4
        %v3745 = vshrl.u32 %v3600, 16
        %v3747 = vrot.slane %v3745, 7
        %v3748 = vshll.u32 %v3600, 16
        %v3750 = vor.u32 %v3747, %v3748
        %v3751 = vsel %vm300, %v3743, %v3750
        %v3752 = vrot.slane %v3747, 4
        %v3754 = vshrl.u32 %v3601, 16
        %v3756 = vrot.slane %v3754, 7
        %v3757 = vshll.u32 %v3601, 16
        %v3759 = vor.u32 %v3756, %v3757
        %v3760 = vrot.slane %v3756, 4
        %v3762 = vshrl.u32 %v3602, 16
        %v3764 = vrot.slane %v3762, 7
        %v3765 = vshll.u32 %v3602, 16
        %v3767 = vor.u32 %v3764, %v3765
        %v3768 = vsel %vm300, %v3760, %v3767
        %v3769 = vrot.slane %v3764, 4
        %v3771 = vshrl.u32 %v3603, 16
        %v3773 = vrot.slane %v3771, 7
        %v3774 = vshll.u32 %v3603, 16
        %v3776 = vor.u32 %v3773, %v3774
        %v3777 = vrot.slane %v3773, 4
        %v3779 = vshrl.u32 %v3604, 16
        %v3781 = vrot.slane %v3779, 7
        %v3782 = vshll.u32 %v3604, 16
        %v3784 = vor.u32 %v3781, %v3782
        %v3785 = vsel %vm300, %v3777, %v3784
        %v3786 = vrot.slane %v3781, 4
        %v3788 = vshrl.u32 %v3605, 16
        %v3790 = vrot.slane %v3788, 7
        %v3791 = vshll.u32 %v3605, 16
        %v3793 = vor.u32 %v3790, %v3791
        %v3794 = vrot.slane %v3790, 4
        %v3796 = vshrl.u32 %v3606, 16
        %v3798 = vrot.slane %v3796, 7
        %v3799 = vshll.u32 %v3606, 16
        %v3801 = vor.u32 %v3798, %v3799
        %v3802 = vsel %vm300, %v3794, %v3801
        %v3803 = vrot.slane %v3798, 4
        %v3805 = vshrl.u32 %v3607, 16
        %v3807 = vrot.slane %v3805, 7
        %v3808 = vshll.u32 %v3607, 16
        %v3810 = vor.u32 %v3807, %v3808
        %v3811 = vrot.slane %v3807, 4
        %v3813 = vshrl.u32 %v3608, 16
        %v3815 = vrot.slane %v3813, 7
        %v3816 = vshll.u32 %v3608, 16
        %v3818 = vor.u32 %v3815, %v3816
        %v3819 = vsel %vm300, %v3811, %v3818
        %v3820 = vrot.slane %v3815, 4
        %v3822 = vshrl.u32 %v3609, 16
        %v3824 = vrot.slane %v3822, 7
        %v3825 = vshll.u32 %v3609, 16
        %v3827 = vor.u32 %v3824, %v3825
        %v3828 = vrot.slane %v3824, 4
        %v3830 = vshrl.u32 %v3610, 16
        %v3832 = vrot.slane %v3830, 7
        %v3833 = vshll.u32 %v3610, 16
        %v3835 = vor.u32 %v3832, %v3833
        %v3836 = vsel %vm300, %v3828, %v3835
        %v3837 = vrot.slane %v3832, 4
        %v3839 = vshrl.u32 %v3611, 16
        %v3841 = vrot.slane %v3839, 7
        %v3842 = vshll.u32 %v3611, 16
        %v3844 = vor.u32 %v3841, %v3842
        %v3845 = vrot.slane %v3841, 4
        %v3847 = vshrl.u32 %v3612, 16
        %v3849 = vrot.slane %v3847, 7
        %v3850 = vshll.u32 %v3612, 16
        %v3852 = vor.u32 %v3849, %v3850
        %v3853 = vsel %vm300, %v3845, %v3852
        %v3854 = vrot.slane %v3849, 4
        %v3856 = vshrl.u32 %v3613, 16
        %v3858 = vrot.slane %v3856, 7
        %v3859 = vshll.u32 %v3613, 16
        %v3861 = vor.u32 %v3858, %v3859
        %v3862 = vrot.slane %v3858, 4
        %v3864 = vshrl.u32 %v3614, 16
        %v3866 = vrot.slane %v3864, 7
        %v3867 = vshll.u32 %v3614, 16
        %v3869 = vor.u32 %v3866, %v3867
        %v3870 = vsel %vm300, %v3862, %v3869
        %v3871 = vrot.slane %v3866, 4
        %v3873 = vshrl.u32 %v3615, 16
        %v3875 = vrot.slane %v3873, 7
        %v3876 = vshll.u32 %v3615, 16
        %v3878 = vor.u32 %v3875, %v3876
        %v3879 = vrot.slane %v3875, 4
        %v3881 = vshrl.u32 %v3616, 16
        %v3883 = vrot.slane %v3881, 7
        %v3884 = vshll.u32 %v3616, 16
        %v3886 = vor.u32 %v3883, %v3884
        %v3887 = vsel %vm300, %v3879, %v3886
        %v3888 = vrot.slane %v3883, 4
        %s3937 = scalar_lea.vmem [#allocation3], 12
        %v3938 = vld [vmem:[%s3937] sm:$0xf]
        %v3939 = vsel %vm624, %v3623, %v3938
        %3940 = vst [vmem:[%s3937] sm:$0xf] %v3939
        %3941 = vst [vmem:[%s3937 + $0x4] sm:$0xf] %v3632
        %v3942 = vld [vmem:[%s3937 + $0x8] sm:$0x1]
        %v3943 = vsel %vm630, %v3633, %v3942
        %3944 = vst [vmem:[%s3937 + $0x8] sm:$0x1] %v3943
        %v3945 = vld [vmem:[%s3937 + $0xc] sm:$0xf]
        %v3946 = vsel %vm624, %v3640, %v3945
        %3947 = vst [vmem:[%s3937 + $0xc] sm:$0xf] %v3946
        %3948 = vst [vmem:[%s3937 + $0x10] sm:$0xf] %v3649
        %v3949 = vld [vmem:[%s3937 + $0x14] sm:$0x1]
        %v3950 = vsel %vm630, %v3650, %v3949
        %3951 = vst [vmem:[%s3937 + $0x14] sm:$0x1] %v3950
        %v3952 = vld [vmem:[%s3937 + $0x18] sm:$0xf]
        %v3953 = vsel %vm624, %v3657, %v3952
        %3954 = vst [vmem:[%s3937 + $0x18] sm:$0xf] %v3953
        %3955 = vst [vmem:[%s3937 + $0x1c] sm:$0xf] %v3666
        %v3956 = vld [vmem:[%s3937 + $0x20] sm:$0x1]
        %v3957 = vsel %vm630, %v3667, %v3956
        %3958 = vst [vmem:[%s3937 + $0x20] sm:$0x1] %v3957
        %v3959 = vld [vmem:[%s3937 + $0x24] sm:$0xf]
        %v3960 = vsel %vm624, %v3674, %v3959
        %3961 = vst [vmem:[%s3937 + $0x24] sm:$0xf] %v3960
        %3962 = vst [vmem:[%s3937 + $0x28] sm:$0xf] %v3683
        %v3963 = vld [vmem:[%s3937 + $0x2c] sm:$0x1]
        %v3964 = vsel %vm630, %v3684, %v3963
        %3965 = vst [vmem:[%s3937 + $0x2c] sm:$0x1] %v3964
        %v3966 = vld [vmem:[%s3937 + $0x30] sm:$0xf]
        %v3967 = vsel %vm624, %v3691, %v3966
        %3968 = vst [vmem:[%s3937 + $0x30] sm:$0xf] %v3967
        %3969 = vst [vmem:[%s3937 + $0x34] sm:$0xf] %v3700
        %v3970 = vld [vmem:[%s3937 + $0x38] sm:$0x1]
        %v3971 = vsel %vm630, %v3701, %v3970
        %3972 = vst [vmem:[%s3937 + $0x38] sm:$0x1] %v3971
        %v3973 = vld [vmem:[%s3937 + $0x3c] sm:$0xf]
        %v3974 = vsel %vm624, %v3708, %v3973
        %3975 = vst [vmem:[%s3937 + $0x3c] sm:$0xf] %v3974
        %3976 = vst [vmem:[%s3937 + $0x40] sm:$0xf] %v3717
        %v3977 = vld [vmem:[%s3937 + $0x44] sm:$0x1]
        %v3978 = vsel %vm630, %v3718, %v3977
        %3979 = vst [vmem:[%s3937 + $0x44] sm:$0x1] %v3978
        %v3980 = vld [vmem:[%s3937 + $0x48] sm:$0xf]
        %v3981 = vsel %vm624, %v3725, %v3980
        %3982 = vst [vmem:[%s3937 + $0x48] sm:$0xf] %v3981
        %3983 = vst [vmem:[%s3937 + $0x4c] sm:$0xf] %v3734
        %v3984 = vld [vmem:[%s3937 + $0x50] sm:$0x1]
        %v3985 = vsel %vm630, %v3735, %v3984
        %3986 = vst [vmem:[%s3937 + $0x50] sm:$0x1] %v3985
        %v3987 = vld [vmem:[%s3937 + $0x54] sm:$0xf]
        %v3988 = vsel %vm624, %v3742, %v3987
        %3989 = vst [vmem:[%s3937 + $0x54] sm:$0xf] %v3988
        %3990 = vst [vmem:[%s3937 + $0x58] sm:$0xf] %v3751
        %v3991 = vld [vmem:[%s3937 + $0x5c] sm:$0x1]
        %v3992 = vsel %vm630, %v3752, %v3991
        %3993 = vst [vmem:[%s3937 + $0x5c] sm:$0x1] %v3992
        %v3994 = vld [vmem:[%s3937 + $0x60] sm:$0xf]
        %v3995 = vsel %vm624, %v3759, %v3994
        %3996 = vst [vmem:[%s3937 + $0x60] sm:$0xf] %v3995
        %3997 = vst [vmem:[%s3937 + $0x64] sm:$0xf] %v3768
        %v3998 = vld [vmem:[%s3937 + $0x68] sm:$0x1]
        %v3999 = vsel %vm630, %v3769, %v3998
        %4000 = vst [vmem:[%s3937 + $0x68] sm:$0x1] %v3999
        %v4001 = vld [vmem:[%s3937 + $0x6c] sm:$0xf]
        %v4002 = vsel %vm624, %v3776, %v4001
        %4003 = vst [vmem:[%s3937 + $0x6c] sm:$0xf] %v4002
        %4004 = vst [vmem:[%s3937 + $0x70] sm:$0xf] %v3785
        %v4005 = vld [vmem:[%s3937 + $0x74] sm:$0x1]
        %v4006 = vsel %vm630, %v3786, %v4005
        %4007 = vst [vmem:[%s3937 + $0x74] sm:$0x1] %v4006
        %v4008 = vld [vmem:[%s3937 + $0x78] sm:$0xf]
        %v4009 = vsel %vm624, %v3793, %v4008
        %4010 = vst [vmem:[%s3937 + $0x78] sm:$0xf] %v4009
        %4011 = vst [vmem:[%s3937 + $0x7c] sm:$0xf] %v3802
        %v4012 = vld [vmem:[%s3937 + $0x80] sm:$0x1]
        %v4013 = vsel %vm630, %v3803, %v4012
        %4014 = vst [vmem:[%s3937 + $0x80] sm:$0x1] %v4013
        %v4015 = vld [vmem:[%s3937 + $0x84] sm:$0xf]
        %v4016 = vsel %vm624, %v3810, %v4015
        %4017 = vst [vmem:[%s3937 + $0x84] sm:$0xf] %v4016
        %4018 = vst [vmem:[%s3937 + $0x88] sm:$0xf] %v3819
        %v4019 = vld [vmem:[%s3937 + $0x8c] sm:$0x1]
        %v4020 = vsel %vm630, %v3820, %v4019
        %4021 = vst [vmem:[%s3937 + $0x8c] sm:$0x1] %v4020
        %v4022 = vld [vmem:[%s3937 + $0x90] sm:$0xf]
        %v4023 = vsel %vm624, %v3827, %v4022
        %4024 = vst [vmem:[%s3937 + $0x90] sm:$0xf] %v4023
        %4025 = vst [vmem:[%s3937 + $0x94] sm:$0xf] %v3836
        %v4026 = vld [vmem:[%s3937 + $0x98] sm:$0x1]
        %v4027 = vsel %vm630, %v3837, %v4026
        %4028 = vst [vmem:[%s3937 + $0x98] sm:$0x1] %v4027
        %v4029 = vld [vmem:[%s3937 + $0x9c] sm:$0xf]
        %v4030 = vsel %vm624, %v3844, %v4029
        %4031 = vst [vmem:[%s3937 + $0x9c] sm:$0xf] %v4030
        %4032 = vst [vmem:[%s3937 + $0xa0] sm:$0xf] %v3853
        %v4033 = vld [vmem:[%s3937 + $0xa4] sm:$0x1]
        %v4034 = vsel %vm630, %v3854, %v4033
        %4035 = vst [vmem:[%s3937 + $0xa4] sm:$0x1] %v4034
        %v4036 = vld [vmem:[%s3937 + $0xa8] sm:$0xf]
        %v4037 = vsel %vm624, %v3861, %v4036
        %4038 = vst [vmem:[%s3937 + $0xa8] sm:$0xf] %v4037
        %4039 = vst [vmem:[%s3937 + $0xac] sm:$0xf] %v3870
        %v4040 = vld [vmem:[%s3937 + $0xb0] sm:$0x1]
        %v4041 = vsel %vm630, %v3871, %v4040
        %4042 = vst [vmem:[%s3937 + $0xb0] sm:$0x1] %v4041
        %v4043 = vld [vmem:[%s3937 + $0xb4] sm:$0xf]
        %v4044 = vsel %vm624, %v3878, %v4043
        %4045 = vst [vmem:[%s3937 + $0xb4] sm:$0xf] %v4044
        %4046 = vst [vmem:[%s3937 + $0xb8] sm:$0xf] %v3887
        %v4047 = vld [vmem:[%s3937 + $0xbc] sm:$0x1]
        %v4048 = vsel %vm630, %v3888, %v4047
        %4049 = vst [vmem:[%s3937 + $0xbc] sm:$0x1] %v4048
        %v4050 = vld [vmem:[#allocation3] sm:$0xf]
        %v4051 = vsel %vm624, %v3640, %v4050
        %4052 = vst [vmem:[#allocation3] sm:$0xf] %v4051
        %4053 = vst [vmem:[#allocation3 + $0x4] sm:$0xf] %v3649
        %v4054 = vld [vmem:[#allocation3 + $0x8] sm:$0x1]
        %v4055 = vsel %vm630, %v3650, %v4054
        %4056 = vst [vmem:[#allocation3 + $0x8] sm:$0x1] %v4055
        %s4057 = scalar_lea.vmem [#allocation3], 204
        %v4058 = vld [vmem:[%s4057] sm:$0xf]
        %v4059 = vsel %vm624, %v3861, %v4058
        %4060 = vst [vmem:[%s4057] sm:$0xf] %v4059
        %4061 = vst [vmem:[%s4057 + $0x4] sm:$0xf] %v3870
        %v4062 = vld [vmem:[%s4057 + $0x8] sm:$0x1]
        %v4063 = vsel %vm630, %v3871, %v4062
        %4064 = vst [vmem:[%s4057 + $0x8] sm:$0x1] %v4063
        %v4065 = vld [vmem:[#allocation3] sm:$0x2]
        %v4066 = vld [vmem:[#allocation3 + $0xc] sm:$0x2]
        %v4067 = vld [vmem:[#allocation3 + $0x18] sm:$0x2]
        %v4068 = vld [vmem:[#allocation3 + $0x24] sm:$0x2]
        %v4069 = vld [vmem:[#allocation3 + $0x30] sm:$0x2]
        %v4070 = vld [vmem:[#allocation3 + $0x3c] sm:$0x2]
        %v4071 = vld [vmem:[#allocation3 + $0x48] sm:$0x2]
        %v4072 = vld [vmem:[#allocation3 + $0x54] sm:$0x2]
        %v4073 = vld [vmem:[#allocation3 + $0x60] sm:$0x2]
        %v4074 = vld [vmem:[#allocation3 + $0x6c] sm:$0x2]
        %v4075 = vld [vmem:[#allocation3 + $0x78] sm:$0x2]
        %v4076 = vld [vmem:[#allocation3 + $0x84] sm:$0x2]
        %v4077 = vld [vmem:[#allocation3 + $0x90] sm:$0x2]
        %v4078 = vld [vmem:[#allocation3 + $0x9c] sm:$0x2]
        %v4079 = vld [vmem:[#allocation3 + $0xa8] sm:$0x2]
        %v4080 = vld [vmem:[#allocation3 + $0xb4] sm:$0x2]
        %v4081 = vld [vmem:[#allocation3 + $0xc0] sm:$0x2]
        %v4082 = vld [vmem:[#allocation3 + $0xcc] sm:$0x2]
        %v4101 = vrot.slane %v4065, 5
        %v4102 = vrot.slane %v4101, 4
        %v4103 = vrot.slane %v4066, 5
        %v4104 = vrot.slane %v4103, 4
        %v4105 = vrot.slane %v4067, 5
        %v4106 = vrot.slane %v4105, 4
        %v4107 = vrot.slane %v4068, 5
        %v4108 = vrot.slane %v4107, 4
        %v4109 = vrot.slane %v4069, 5
        %v4110 = vrot.slane %v4109, 4
        %v4111 = vrot.slane %v4070, 5
        %v4112 = vrot.slane %v4111, 4
        %v4113 = vrot.slane %v4071, 5
        %v4114 = vrot.slane %v4113, 4
        %v4115 = vrot.slane %v4072, 5
        %v4116 = vrot.slane %v4115, 4
        %v4117 = vrot.slane %v4073, 5
        %v4118 = vrot.slane %v4117, 4
        %v4119 = vrot.slane %v4074, 5
        %v4120 = vrot.slane %v4119, 4
        %v4121 = vrot.slane %v4075, 5
        %v4122 = vrot.slane %v4121, 4
        %v4123 = vrot.slane %v4076, 5
        %v4124 = vrot.slane %v4123, 4
        %v4125 = vrot.slane %v4077, 5
        %v4126 = vrot.slane %v4125, 4
        %v4127 = vrot.slane %v4078, 5
        %v4128 = vrot.slane %v4127, 4
        %v4129 = vrot.slane %v4079, 5
        %v4130 = vrot.slane %v4129, 4
        %v4131 = vrot.slane %v4080, 5
        %v4132 = vrot.slane %v4131, 4
        %v4133 = vrot.slane %v4081, 5
        %v4134 = vrot.slane %v4133, 4
        %v4135 = vrot.slane %v4082, 5
        %v4136 = vrot.slane %v4135, 4
        %v4155 = vld [vmem:[#allocation3] sm:$0x1]
        %v4156 = vsel %vm630, %v4102, %v4155
        %4157 = vst [vmem:[#allocation3] sm:$0x1] %v4156
        %v4158 = vld [vmem:[#allocation3 + $0xc] sm:$0x1]
        %v4159 = vsel %vm630, %v4104, %v4158
        %4160 = vst [vmem:[#allocation3 + $0xc] sm:$0x1] %v4159
        %v4161 = vld [vmem:[#allocation3 + $0x18] sm:$0x1]
        %v4162 = vsel %vm630, %v4106, %v4161
        %4163 = vst [vmem:[#allocation3 + $0x18] sm:$0x1] %v4162
        %v4164 = vld [vmem:[#allocation3 + $0x24] sm:$0x1]
        %v4165 = vsel %vm630, %v4108, %v4164
        %4166 = vst [vmem:[#allocation3 + $0x24] sm:$0x1] %v4165
        %v4167 = vld [vmem:[#allocation3 + $0x30] sm:$0x1]
        %v4168 = vsel %vm630, %v4110, %v4167
        %4169 = vst [vmem:[#allocation3 + $0x30] sm:$0x1] %v4168
        %v4170 = vld [vmem:[#allocation3 + $0x3c] sm:$0x1]
        %v4171 = vsel %vm630, %v4112, %v4170
        %4172 = vst [vmem:[#allocation3 + $0x3c] sm:$0x1] %v4171
        %v4173 = vld [vmem:[#allocation3 + $0x48] sm:$0x1]
        %v4174 = vsel %vm630, %v4114, %v4173
        %4175 = vst [vmem:[#allocation3 + $0x48] sm:$0x1] %v4174
        %v4176 = vld [vmem:[#allocation3 + $0x54] sm:$0x1]
        %v4177 = vsel %vm630, %v4116, %v4176
        %4178 = vst [vmem:[#allocation3 + $0x54] sm:$0x1] %v4177
        %v4179 = vld [vmem:[#allocation3 + $0x60] sm:$0x1]
        %v4180 = vsel %vm630, %v4118, %v4179
        %4181 = vst [vmem:[#allocation3 + $0x60] sm:$0x1] %v4180
        %v4182 = vld [vmem:[#allocation3 + $0x6c] sm:$0x1]
        %v4183 = vsel %vm630, %v4120, %v4182
        %4184 = vst [vmem:[#allocation3 + $0x6c] sm:$0x1] %v4183
        %v4185 = vld [vmem:[#allocation3 + $0x78] sm:$0x1]
        %v4186 = vsel %vm630, %v4122, %v4185
        %4187 = vst [vmem:[#allocation3 + $0x78] sm:$0x1] %v4186
        %v4188 = vld [vmem:[#allocation3 + $0x84] sm:$0x1]
        %v4189 = vsel %vm630, %v4124, %v4188
        %4190 = vst [vmem:[#allocation3 + $0x84] sm:$0x1] %v4189
        %v4191 = vld [vmem:[#allocation3 + $0x90] sm:$0x1]
        %v4192 = vsel %vm630, %v4126, %v4191
        %4193 = vst [vmem:[#allocation3 + $0x90] sm:$0x1] %v4192
        %v4194 = vld [vmem:[#allocation3 + $0x9c] sm:$0x1]
        %v4195 = vsel %vm630, %v4128, %v4194
        %4196 = vst [vmem:[#allocation3 + $0x9c] sm:$0x1] %v4195
        %v4197 = vld [vmem:[#allocation3 + $0xa8] sm:$0x1]
        %v4198 = vsel %vm630, %v4130, %v4197
        %4199 = vst [vmem:[#allocation3 + $0xa8] sm:$0x1] %v4198
        %v4200 = vld [vmem:[#allocation3 + $0xb4] sm:$0x1]
        %v4201 = vsel %vm630, %v4132, %v4200
        %4202 = vst [vmem:[#allocation3 + $0xb4] sm:$0x1] %v4201
        %v4203 = vld [vmem:[#allocation3 + $0xc0] sm:$0x1]
        %v4204 = vsel %vm630, %v4134, %v4203
        %4205 = vst [vmem:[#allocation3 + $0xc0] sm:$0x1] %v4204
        %v4206 = vld [vmem:[#allocation3 + $0xcc] sm:$0x1]
        %v4207 = vsel %vm630, %v4136, %v4206
        %4208 = vst [vmem:[#allocation3 + $0xcc] sm:$0x1] %v4207
        %v4209 = vld [vmem:[#allocation3 + $0x4] sm:$0x8]
        %v4210 = vld [vmem:[#allocation3 + $0x10] sm:$0x8]
        %v4211 = vld [vmem:[#allocation3 + $0x1c] sm:$0x8]
        %v4212 = vld [vmem:[#allocation3 + $0x28] sm:$0x8]
        %v4213 = vld [vmem:[#allocation3 + $0x34] sm:$0x8]
        %v4214 = vld [vmem:[#allocation3 + $0x40] sm:$0x8]
        %v4215 = vld [vmem:[#allocation3 + $0x4c] sm:$0x8]
        %v4216 = vld [vmem:[#allocation3 + $0x58] sm:$0x8]
        %v4217 = vld [vmem:[#allocation3 + $0x64] sm:$0x8]
        %v4218 = vld [vmem:[#allocation3 + $0x70] sm:$0x8]
        %v4219 = vld [vmem:[#allocation3 + $0x7c] sm:$0x8]
        %v4220 = vld [vmem:[#allocation3 + $0x88] sm:$0x8]
        %v4221 = vld [vmem:[#allocation3 + $0x94] sm:$0x8]
        %v4222 = vld [vmem:[#allocation3 + $0xa0] sm:$0x8]
        %v4223 = vld [vmem:[#allocation3 + $0xac] sm:$0x8]
        %v4224 = vld [vmem:[#allocation3 + $0xb8] sm:$0x8]
        %v4225 = vld [vmem:[#allocation3 + $0xc4] sm:$0x8]
        %v4226 = vld [vmem:[#allocation3 + $0xd0] sm:$0x8]
        %v4245 = vrot.slane %v4209, 7
        %v4246 = vrot.slane %v4245, 4
        %v4247 = vrot.slane %v4210, 7
        %v4248 = vrot.slane %v4247, 4
        %v4249 = vrot.slane %v4211, 7
        %v4250 = vrot.slane %v4249, 4
        %v4251 = vrot.slane %v4212, 7
        %v4252 = vrot.slane %v4251, 4
        %v4253 = vrot.slane %v4213, 7
        %v4254 = vrot.slane %v4253, 4
        %v4255 = vrot.slane %v4214, 7
        %v4256 = vrot.slane %v4255, 4
        %v4257 = vrot.slane %v4215, 7
        %v4258 = vrot.slane %v4257, 4
        %v4259 = vrot.slane %v4216, 7
        %v4260 = vrot.slane %v4259, 4
        %v4261 = vrot.slane %v4217, 7
        %v4262 = vrot.slane %v4261, 4
        %v4263 = vrot.slane %v4218, 7
        %v4264 = vrot.slane %v4263, 4
        %v4265 = vrot.slane %v4219, 7
        %v4266 = vrot.slane %v4265, 4
        %v4267 = vrot.slane %v4220, 7
        %v4268 = vrot.slane %v4267, 4
        %v4269 = vrot.slane %v4221, 7
        %v4270 = vrot.slane %v4269, 4
        %v4271 = vrot.slane %v4222, 7
        %v4272 = vrot.slane %v4271, 4
        %v4273 = vrot.slane %v4223, 7
        %v4274 = vrot.slane %v4273, 4
        %v4275 = vrot.slane %v4224, 7
        %v4276 = vrot.slane %v4275, 4
        %v4277 = vrot.slane %v4225, 7
        %v4278 = vrot.slane %v4277, 4
        %v4279 = vrot.slane %v4226, 7
        %v4280 = vrot.slane %v4279, 4
        %v4299 = vld [vmem:[#allocation3 + $0x8] sm:$0x1]
        %v4300 = vsel %vm988, %v4246, %v4299
        %4301 = vst [vmem:[#allocation3 + $0x8] sm:$0x1] %v4300
        %v4302 = vld [vmem:[#allocation3 + $0x14] sm:$0x1]
        %v4303 = vsel %vm988, %v4248, %v4302
        %4304 = vst [vmem:[#allocation3 + $0x14] sm:$0x1] %v4303
        %v4305 = vld [vmem:[#allocation3 + $0x20] sm:$0x1]
        %v4306 = vsel %vm988, %v4250, %v4305
        %4307 = vst [vmem:[#allocation3 + $0x20] sm:$0x1] %v4306
        %v4308 = vld [vmem:[#allocation3 + $0x2c] sm:$0x1]
        %v4309 = vsel %vm988, %v4252, %v4308
        %4310 = vst [vmem:[#allocation3 + $0x2c] sm:$0x1] %v4309
        %v4311 = vld [vmem:[#allocation3 + $0x38] sm:$0x1]
        %v4312 = vsel %vm988, %v4254, %v4311
        %4313 = vst [vmem:[#allocation3 + $0x38] sm:$0x1] %v4312
        %v4314 = vld [vmem:[#allocation3 + $0x44] sm:$0x1]
        %v4315 = vsel %vm988, %v4256, %v4314
        %4316 = vst [vmem:[#allocation3 + $0x44] sm:$0x1] %v4315
        %v4317 = vld [vmem:[#allocation3 + $0x50] sm:$0x1]
        %v4318 = vsel %vm988, %v4258, %v4317
        %4319 = vst [vmem:[#allocation3 + $0x50] sm:$0x1] %v4318
        %v4320 = vld [vmem:[#allocation3 + $0x5c] sm:$0x1]
        %v4321 = vsel %vm988, %v4260, %v4320
        %4322 = vst [vmem:[#allocation3 + $0x5c] sm:$0x1] %v4321
        %v4323 = vld [vmem:[#allocation3 + $0x68] sm:$0x1]
        %v4324 = vsel %vm988, %v4262, %v4323
        %4325 = vst [vmem:[#allocation3 + $0x68] sm:$0x1] %v4324
        %v4326 = vld [vmem:[#allocation3 + $0x74] sm:$0x1]
        %v4327 = vsel %vm988, %v4264, %v4326
        %4328 = vst [vmem:[#allocation3 + $0x74] sm:$0x1] %v4327
        %v4329 = vld [vmem:[#allocation3 + $0x80] sm:$0x1]
        %v4330 = vsel %vm988, %v4266, %v4329
        %4331 = vst [vmem:[#allocation3 + $0x80] sm:$0x1] %v4330
        %v4332 = vld [vmem:[#allocation3 + $0x8c] sm:$0x1]
        %v4333 = vsel %vm988, %v4268, %v4332
        %4334 = vst [vmem:[#allocation3 + $0x8c] sm:$0x1] %v4333
        %v4335 = vld [vmem:[#allocation3 + $0x98] sm:$0x1]
        %v4336 = vsel %vm988, %v4270, %v4335
        %4337 = vst [vmem:[#allocation3 + $0x98] sm:$0x1] %v4336
        %v4338 = vld [vmem:[#allocation3 + $0xa4] sm:$0x1]
        %v4339 = vsel %vm988, %v4272, %v4338
        %4340 = vst [vmem:[#allocation3 + $0xa4] sm:$0x1] %v4339
        %v4341 = vld [vmem:[#allocation3 + $0xb0] sm:$0x1]
        %v4342 = vsel %vm988, %v4274, %v4341
        %4343 = vst [vmem:[#allocation3 + $0xb0] sm:$0x1] %v4342
        %v4344 = vld [vmem:[#allocation3 + $0xbc] sm:$0x1]
        %v4345 = vsel %vm988, %v4276, %v4344
        %4346 = vst [vmem:[#allocation3 + $0xbc] sm:$0x1] %v4345
        %v4347 = vld [vmem:[#allocation3 + $0xc8] sm:$0x1]
        %v4348 = vsel %vm988, %v4278, %v4347
        %4349 = vst [vmem:[#allocation3 + $0xc8] sm:$0x1] %v4348
        %v4350 = vld [vmem:[#allocation3 + $0xd4] sm:$0x1]
        %v4351 = vsel %vm988, %v4280, %v4350
        %4352 = vst [vmem:[#allocation3 + $0xd4] sm:$0x1] %v4351
        %v4353 = vld [vmem:[#allocation3] sm:$0xf]
        %v4354 = vld [vmem:[#allocation3 + $0x4] sm:$0xf]
        %v4355 = vld [vmem:[#allocation3 + $0x8] sm:$0x1]
        %v4356 = vld [vmem:[#allocation3 + $0xc] sm:$0xf]
        %v4357 = vld [vmem:[#allocation3 + $0x10] sm:$0xf]
        %v4358 = vld [vmem:[#allocation3 + $0x14] sm:$0x1]
        %v4359 = vld [vmem:[#allocation3 + $0x18] sm:$0xf]
        %v4360 = vld [vmem:[#allocation3 + $0x1c] sm:$0xf]
        %v4361 = vld [vmem:[#allocation3 + $0x20] sm:$0x1]
        %v4362 = vld [vmem:[#allocation3 + $0x24] sm:$0xf]
        %v4363 = vld [vmem:[#allocation3 + $0x28] sm:$0xf]
        %v4364 = vld [vmem:[#allocation3 + $0x2c] sm:$0x1]
        %v4365 = vld [vmem:[#allocation3 + $0x30] sm:$0xf]
        %v4366 = vld [vmem:[#allocation3 + $0x34] sm:$0xf]
        %v4367 = vld [vmem:[#allocation3 + $0x38] sm:$0x1]
        %v4368 = vld [vmem:[#allocation3 + $0x3c] sm:$0xf]
        %v4369 = vld [vmem:[#allocation3 + $0x40] sm:$0xf]
        %v4370 = vld [vmem:[#allocation3 + $0x44] sm:$0x1]
        %v4371 = vld [vmem:[#allocation3 + $0x48] sm:$0xf]
        %v4372 = vld [vmem:[#allocation3 + $0x4c] sm:$0xf]
        %v4373 = vld [vmem:[#allocation3 + $0x50] sm:$0x1]
        %v4374 = vld [vmem:[#allocation3 + $0x54] sm:$0xf]
        %v4375 = vld [vmem:[#allocation3 + $0x58] sm:$0xf]
        %v4376 = vld [vmem:[#allocation3 + $0x5c] sm:$0x1]
        %v4377 = vld [vmem:[#allocation3 + $0x60] sm:$0xf]
        %v4378 = vld [vmem:[#allocation3 + $0x64] sm:$0xf]
        %v4379 = vld [vmem:[#allocation3 + $0x68] sm:$0x1]
        %v4380 = vld [vmem:[#allocation3 + $0x6c] sm:$0xf]
        %v4381 = vld [vmem:[#allocation3 + $0x70] sm:$0xf]
        %v4382 = vld [vmem:[#allocation3 + $0x74] sm:$0x1]
        %v4383 = vld [vmem:[#allocation3 + $0x78] sm:$0xf]
        %v4384 = vld [vmem:[#allocation3 + $0x7c] sm:$0xf]
        %v4385 = vld [vmem:[#allocation3 + $0x80] sm:$0x1]
        %v4386 = vld [vmem:[#allocation3 + $0x84] sm:$0xf]
        %v4387 = vld [vmem:[#allocation3 + $0x88] sm:$0xf]
        %v4388 = vld [vmem:[#allocation3 + $0x8c] sm:$0x1]
        %v4389 = vld [vmem:[#allocation3 + $0x90] sm:$0xf]
        %v4390 = vld [vmem:[#allocation3 + $0x94] sm:$0xf]
        %v4391 = vld [vmem:[#allocation3 + $0x98] sm:$0x1]
        %v4392 = vld [vmem:[#allocation3 + $0x9c] sm:$0xf]
        %v4393 = vld [vmem:[#allocation3 + $0xa0] sm:$0xf]
        %v4394 = vld [vmem:[#allocation3 + $0xa4] sm:$0x1]
        %v4395 = vld [vmem:[#allocation3 + $0xa8] sm:$0xf]
        %v4396 = vld [vmem:[#allocation3 + $0xac] sm:$0xf]
        %v4397 = vld [vmem:[#allocation3 + $0xb0] sm:$0x1]
        %v4398 = vld [vmem:[#allocation3 + $0xb4] sm:$0xf]
        %v4399 = vld [vmem:[#allocation3 + $0xb8] sm:$0xf]
        %v4400 = vld [vmem:[#allocation3 + $0xbc] sm:$0x1]
        %v4401 = vld [vmem:[#allocation3 + $0xc0] sm:$0xf]
        %v4402 = vld [vmem:[#allocation3 + $0xc4] sm:$0xf]
        %v4403 = vld [vmem:[#allocation3 + $0xc8] sm:$0x1]
        %v4404 = vld [vmem:[#allocation3 + $0xcc] sm:$0xf]
        %v4405 = vld [vmem:[#allocation3 + $0xd0] sm:$0xf]
        %v4406 = vld [vmem:[#allocation3 + $0xd4] sm:$0x1]
        %v4408 = vshrl.u32 %v4353, 16
        %v4410 = vrot.slane %v4408, 4
        %v4411 = vshll.u32 %v4353, 16
        %v4413 = vrot.slane %v4411, 5
        %v4414 = vor.u32 %v4410, %v4413
        %v4415 = vrot.slane %v4414, 4
        %v4417 = vshll.u32 %v4354, 16
        %v4419 = vrot.slane %v4417, 5
        %v4420 = vsel %vm1099, %v4415, %v4419
        %v4421 = vshrl.u32 %v4354, 16
        %v4423 = vrot.slane %v4421, 4
        %v4424 = vor.u32 %v4423, %v4419
        %v4425 = vrot.slane %v4424, 4
        %v4427 = vshll.u32 %v4355, 16
        %v4429 = vrot.slane %v4427, 5
        %v4430 = vsel %vm1099, %v4425, %v4429
        %v4432 = vshrl.u32 %v4356, 16
        %v4434 = vrot.slane %v4432, 4
        %v4435 = vshll.u32 %v4356, 16
        %v4437 = vrot.slane %v4435, 5
        %v4438 = vor.u32 %v4434, %v4437
        %v4439 = vrot.slane %v4438, 4
        %v4441 = vshll.u32 %v4357, 16
        %v4443 = vrot.slane %v4441, 5
        %v4444 = vsel %vm1099, %v4439, %v4443
        %v4445 = vshrl.u32 %v4357, 16
        %v4447 = vrot.slane %v4445, 4
        %v4448 = vor.u32 %v4447, %v4443
        %v4449 = vrot.slane %v4448, 4
        %v4451 = vshll.u32 %v4358, 16
        %v4453 = vrot.slane %v4451, 5
        %v4454 = vsel %vm1099, %v4449, %v4453
        %v4456 = vshrl.u32 %v4359, 16
        %v4458 = vrot.slane %v4456, 4
        %v4459 = vshll.u32 %v4359, 16
        %v4461 = vrot.slane %v4459, 5
        %v4462 = vor.u32 %v4458, %v4461
        %v4463 = vrot.slane %v4462, 4
        %v4465 = vshll.u32 %v4360, 16
        %v4467 = vrot.slane %v4465, 5
        %v4468 = vsel %vm1099, %v4463, %v4467
        %v4469 = vshrl.u32 %v4360, 16
        %v4471 = vrot.slane %v4469, 4
        %v4472 = vor.u32 %v4471, %v4467
        %v4473 = vrot.slane %v4472, 4
        %v4475 = vshll.u32 %v4361, 16
        %v4477 = vrot.slane %v4475, 5
        %v4478 = vsel %vm1099, %v4473, %v4477
        %v4480 = vshrl.u32 %v4362, 16
        %v4482 = vrot.slane %v4480, 4
        %v4483 = vshll.u32 %v4362, 16
        %v4485 = vrot.slane %v4483, 5
        %v4486 = vor.u32 %v4482, %v4485
        %v4487 = vrot.slane %v4486, 4
        %v4489 = vshll.u32 %v4363, 16
        %v4491 = vrot.slane %v4489, 5
        %v4492 = vsel %vm1099, %v4487, %v4491
        %v4493 = vshrl.u32 %v4363, 16
        %v4495 = vrot.slane %v4493, 4
        %v4496 = vor.u32 %v4495, %v4491
        %v4497 = vrot.slane %v4496, 4
        %v4499 = vshll.u32 %v4364, 16
        %v4501 = vrot.slane %v4499, 5
        %v4502 = vsel %vm1099, %v4497, %v4501
        %v4504 = vshrl.u32 %v4365, 16
        %v4506 = vrot.slane %v4504, 4
        %v4507 = vshll.u32 %v4365, 16
        %v4509 = vrot.slane %v4507, 5
        %v4510 = vor.u32 %v4506, %v4509
        %v4511 = vrot.slane %v4510, 4
        %v4513 = vshll.u32 %v4366, 16
        %v4515 = vrot.slane %v4513, 5
        %v4516 = vsel %vm1099, %v4511, %v4515
        %v4517 = vshrl.u32 %v4366, 16
        %v4519 = vrot.slane %v4517, 4
        %v4520 = vor.u32 %v4519, %v4515
        %v4521 = vrot.slane %v4520, 4
        %v4523 = vshll.u32 %v4367, 16
        %v4525 = vrot.slane %v4523, 5
        %v4526 = vsel %vm1099, %v4521, %v4525
        %v4528 = vshrl.u32 %v4368, 16
        %v4530 = vrot.slane %v4528, 4
        %v4531 = vshll.u32 %v4368, 16
        %v4533 = vrot.slane %v4531, 5
        %v4534 = vor.u32 %v4530, %v4533
        %v4535 = vrot.slane %v4534, 4
        %v4537 = vshll.u32 %v4369, 16
        %v4539 = vrot.slane %v4537, 5
        %v4540 = vsel %vm1099, %v4535, %v4539
        %v4541 = vshrl.u32 %v4369, 16
        %v4543 = vrot.slane %v4541, 4
        %v4544 = vor.u32 %v4543, %v4539
        %v4545 = vrot.slane %v4544, 4
        %v4547 = vshll.u32 %v4370, 16
        %v4549 = vrot.slane %v4547, 5
        %v4550 = vsel %vm1099, %v4545, %v4549
        %v4552 = vshrl.u32 %v4371, 16
        %v4554 = vrot.slane %v4552, 4
        %v4555 = vshll.u32 %v4371, 16
        %v4557 = vrot.slane %v4555, 5
        %v4558 = vor.u32 %v4554, %v4557
        %v4559 = vrot.slane %v4558, 4
        %v4561 = vshll.u32 %v4372, 16
        %v4563 = vrot.slane %v4561, 5
        %v4564 = vsel %vm1099, %v4559, %v4563
        %v4565 = vshrl.u32 %v4372, 16
        %v4567 = vrot.slane %v4565, 4
        %v4568 = vor.u32 %v4567, %v4563
        %v4569 = vrot.slane %v4568, 4
        %v4571 = vshll.u32 %v4373, 16
        %v4573 = vrot.slane %v4571, 5
        %v4574 = vsel %vm1099, %v4569, %v4573
        %v4576 = vshrl.u32 %v4374, 16
        %v4578 = vrot.slane %v4576, 4
        %v4579 = vshll.u32 %v4374, 16
        %v4581 = vrot.slane %v4579, 5
        %v4582 = vor.u32 %v4578, %v4581
        %v4583 = vrot.slane %v4582, 4
        %v4585 = vshll.u32 %v4375, 16
        %v4587 = vrot.slane %v4585, 5
        %v4588 = vsel %vm1099, %v4583, %v4587
        %v4589 = vshrl.u32 %v4375, 16
        %v4591 = vrot.slane %v4589, 4
        %v4592 = vor.u32 %v4591, %v4587
        %v4593 = vrot.slane %v4592, 4
        %v4595 = vshll.u32 %v4376, 16
        %v4597 = vrot.slane %v4595, 5
        %v4598 = vsel %vm1099, %v4593, %v4597
        %v4600 = vshrl.u32 %v4377, 16
        %v4602 = vrot.slane %v4600, 4
        %v4603 = vshll.u32 %v4377, 16
        %v4605 = vrot.slane %v4603, 5
        %v4606 = vor.u32 %v4602, %v4605
        %v4607 = vrot.slane %v4606, 4
        %v4609 = vshll.u32 %v4378, 16
        %v4611 = vrot.slane %v4609, 5
        %v4612 = vsel %vm1099, %v4607, %v4611
        %v4613 = vshrl.u32 %v4378, 16
        %v4615 = vrot.slane %v4613, 4
        %v4616 = vor.u32 %v4615, %v4611
        %v4617 = vrot.slane %v4616, 4
        %v4619 = vshll.u32 %v4379, 16
        %v4621 = vrot.slane %v4619, 5
        %v4622 = vsel %vm1099, %v4617, %v4621
        %v4624 = vshrl.u32 %v4380, 16
        %v4626 = vrot.slane %v4624, 4
        %v4627 = vshll.u32 %v4380, 16
        %v4629 = vrot.slane %v4627, 5
        %v4630 = vor.u32 %v4626, %v4629
        %v4631 = vrot.slane %v4630, 4
        %v4633 = vshll.u32 %v4381, 16
        %v4635 = vrot.slane %v4633, 5
        %v4636 = vsel %vm1099, %v4631, %v4635
        %v4637 = vshrl.u32 %v4381, 16
        %v4639 = vrot.slane %v4637, 4
        %v4640 = vor.u32 %v4639, %v4635
        %v4641 = vrot.slane %v4640, 4
        %v4643 = vshll.u32 %v4382, 16
        %v4645 = vrot.slane %v4643, 5
        %v4646 = vsel %vm1099, %v4641, %v4645
        %v4648 = vshrl.u32 %v4383, 16
        %v4650 = vrot.slane %v4648, 4
        %v4651 = vshll.u32 %v4383, 16
        %v4653 = vrot.slane %v4651, 5
        %v4654 = vor.u32 %v4650, %v4653
        %v4655 = vrot.slane %v4654, 4
        %v4657 = vshll.u32 %v4384, 16
        %v4659 = vrot.slane %v4657, 5
        %v4660 = vsel %vm1099, %v4655, %v4659
        %v4661 = vshrl.u32 %v4384, 16
        %v4663 = vrot.slane %v4661, 4
        %v4664 = vor.u32 %v4663, %v4659
        %v4665 = vrot.slane %v4664, 4
        %v4667 = vshll.u32 %v4385, 16
        %v4669 = vrot.slane %v4667, 5
        %v4670 = vsel %vm1099, %v4665, %v4669
        %v4672 = vshrl.u32 %v4386, 16
        %v4674 = vrot.slane %v4672, 4
        %v4675 = vshll.u32 %v4386, 16
        %v4677 = vrot.slane %v4675, 5
        %v4678 = vor.u32 %v4674, %v4677
        %v4679 = vrot.slane %v4678, 4
        %v4681 = vshll.u32 %v4387, 16
        %v4683 = vrot.slane %v4681, 5
        %v4684 = vsel %vm1099, %v4679, %v4683
        %v4685 = vshrl.u32 %v4387, 16
        %v4687 = vrot.slane %v4685, 4
        %v4688 = vor.u32 %v4687, %v4683
        %v4689 = vrot.slane %v4688, 4
        %v4691 = vshll.u32 %v4388, 16
        %v4693 = vrot.slane %v4691, 5
        %v4694 = vsel %vm1099, %v4689, %v4693
        %v4696 = vshrl.u32 %v4389, 16
        %v4698 = vrot.slane %v4696, 4
        %v4699 = vshll.u32 %v4389, 16
        %v4701 = vrot.slane %v4699, 5
        %v4702 = vor.u32 %v4698, %v4701
        %v4703 = vrot.slane %v4702, 4
        %v4705 = vshll.u32 %v4390, 16
        %v4707 = vrot.slane %v4705, 5
        %v4708 = vsel %vm1099, %v4703, %v4707
        %v4709 = vshrl.u32 %v4390, 16
        %v4711 = vrot.slane %v4709, 4
        %v4712 = vor.u32 %v4711, %v4707
        %v4713 = vrot.slane %v4712, 4
        %v4715 = vshll.u32 %v4391, 16
        %v4717 = vrot.slane %v4715, 5
        %v4718 = vsel %vm1099, %v4713, %v4717
        %v4720 = vshrl.u32 %v4392, 16
        %v4722 = vrot.slane %v4720, 4
        %v4723 = vshll.u32 %v4392, 16
        %v4725 = vrot.slane %v4723, 5
        %v4726 = vor.u32 %v4722, %v4725
        %v4727 = vrot.slane %v4726, 4
        %v4729 = vshll.u32 %v4393, 16
        %v4731 = vrot.slane %v4729, 5
        %v4732 = vsel %vm1099, %v4727, %v4731
        %v4733 = vshrl.u32 %v4393, 16
        %v4735 = vrot.slane %v4733, 4
        %v4736 = vor.u32 %v4735, %v4731
        %v4737 = vrot.slane %v4736, 4
        %v4739 = vshll.u32 %v4394, 16
        %v4741 = vrot.slane %v4739, 5
        %v4742 = vsel %vm1099, %v4737, %v4741
        %v4744 = vshrl.u32 %v4395, 16
        %v4746 = vrot.slane %v4744, 4
        %v4747 = vshll.u32 %v4395, 16
        %v4749 = vrot.slane %v4747, 5
        %v4750 = vor.u32 %v4746, %v4749
        %v4751 = vrot.slane %v4750, 4
        %v4753 = vshll.u32 %v4396, 16
        %v4755 = vrot.slane %v4753, 5
        %v4756 = vsel %vm1099, %v4751, %v4755
        %v4757 = vshrl.u32 %v4396, 16
        %v4759 = vrot.slane %v4757, 4
        %v4760 = vor.u32 %v4759, %v4755
        %v4761 = vrot.slane %v4760, 4
        %v4763 = vshll.u32 %v4397, 16
        %v4765 = vrot.slane %v4763, 5
        %v4766 = vsel %vm1099, %v4761, %v4765
        %v4768 = vshrl.u32 %v4398, 16
        %v4770 = vrot.slane %v4768, 4
        %v4771 = vshll.u32 %v4398, 16
        %v4773 = vrot.slane %v4771, 5
        %v4774 = vor.u32 %v4770, %v4773
        %v4775 = vrot.slane %v4774, 4
        %v4777 = vshll.u32 %v4399, 16
        %v4779 = vrot.slane %v4777, 5
        %v4780 = vsel %vm1099, %v4775, %v4779
        %v4781 = vshrl.u32 %v4399, 16
        %v4783 = vrot.slane %v4781, 4
        %v4784 = vor.u32 %v4783, %v4779
        %v4785 = vrot.slane %v4784, 4
        %v4787 = vshll.u32 %v4400, 16
        %v4789 = vrot.slane %v4787, 5
        %v4790 = vsel %vm1099, %v4785, %v4789
        %v4839 = vrot.slane %v4353, 5
        %v4840 = vrot.slane %v4839, 4
        %v4841 = vrot.slane %v4354, 5
        %v4842 = vsel %vm1534, %v4840, %v4841
        %v4843 = vrot.slane %v4841, 4
        %v4844 = vrot.slane %v4355, 5
        %v4845 = vsel %vm1534, %v4843, %v4844
        %v4846 = vrot.slane %v4356, 5
        %v4847 = vrot.slane %v4846, 4
        %v4848 = vrot.slane %v4357, 5
        %v4849 = vsel %vm1534, %v4847, %v4848
        %v4850 = vrot.slane %v4848, 4
        %v4851 = vrot.slane %v4358, 5
        %v4852 = vsel %vm1534, %v4850, %v4851
        %v4853 = vrot.slane %v4359, 5
        %v4854 = vrot.slane %v4853, 4
        %v4855 = vrot.slane %v4360, 5
        %v4856 = vsel %vm1534, %v4854, %v4855
        %v4857 = vrot.slane %v4855, 4
        %v4858 = vrot.slane %v4361, 5
        %v4859 = vsel %vm1534, %v4857, %v4858
        %v4860 = vrot.slane %v4362, 5
        %v4861 = vrot.slane %v4860, 4
        %v4862 = vrot.slane %v4363, 5
        %v4863 = vsel %vm1534, %v4861, %v4862
        %v4864 = vrot.slane %v4862, 4
        %v4865 = vrot.slane %v4364, 5
        %v4866 = vsel %vm1534, %v4864, %v4865
        %v4867 = vrot.slane %v4365, 5
        %v4868 = vrot.slane %v4867, 4
        %v4869 = vrot.slane %v4366, 5
        %v4870 = vsel %vm1534, %v4868, %v4869
        %v4871 = vrot.slane %v4869, 4
        %v4872 = vrot.slane %v4367, 5
        %v4873 = vsel %vm1534, %v4871, %v4872
        %v4874 = vrot.slane %v4368, 5
        %v4875 = vrot.slane %v4874, 4
        %v4876 = vrot.slane %v4369, 5
        %v4877 = vsel %vm1534, %v4875, %v4876
        %v4878 = vrot.slane %v4876, 4
        %v4879 = vrot.slane %v4370, 5
        %v4880 = vsel %vm1534, %v4878, %v4879
        %v4881 = vrot.slane %v4371, 5
        %v4882 = vrot.slane %v4881, 4
        %v4883 = vrot.slane %v4372, 5
        %v4884 = vsel %vm1534, %v4882, %v4883
        %v4885 = vrot.slane %v4883, 4
        %v4886 = vrot.slane %v4373, 5
        %v4887 = vsel %vm1534, %v4885, %v4886
        %v4888 = vrot.slane %v4374, 5
        %v4889 = vrot.slane %v4888, 4
        %v4890 = vrot.slane %v4375, 5
        %v4891 = vsel %vm1534, %v4889, %v4890
        %v4892 = vrot.slane %v4890, 4
        %v4893 = vrot.slane %v4376, 5
        %v4894 = vsel %vm1534, %v4892, %v4893
        %v4895 = vrot.slane %v4377, 5
        %v4896 = vrot.slane %v4895, 4
        %v4897 = vrot.slane %v4378, 5
        %v4898 = vsel %vm1534, %v4896, %v4897
        %v4899 = vrot.slane %v4897, 4
        %v4900 = vrot.slane %v4379, 5
        %v4901 = vsel %vm1534, %v4899, %v4900
        %v4902 = vrot.slane %v4380, 5
        %v4903 = vrot.slane %v4902, 4
        %v4904 = vrot.slane %v4381, 5
        %v4905 = vsel %vm1534, %v4903, %v4904
        %v4906 = vrot.slane %v4904, 4
        %v4907 = vrot.slane %v4382, 5
        %v4908 = vsel %vm1534, %v4906, %v4907
        %v4909 = vrot.slane %v4383, 5
        %v4910 = vrot.slane %v4909, 4
        %v4911 = vrot.slane %v4384, 5
        %v4912 = vsel %vm1534, %v4910, %v4911
        %v4913 = vrot.slane %v4911, 4
        %v4914 = vrot.slane %v4385, 5
        %v4915 = vsel %vm1534, %v4913, %v4914
        %v4916 = vrot.slane %v4386, 5
        %v4917 = vrot.slane %v4916, 4
        %v4918 = vrot.slane %v4387, 5
        %v4919 = vsel %vm1534, %v4917, %v4918
        %v4920 = vrot.slane %v4918, 4
        %v4921 = vrot.slane %v4388, 5
        %v4922 = vsel %vm1534, %v4920, %v4921
        %v4923 = vrot.slane %v4389, 5
        %v4924 = vrot.slane %v4923, 4
        %v4925 = vrot.slane %v4390, 5
        %v4926 = vsel %vm1534, %v4924, %v4925
        %v4927 = vrot.slane %v4925, 4
        %v4928 = vrot.slane %v4391, 5
        %v4929 = vsel %vm1534, %v4927, %v4928
        %v4930 = vrot.slane %v4392, 5
        %v4931 = vrot.slane %v4930, 4
        %v4932 = vrot.slane %v4393, 5
        %v4933 = vsel %vm1534, %v4931, %v4932
        %v4934 = vrot.slane %v4932, 4
        %v4935 = vrot.slane %v4394, 5
        %v4936 = vsel %vm1534, %v4934, %v4935
        %v4937 = vrot.slane %v4395, 5
        %v4938 = vrot.slane %v4937, 4
        %v4939 = vrot.slane %v4396, 5
        %v4940 = vsel %vm1534, %v4938, %v4939
        %v4941 = vrot.slane %v4939, 4
        %v4942 = vrot.slane %v4397, 5
        %v4943 = vsel %vm1534, %v4941, %v4942
        %v4944 = vrot.slane %v4398, 5
        %v4945 = vrot.slane %v4944, 4
        %v4946 = vrot.slane %v4399, 5
        %v4947 = vsel %vm1534, %v4945, %v4946
        %v4948 = vrot.slane %v4946, 4
        %v4949 = vrot.slane %v4400, 5
        %v4950 = vsel %vm1534, %v4948, %v4949
        %v4952 = vshrl.u32 %v4401, 16
        %v4954 = vrot.slane %v4952, 4
        %v4955 = vshll.u32 %v4401, 16
        %v4957 = vrot.slane %v4955, 5
        %v4958 = vor.u32 %v4954, %v4957
        %v4959 = vrot.slane %v4958, 4
        %v4961 = vshll.u32 %v4402, 16
        %v4963 = vrot.slane %v4961, 5
        %v4964 = vsel %vm1099, %v4959, %v4963
        %v4965 = vshrl.u32 %v4402, 16
        %v4967 = vrot.slane %v4965, 4
        %v4968 = vor.u32 %v4967, %v4963
        %v4969 = vrot.slane %v4968, 4
        %v4971 = vshll.u32 %v4403, 16
        %v4973 = vrot.slane %v4971, 5
        %v4974 = vsel %vm1099, %v4969, %v4973
        %v4978 = vrot.slane %v4401, 5
        %v4979 = vrot.slane %v4978, 4
        %v4980 = vrot.slane %v4402, 5
        %v4981 = vsel %vm1534, %v4979, %v4980
        %v4982 = vrot.slane %v4980, 4
        %v4983 = vrot.slane %v4403, 5
        %v4984 = vsel %vm1534, %v4982, %v4983
        %v4986 = vshrl.u32 %v4404, 16
        %v4988 = vrot.slane %v4986, 4
        %v4989 = vshll.u32 %v4404, 16
        %v4991 = vrot.slane %v4989, 5
        %v4992 = vor.u32 %v4988, %v4991
        %v4993 = vrot.slane %v4992, 4
        %v4995 = vshll.u32 %v4405, 16
        %v4997 = vrot.slane %v4995, 5
        %v4998 = vsel %vm1099, %v4993, %v4997
        %v4999 = vshrl.u32 %v4405, 16
        %v5001 = vrot.slane %v4999, 4
        %v5002 = vor.u32 %v5001, %v4997
        %v5003 = vrot.slane %v5002, 4
        %v5005 = vshll.u32 %v4406, 16
        %v5007 = vrot.slane %v5005, 5
        %v5008 = vsel %vm1099, %v5003, %v5007
        %v5012 = vrot.slane %v4404, 5
        %v5013 = vrot.slane %v5012, 4
        %v5014 = vrot.slane %v4405, 5
        %v5015 = vsel %vm1534, %v5013, %v5014
        %v5016 = vrot.slane %v5014, 4
        %v5017 = vrot.slane %v4406, 5
        %v5018 = vsel %vm1534, %v5016, %v5017
        %v5019 = vunpack.c.l.b16 %v4353
        %v5020 = vunpack.c.l.b16 %v4354
        %v5021 = vunpack.c.l.b16 %v4356
        %v5022 = vunpack.c.l.b16 %v4357
        %v5023 = vunpack.c.l.b16 %v4359
        %v5024 = vunpack.c.l.b16 %v4360
        %v5025 = vunpack.c.l.b16 %v4362
        %v5026 = vunpack.c.l.b16 %v4363
        %v5027 = vunpack.c.l.b16 %v4365
        %v5028 = vunpack.c.l.b16 %v4366
        %v5029 = vunpack.c.l.b16 %v4368
        %v5030 = vunpack.c.l.b16 %v4369
        %v5031 = vunpack.c.l.b16 %v4371
        %v5032 = vunpack.c.l.b16 %v4372
        %v5033 = vunpack.c.l.b16 %v4374
        %v5034 = vunpack.c.l.b16 %v4375
        %v5035 = vunpack.c.l.b16 %v4377
        %v5036 = vunpack.c.l.b16 %v4378
        %v5037 = vunpack.c.l.b16 %v4380
        %v5038 = vunpack.c.l.b16 %v4381
        %v5039 = vunpack.c.l.b16 %v4383
        %v5040 = vunpack.c.l.b16 %v4384
        %v5041 = vunpack.c.l.b16 %v4386
        %v5042 = vunpack.c.l.b16 %v4387
        %v5043 = vunpack.c.l.b16 %v4389
        %v5044 = vunpack.c.l.b16 %v4390
        %v5045 = vunpack.c.l.b16 %v4392
        %v5046 = vunpack.c.l.b16 %v4393
        %v5047 = vunpack.c.l.b16 %v4395
        %v5048 = vunpack.c.l.b16 %v4396
        %v5049 = vunpack.c.l.b16 %v4398
        %v5050 = vunpack.c.l.b16 %v4399
        %v5051 = vpack.c.b16 %v5020, %v5019
        %v5052 = vpack.c.b16 %v5022, %v5021
        %v5053 = vpack.c.b16 %v5024, %v5023
        %v5054 = vpack.c.b16 %v5026, %v5025
        %v5055 = vpack.c.b16 %v5028, %v5027
        %v5056 = vpack.c.b16 %v5030, %v5029
        %v5057 = vpack.c.b16 %v5032, %v5031
        %v5058 = vpack.c.b16 %v5034, %v5033
        %v5059 = vpack.c.b16 %v5036, %v5035
        %v5060 = vpack.c.b16 %v5038, %v5037
        %v5061 = vpack.c.b16 %v5040, %v5039
        %v5062 = vpack.c.b16 %v5042, %v5041
        %v5063 = vpack.c.b16 %v5044, %v5043
        %v5064 = vpack.c.b16 %v5046, %v5045
        %v5065 = vpack.c.b16 %v5048, %v5047
        %v5066 = vpack.c.b16 %v5050, %v5049
        %v5083 = vunpack.c.l.b16 %v4420
        %v5084 = vunpack.c.l.b16 %v4430
        %v5085 = vunpack.c.l.b16 %v4444
        %v5086 = vunpack.c.l.b16 %v4454
        %v5087 = vunpack.c.l.b16 %v4468
        %v5088 = vunpack.c.l.b16 %v4478
        %v5089 = vunpack.c.l.b16 %v4492
        %v5090 = vunpack.c.l.b16 %v4502
        %v5091 = vunpack.c.l.b16 %v4516
        %v5092 = vunpack.c.l.b16 %v4526
        %v5093 = vunpack.c.l.b16 %v4540
        %v5094 = vunpack.c.l.b16 %v4550
        %v5095 = vunpack.c.l.b16 %v4564
        %v5096 = vunpack.c.l.b16 %v4574
        %v5097 = vunpack.c.l.b16 %v4588
        %v5098 = vunpack.c.l.b16 %v4598
        %v5099 = vunpack.c.l.b16 %v4612
        %v5100 = vunpack.c.l.b16 %v4622
        %v5101 = vunpack.c.l.b16 %v4636
        %v5102 = vunpack.c.l.b16 %v4646
        %v5103 = vunpack.c.l.b16 %v4660
        %v5104 = vunpack.c.l.b16 %v4670
        %v5105 = vunpack.c.l.b16 %v4684
        %v5106 = vunpack.c.l.b16 %v4694
        %v5107 = vunpack.c.l.b16 %v4708
        %v5108 = vunpack.c.l.b16 %v4718
        %v5109 = vunpack.c.l.b16 %v4732
        %v5110 = vunpack.c.l.b16 %v4742
        %v5111 = vunpack.c.l.b16 %v4756
        %v5112 = vunpack.c.l.b16 %v4766
        %v5113 = vunpack.c.l.b16 %v4780
        %v5114 = vunpack.c.l.b16 %v4790
        %v5115 = vpack.c.b16 %v5084, %v5083
        %v5116 = vpack.c.b16 %v5086, %v5085
        %v5117 = vpack.c.b16 %v5088, %v5087
        %v5118 = vpack.c.b16 %v5090, %v5089
        %v5119 = vpack.c.b16 %v5092, %v5091
        %v5120 = vpack.c.b16 %v5094, %v5093
        %v5121 = vpack.c.b16 %v5096, %v5095
        %v5122 = vpack.c.b16 %v5098, %v5097
        %v5123 = vpack.c.b16 %v5100, %v5099
        %v5124 = vpack.c.b16 %v5102, %v5101
        %v5125 = vpack.c.b16 %v5104, %v5103
        %v5126 = vpack.c.b16 %v5106, %v5105
        %v5127 = vpack.c.b16 %v5108, %v5107
        %v5128 = vpack.c.b16 %v5110, %v5109
        %v5129 = vpack.c.b16 %v5112, %v5111
        %v5130 = vpack.c.b16 %v5114, %v5113
        %v5147 = vunpack.c.l.b16 %v4842
        %v5148 = vunpack.c.l.b16 %v4845
        %v5149 = vunpack.c.l.b16 %v4849
        %v5150 = vunpack.c.l.b16 %v4852
        %v5151 = vunpack.c.l.b16 %v4856
        %v5152 = vunpack.c.l.b16 %v4859
        %v5153 = vunpack.c.l.b16 %v4863
        %v5154 = vunpack.c.l.b16 %v4866
        %v5155 = vunpack.c.l.b16 %v4870
        %v5156 = vunpack.c.l.b16 %v4873
        %v5157 = vunpack.c.l.b16 %v4877
        %v5158 = vunpack.c.l.b16 %v4880
        %v5159 = vunpack.c.l.b16 %v4884
        %v5160 = vunpack.c.l.b16 %v4887
        %v5161 = vunpack.c.l.b16 %v4891
        %v5162 = vunpack.c.l.b16 %v4894
        %v5163 = vunpack.c.l.b16 %v4898
        %v5164 = vunpack.c.l.b16 %v4901
        %v5165 = vunpack.c.l.b16 %v4905
        %v5166 = vunpack.c.l.b16 %v4908
        %v5167 = vunpack.c.l.b16 %v4912
        %v5168 = vunpack.c.l.b16 %v4915
        %v5169 = vunpack.c.l.b16 %v4919
        %v5170 = vunpack.c.l.b16 %v4922
        %v5171 = vunpack.c.l.b16 %v4926
        %v5172 = vunpack.c.l.b16 %v4929
        %v5173 = vunpack.c.l.b16 %v4933
        %v5174 = vunpack.c.l.b16 %v4936
        %v5175 = vunpack.c.l.b16 %v4940
        %v5176 = vunpack.c.l.b16 %v4943
        %v5177 = vunpack.c.l.b16 %v4947
        %v5178 = vunpack.c.l.b16 %v4950
        %v5179 = vpack.c.b16 %v5148, %v5147
        %v5180 = vpack.c.b16 %v5150, %v5149
        %v5181 = vpack.c.b16 %v5152, %v5151
        %v5182 = vpack.c.b16 %v5154, %v5153
        %v5183 = vpack.c.b16 %v5156, %v5155
        %v5184 = vpack.c.b16 %v5158, %v5157
        %v5185 = vpack.c.b16 %v5160, %v5159
        %v5186 = vpack.c.b16 %v5162, %v5161
        %v5187 = vpack.c.b16 %v5164, %v5163
        %v5188 = vpack.c.b16 %v5166, %v5165
        %v5189 = vpack.c.b16 %v5168, %v5167
        %v5190 = vpack.c.b16 %v5170, %v5169
        %v5191 = vpack.c.b16 %v5172, %v5171
        %v5192 = vpack.c.b16 %v5174, %v5173
        %v5193 = vpack.c.b16 %v5176, %v5175
        %v5194 = vpack.c.b16 %v5178, %v5177
        %v5211 = vunpack.c.l.b16 %v4401
        %v5212 = vunpack.c.l.b16 %v4402
        %v5213 = vpack.c.b16 %v5212, %v5211
        %v5215 = vunpack.c.l.b16 %v4964
        %v5216 = vunpack.c.l.b16 %v4974
        %v5217 = vpack.c.b16 %v5216, %v5215
        %v5219 = vunpack.c.l.b16 %v4981
        %v5220 = vunpack.c.l.b16 %v4984
        %v5221 = vpack.c.b16 %v5220, %v5219
        %v5223 = vunpack.c.l.b16 %v4404
        %v5224 = vunpack.c.l.b16 %v4405
        %v5225 = vpack.c.b16 %v5224, %v5223
        %v5227 = vunpack.c.l.b16 %v4998
        %v5228 = vunpack.c.l.b16 %v5008
        %v5229 = vpack.c.b16 %v5228, %v5227
        %v5231 = vunpack.c.l.b16 %v5015
        %v5232 = vunpack.c.l.b16 %v5018
        %v5233 = vpack.c.b16 %v5232, %v5231
        %v5235 = vld [vmem:[%s2] sm:$0xf]
        %v5236 = vld [vmem:[%s2 + $0x4] sm:$0xf]
        %v5237 = vld [vmem:[%s2 + $0x8] sm:$0xf]
        %v5238 = vld [vmem:[%s2 + $0xc] sm:$0xf]
        %v5239 = vld [vmem:[%s2 + $0x10] sm:$0xf]
        %v5240 = vld [vmem:[%s2 + $0x14] sm:$0xf]
        %v5241 = vld [vmem:[%s2 + $0x18] sm:$0xf]
        %v5242 = vld [vmem:[%s2 + $0x1c] sm:$0xf]
        %v5243 = vld [vmem:[%s2 + $0x20] sm:$0xf]
        %v5244 = vld [vmem:[%s2 + $0x24] sm:$0xf]
        %v5245 = vld [vmem:[%s2 + $0x28] sm:$0xf]
        %v5246 = vld [vmem:[%s2 + $0x2c] sm:$0xf]
        %v5247 = vld [vmem:[%s2 + $0x30] sm:$0xf]
        %v5248 = vld [vmem:[%s2 + $0x34] sm:$0xf]
        %v5249 = vld [vmem:[%s2 + $0x38] sm:$0xf]
        %v5250 = vld [vmem:[%s2 + $0x3c] sm:$0xf]
        %v5251 = vld [vmem:[%s2 + $0x40] sm:$0xf]
        %v5252 = vld [vmem:[%s2 + $0x44] sm:$0xf]
        %v5253 = vld [vmem:[%s2 + $0x48] sm:$0xf]
        %v5254 = vld [vmem:[%s2 + $0x4c] sm:$0xf]
        %v5255 = vld [vmem:[%s2 + $0x50] sm:$0xf]
        %v5256 = vld [vmem:[%s2 + $0x54] sm:$0xf]
        %v5257 = vld [vmem:[%s2 + $0x58] sm:$0xf]
        %v5258 = vld [vmem:[%s2 + $0x5c] sm:$0xf]
        %v5259 = vld [vmem:[%s2 + $0x60] sm:$0xf]
        %v5260 = vld [vmem:[%s2 + $0x64] sm:$0xf]
        %v5261 = vld [vmem:[%s2 + $0x68] sm:$0xf]
        %v5262 = vld [vmem:[%s2 + $0x6c] sm:$0xf]
        %v5263 = vld [vmem:[%s2 + $0x70] sm:$0xf]
        %v5264 = vld [vmem:[%s2 + $0x74] sm:$0xf]
        %v5265 = vld [vmem:[%s2 + $0x78] sm:$0xf]
        %v5266 = vld [vmem:[%s2 + $0x7c] sm:$0xf]
        %v5267 = vld [vmem:[%s2 + $0x80] sm:$0xf]
        %v5268 = vld [vmem:[%s2 + $0x84] sm:$0xf]
        %v5269 = vld [vmem:[%s2 + $0x88] sm:$0xf]
        %v5270 = vld [vmem:[%s2 + $0x8c] sm:$0xf]
        %v5271 = vld [vmem:[%s2 + $0x90] sm:$0xf]
        %v5272 = vld [vmem:[%s2 + $0x94] sm:$0xf]
        %v5273 = vld [vmem:[%s2 + $0x98] sm:$0xf]
        %v5274 = vld [vmem:[%s2 + $0x9c] sm:$0xf]
        %v5275 = vld [vmem:[%s2 + $0xa0] sm:$0xf]
        %v5276 = vld [vmem:[%s2 + $0xa4] sm:$0xf]
        %v5277 = vld [vmem:[%s2 + $0xa8] sm:$0xf]
        %v5278 = vld [vmem:[%s2 + $0xac] sm:$0xf]
        %v5279 = vld [vmem:[%s2 + $0xb0] sm:$0xf]
        %v5280 = vld [vmem:[%s2 + $0xb4] sm:$0xf]
        %v5281 = vld [vmem:[%s2 + $0xb8] sm:$0xf]
        %v5282 = vld [vmem:[%s2 + $0xbc] sm:$0xf]
        %v5283 = vld [vmem:[%s2 + $0xc0] sm:$0xf]
        %v5284 = vld [vmem:[%s2 + $0xc4] sm:$0xf]
        %v5285 = vld [vmem:[%s2 + $0xc8] sm:$0xf]
        %v5286 = vld [vmem:[%s2 + $0xcc] sm:$0xf]
        %v5287 = vld [vmem:[%s2 + $0xd0] sm:$0xf]
        %v5288 = vld [vmem:[%s2 + $0xd4] sm:$0xf]
        %v5289 = vld [vmem:[%s2 + $0xd8] sm:$0xf]
        %v5290 = vld [vmem:[%s2 + $0xdc] sm:$0xf]
        %v5291 = vld [vmem:[%s2 + $0xe0] sm:$0xf]
        %v5292 = vld [vmem:[%s2 + $0xe4] sm:$0xf]
        %v5293 = vld [vmem:[%s2 + $0xe8] sm:$0xf]
        %v5294 = vld [vmem:[%s2 + $0xec] sm:$0xf]
        %v5295 = vld [vmem:[%s2 + $0xf0] sm:$0xf]
        %v5296 = vld [vmem:[%s2 + $0xf4] sm:$0xf]
        %v5297 = vld [vmem:[%s2 + $0xf8] sm:$0xf]
        %v5298 = vld [vmem:[%s2 + $0xfc] sm:$0xf]
        %v5299 = vld [vmem:[%s2 + $0x100] sm:$0xf]
        %v5300 = vld [vmem:[%s2 + $0x104] sm:$0xf]
        %v5301 = vld [vmem:[%s2 + $0x108] sm:$0xf]
        %v5302 = vld [vmem:[%s2 + $0x10c] sm:$0xf]
        %v5303 = vld [vmem:[%s2 + $0x110] sm:$0xf]
        %v5304 = vld [vmem:[%s2 + $0x114] sm:$0xf]
        %v5305 = vld [vmem:[%s2 + $0x118] sm:$0xf]
        %v5306 = vld [vmem:[%s2 + $0x11c] sm:$0xf]
        %v5307 = vld [vmem:[%s2 + $0x120] sm:$0xf]
        %v5308 = vld [vmem:[%s2 + $0x124] sm:$0xf]
        %v5309 = vld [vmem:[%s2 + $0x128] sm:$0xf]
        %v5310 = vld [vmem:[%s2 + $0x12c] sm:$0xf]
        %v5311 = vld [vmem:[%s2 + $0x130] sm:$0xf]
        %v5312 = vld [vmem:[%s2 + $0x134] sm:$0xf]
        %v5313 = vld [vmem:[%s2 + $0x138] sm:$0xf]
        %v5314 = vld [vmem:[%s2 + $0x13c] sm:$0xf]
        %v5315 = vld [vmem:[%s2 + $0x140] sm:$0xf]
        %v5316 = vld [vmem:[%s2 + $0x144] sm:$0xf]
        %v5317 = vld [vmem:[%s2 + $0x148] sm:$0xf]
        %v5318 = vld [vmem:[%s2 + $0x14c] sm:$0xf]
        %v5319 = vld [vmem:[%s2 + $0x150] sm:$0xf]
        %v5320 = vld [vmem:[%s2 + $0x154] sm:$0xf]
        %v5321 = vld [vmem:[%s2 + $0x158] sm:$0xf]
        %v5322 = vld [vmem:[%s2 + $0x15c] sm:$0xf]
        %v5323 = vld [vmem:[%s2 + $0x160] sm:$0xf]
        %v5324 = vld [vmem:[%s2 + $0x164] sm:$0xf]
        %v5325 = vld [vmem:[%s2 + $0x168] sm:$0xf]
        %v5326 = vld [vmem:[%s2 + $0x16c] sm:$0xf]
        %v5327 = vld [vmem:[%s2 + $0x170] sm:$0xf]
        %v5328 = vld [vmem:[%s2 + $0x174] sm:$0xf]
        %v5329 = vld [vmem:[%s2 + $0x178] sm:$0xf]
        %v5330 = vld [vmem:[%s2 + $0x17c] sm:$0xf]
        %v5331 = vld [vmem:[%s2 + $0x180] sm:$0xf]
        %v5332 = vld [vmem:[%s2 + $0x184] sm:$0xf]
        %v5333 = vld [vmem:[%s2 + $0x188] sm:$0xf]
        %v5334 = vld [vmem:[%s2 + $0x18c] sm:$0xf]
        %v5335 = vld [vmem:[%s2 + $0x190] sm:$0xf]
        %v5336 = vld [vmem:[%s2 + $0x194] sm:$0xf]
        %v5337 = vld [vmem:[%s2 + $0x198] sm:$0xf]
        %v5338 = vld [vmem:[%s2 + $0x19c] sm:$0xf]
        %v5339 = vld [vmem:[%s2 + $0x1a0] sm:$0xf]
        %v5340 = vld [vmem:[%s2 + $0x1a4] sm:$0xf]
        %v5341 = vld [vmem:[%s2 + $0x1a8] sm:$0xf]
        %v5342 = vld [vmem:[%s2 + $0x1ac] sm:$0xf]
        %v5343 = vld [vmem:[%s2 + $0x1b0] sm:$0xf]
        %v5344 = vld [vmem:[%s2 + $0x1b4] sm:$0xf]
        %v5345 = vld [vmem:[%s2 + $0x1b8] sm:$0xf]
        %v5346 = vld [vmem:[%s2 + $0x1bc] sm:$0xf]
        %v5347 = vld [vmem:[%s2 + $0x1c0] sm:$0xf]
        %v5348 = vld [vmem:[%s2 + $0x1c4] sm:$0xf]
        %v5349 = vld [vmem:[%s2 + $0x1c8] sm:$0xf]
        %v5350 = vld [vmem:[%s2 + $0x1cc] sm:$0xf]
        %v5351 = vld [vmem:[%s2 + $0x1d0] sm:$0xf]
        %v5352 = vld [vmem:[%s2 + $0x1d4] sm:$0xf]
        %v5353 = vld [vmem:[%s2 + $0x1d8] sm:$0xf]
        %v5354 = vld [vmem:[%s2 + $0x1dc] sm:$0xf]
        %v5355 = vld [vmem:[%s2 + $0x1e0] sm:$0xf]
        %v5356 = vld [vmem:[%s2 + $0x1e4] sm:$0xf]
        %v5357 = vld [vmem:[%s2 + $0x1e8] sm:$0xf]
        %v5358 = vld [vmem:[%s2 + $0x1ec] sm:$0xf]
        %v5359 = vld [vmem:[%s2 + $0x1f0] sm:$0xf]
        %v5360 = vld [vmem:[%s2 + $0x1f4] sm:$0xf]
        %v5361 = vld [vmem:[%s2 + $0x1f8] sm:$0xf]
        %v5362 = vld [vmem:[%s2 + $0x1fc] sm:$0xf]
        %v5363 = vld [vmem:[%s2 + $0x200] sm:$0xf]
        %v5364 = vld [vmem:[%s2 + $0x204] sm:$0xf]
        %v5365 = vld [vmem:[%s2 + $0x208] sm:$0xf]
        %v5366 = vld [vmem:[%s2 + $0x20c] sm:$0xf]
        %v5367 = vld [vmem:[%s2 + $0x210] sm:$0xf]
        %v5368 = vld [vmem:[%s2 + $0x214] sm:$0xf]
        %v5369 = vld [vmem:[%s2 + $0x218] sm:$0xf]
        %v5370 = vld [vmem:[%s2 + $0x21c] sm:$0xf]
        %v5371 = vld [vmem:[%s2 + $0x220] sm:$0xf]
        %v5372 = vld [vmem:[%s2 + $0x224] sm:$0xf]
        %v5373 = vld [vmem:[%s2 + $0x228] sm:$0xf]
        %v5374 = vld [vmem:[%s2 + $0x22c] sm:$0xf]
        %v5375 = vld [vmem:[%s2 + $0x230] sm:$0xf]
        %v5376 = vld [vmem:[%s2 + $0x234] sm:$0xf]
        %v5377 = vld [vmem:[%s2 + $0x238] sm:$0xf]
        %v5378 = vld [vmem:[%s2 + $0x23c] sm:$0xf]
        %v5523 = vunpack.c.l.b16 %v5235
        %v5524 = vunpack.c.l.b16 %v5236
        %v5525 = vunpack.c.l.b16 %v5237
        %v5526 = vunpack.c.l.b16 %v5238
        %v5527 = vunpack.c.l.b16 %v5239
        %v5528 = vunpack.c.l.b16 %v5240
        %v5529 = vunpack.c.l.b16 %v5241
        %v5530 = vunpack.c.l.b16 %v5242
        %v5531 = vunpack.c.l.b16 %v5243
        %v5532 = vunpack.c.l.b16 %v5244
        %v5533 = vunpack.c.l.b16 %v5245
        %v5534 = vunpack.c.l.b16 %v5246
        %v5535 = vunpack.c.l.b16 %v5247
        %v5536 = vunpack.c.l.b16 %v5248
        %v5537 = vunpack.c.l.b16 %v5249
        %v5538 = vunpack.c.l.b16 %v5250
        %v5539 = vunpack.c.l.b16 %v5251
        %v5540 = vunpack.c.l.b16 %v5252
        %v5541 = vunpack.c.l.b16 %v5253
        %v5542 = vunpack.c.l.b16 %v5254
        %v5543 = vunpack.c.l.b16 %v5255
        %v5544 = vunpack.c.l.b16 %v5256
        %v5545 = vunpack.c.l.b16 %v5257
        %v5546 = vunpack.c.l.b16 %v5258
        %v5547 = vunpack.c.l.b16 %v5259
        %v5548 = vunpack.c.l.b16 %v5260
        %v5549 = vunpack.c.l.b16 %v5261
        %v5550 = vunpack.c.l.b16 %v5262
        %v5551 = vunpack.c.l.b16 %v5263
        %v5552 = vunpack.c.l.b16 %v5264
        %v5553 = vunpack.c.l.b16 %v5265
        %v5554 = vunpack.c.l.b16 %v5266
        %v5555 = vunpack.c.l.b16 %v5267
        %v5556 = vunpack.c.l.b16 %v5268
        %v5557 = vunpack.c.l.b16 %v5269
        %v5558 = vunpack.c.l.b16 %v5270
        %v5559 = vunpack.c.l.b16 %v5271
        %v5560 = vunpack.c.l.b16 %v5272
        %v5561 = vunpack.c.l.b16 %v5273
        %v5562 = vunpack.c.l.b16 %v5274
        %v5563 = vunpack.c.l.b16 %v5275
        %v5564 = vunpack.c.l.b16 %v5276
        %v5565 = vunpack.c.l.b16 %v5277
        %v5566 = vunpack.c.l.b16 %v5278
        %v5567 = vunpack.c.l.b16 %v5279
        %v5568 = vunpack.c.l.b16 %v5280
        %v5569 = vunpack.c.l.b16 %v5281
        %v5570 = vunpack.c.l.b16 %v5282
        %v5571 = vunpack.c.l.b16 %v5283
        %v5572 = vunpack.c.l.b16 %v5284
        %v5573 = vunpack.c.l.b16 %v5285
        %v5574 = vunpack.c.l.b16 %v5286
        %v5575 = vunpack.c.l.b16 %v5287
        %v5576 = vunpack.c.l.b16 %v5288
        %v5577 = vunpack.c.l.b16 %v5289
        %v5578 = vunpack.c.l.b16 %v5290
        %v5579 = vunpack.c.l.b16 %v5291
        %v5580 = vunpack.c.l.b16 %v5292
        %v5581 = vunpack.c.l.b16 %v5293
        %v5582 = vunpack.c.l.b16 %v5294
        %v5583 = vunpack.c.l.b16 %v5295
        %v5584 = vunpack.c.l.b16 %v5296
        %v5585 = vunpack.c.l.b16 %v5297
        %v5586 = vunpack.c.l.b16 %v5298
        %v5587 = vunpack.c.l.b16 %v5299
        %v5588 = vunpack.c.l.b16 %v5300
        %v5589 = vunpack.c.l.b16 %v5301
        %v5590 = vunpack.c.l.b16 %v5302
        %v5591 = vunpack.c.l.b16 %v5303
        %v5592 = vunpack.c.l.b16 %v5304
        %v5593 = vunpack.c.l.b16 %v5305
        %v5594 = vunpack.c.l.b16 %v5306
        %v5595 = vunpack.c.l.b16 %v5307
        %v5596 = vunpack.c.l.b16 %v5308
        %v5597 = vunpack.c.l.b16 %v5309
        %v5598 = vunpack.c.l.b16 %v5310
        %v5599 = vunpack.c.l.b16 %v5311
        %v5600 = vunpack.c.l.b16 %v5312
        %v5601 = vunpack.c.l.b16 %v5313
        %v5602 = vunpack.c.l.b16 %v5314
        %v5603 = vunpack.c.l.b16 %v5315
        %v5604 = vunpack.c.l.b16 %v5316
        %v5605 = vunpack.c.l.b16 %v5317
        %v5606 = vunpack.c.l.b16 %v5318
        %v5607 = vunpack.c.l.b16 %v5319
        %v5608 = vunpack.c.l.b16 %v5320
        %v5609 = vunpack.c.l.b16 %v5321
        %v5610 = vunpack.c.l.b16 %v5322
        %v5611 = vunpack.c.l.b16 %v5323
        %v5612 = vunpack.c.l.b16 %v5324
        %v5613 = vunpack.c.l.b16 %v5325
        %v5614 = vunpack.c.l.b16 %v5326
        %v5615 = vunpack.c.l.b16 %v5327
        %v5616 = vunpack.c.l.b16 %v5328
        %v5617 = vunpack.c.l.b16 %v5329
        %v5618 = vunpack.c.l.b16 %v5330
        %v5619 = vunpack.c.l.b16 %v5331
        %v5620 = vunpack.c.l.b16 %v5332
        %v5621 = vunpack.c.l.b16 %v5333
        %v5622 = vunpack.c.l.b16 %v5334
        %v5623 = vunpack.c.l.b16 %v5335
        %v5624 = vunpack.c.l.b16 %v5336
        %v5625 = vunpack.c.l.b16 %v5337
        %v5626 = vunpack.c.l.b16 %v5338
        %v5627 = vunpack.c.l.b16 %v5339
        %v5628 = vunpack.c.l.b16 %v5340
        %v5629 = vunpack.c.l.b16 %v5341
        %v5630 = vunpack.c.l.b16 %v5342
        %v5631 = vunpack.c.l.b16 %v5343
        %v5632 = vunpack.c.l.b16 %v5344
        %v5633 = vunpack.c.l.b16 %v5345
        %v5634 = vunpack.c.l.b16 %v5346
        %v5635 = vunpack.c.l.b16 %v5347
        %v5636 = vunpack.c.l.b16 %v5348
        %v5637 = vunpack.c.l.b16 %v5349
        %v5638 = vunpack.c.l.b16 %v5350
        %v5639 = vunpack.c.l.b16 %v5351
        %v5640 = vunpack.c.l.b16 %v5352
        %v5641 = vunpack.c.l.b16 %v5353
        %v5642 = vunpack.c.l.b16 %v5354
        %v5643 = vunpack.c.l.b16 %v5355
        %v5644 = vunpack.c.l.b16 %v5356
        %v5645 = vunpack.c.l.b16 %v5357
        %v5646 = vunpack.c.l.b16 %v5358
        %v5647 = vunpack.c.l.b16 %v5359
        %v5648 = vunpack.c.l.b16 %v5360
        %v5649 = vunpack.c.l.b16 %v5361
        %v5650 = vunpack.c.l.b16 %v5362
        %v5651 = vunpack.c.l.b16 %v5363
        %v5652 = vunpack.c.l.b16 %v5364
        %v5653 = vunpack.c.l.b16 %v5365
        %v5654 = vunpack.c.l.b16 %v5366
        %v5655 = vunpack.c.l.b16 %v5367
        %v5656 = vunpack.c.l.b16 %v5368
        %v5657 = vunpack.c.l.b16 %v5369
        %v5658 = vunpack.c.l.b16 %v5370
        %v5659 = vunpack.c.l.b16 %v5371
        %v5660 = vunpack.c.l.b16 %v5372
        %v5661 = vunpack.c.l.b16 %v5373
        %v5662 = vunpack.c.l.b16 %v5374
        %v5663 = vunpack.c.l.b16 %v5375
        %v5664 = vunpack.c.l.b16 %v5376
        %v5665 = vunpack.c.l.b16 %v5377
        %v5666 = vunpack.c.l.b16 %v5378
        %v5667 = vpack.c.b16 %v5524, %v5523
        %v5668 = vpack.c.b16 %v5526, %v5525
        %v5669 = vpack.c.b16 %v5528, %v5527
        %v5670 = vpack.c.b16 %v5530, %v5529
        %v5671 = vpack.c.b16 %v5532, %v5531
        %v5672 = vpack.c.b16 %v5534, %v5533
        %v5673 = vpack.c.b16 %v5536, %v5535
        %v5674 = vpack.c.b16 %v5538, %v5537
        %v5675 = vpack.c.b16 %v5540, %v5539
        %v5676 = vpack.c.b16 %v5542, %v5541
        %v5677 = vpack.c.b16 %v5544, %v5543
        %v5678 = vpack.c.b16 %v5546, %v5545
        %v5679 = vpack.c.b16 %v5548, %v5547
        %v5680 = vpack.c.b16 %v5550, %v5549
        %v5681 = vpack.c.b16 %v5552, %v5551
        %v5682 = vpack.c.b16 %v5554, %v5553
        %v5683 = vpack.c.b16 %v5556, %v5555
        %v5684 = vpack.c.b16 %v5558, %v5557
        %v5685 = vpack.c.b16 %v5560, %v5559
        %v5686 = vpack.c.b16 %v5562, %v5561
        %v5687 = vpack.c.b16 %v5564, %v5563
        %v5688 = vpack.c.b16 %v5566, %v5565
        %v5689 = vpack.c.b16 %v5568, %v5567
        %v5690 = vpack.c.b16 %v5570, %v5569
        %v5691 = vpack.c.b16 %v5572, %v5571
        %v5692 = vpack.c.b16 %v5574, %v5573
        %v5693 = vpack.c.b16 %v5576, %v5575
        %v5694 = vpack.c.b16 %v5578, %v5577
        %v5695 = vpack.c.b16 %v5580, %v5579
        %v5696 = vpack.c.b16 %v5582, %v5581
        %v5697 = vpack.c.b16 %v5584, %v5583
        %v5698 = vpack.c.b16 %v5586, %v5585
        %v5699 = vpack.c.b16 %v5588, %v5587
        %v5700 = vpack.c.b16 %v5590, %v5589
        %v5701 = vpack.c.b16 %v5592, %v5591
        %v5702 = vpack.c.b16 %v5594, %v5593
        %v5703 = vpack.c.b16 %v5596, %v5595
        %v5704 = vpack.c.b16 %v5598, %v5597
        %v5705 = vpack.c.b16 %v5600, %v5599
        %v5706 = vpack.c.b16 %v5602, %v5601
        %v5707 = vpack.c.b16 %v5604, %v5603
        %v5708 = vpack.c.b16 %v5606, %v5605
        %v5709 = vpack.c.b16 %v5608, %v5607
        %v5710 = vpack.c.b16 %v5610, %v5609
        %v5711 = vpack.c.b16 %v5612, %v5611
        %v5712 = vpack.c.b16 %v5614, %v5613
        %v5713 = vpack.c.b16 %v5616, %v5615
        %v5714 = vpack.c.b16 %v5618, %v5617
        %v5715 = vpack.c.b16 %v5620, %v5619
        %v5716 = vpack.c.b16 %v5622, %v5621
        %v5717 = vpack.c.b16 %v5624, %v5623
        %v5718 = vpack.c.b16 %v5626, %v5625
        %v5719 = vpack.c.b16 %v5628, %v5627
        %v5720 = vpack.c.b16 %v5630, %v5629
        %v5721 = vpack.c.b16 %v5632, %v5631
        %v5722 = vpack.c.b16 %v5634, %v5633
        %v5723 = vpack.c.b16 %v5636, %v5635
        %v5724 = vpack.c.b16 %v5638, %v5637
        %v5725 = vpack.c.b16 %v5640, %v5639
        %v5726 = vpack.c.b16 %v5642, %v5641
        %v5727 = vpack.c.b16 %v5644, %v5643
        %v5728 = vpack.c.b16 %v5646, %v5645
        %v5729 = vpack.c.b16 %v5648, %v5647
        %v5730 = vpack.c.b16 %v5650, %v5649
        %v5731 = vpack.c.b16 %v5652, %v5651
        %v5732 = vpack.c.b16 %v5654, %v5653
        %v5733 = vpack.c.b16 %v5656, %v5655
        %v5734 = vpack.c.b16 %v5658, %v5657
        %v5735 = vpack.c.b16 %v5660, %v5659
        %v5736 = vpack.c.b16 %v5662, %v5661
        %v5737 = vpack.c.b16 %v5664, %v5663
        %v5738 = vpack.c.b16 %v5666, %v5665
        %5811 = vmatprep.subr.bf16.mxu0 0
        %5812 = vmatpush1.bf16.msra.mxu0 %v5667
        %5813 = vmatprep.subr.bf16.mxu0 0
        %5814 = vmatpush1.bf16.msra.mxu0 %v5668
        %5815 = vmatprep.subr.bf16.mxu0 0
        %5816 = vmatpush1.bf16.msra.mxu0 %v5669
        %5817 = vmatprep.subr.bf16.mxu0 0
        %5818 = vmatpush1.bf16.msra.mxu0 %v5670
        %5819 = vmatprep.subr.bf16.mxu0 0
        %5820 = vmatpush1.bf16.msra.mxu0 %v5671
        %5821 = vmatprep.subr.bf16.mxu0 0
        %5822 = vmatpush1.bf16.msra.mxu0 %v5672
        %5823 = vmatprep.subr.bf16.mxu0 0
        %5824 = vmatpush1.bf16.msra.mxu0 %v5673
        %5825 = vmatprep.subr.bf16.mxu0 0
        %5826 = vmatpush1.bf16.msra.mxu0 %v5674
        %5827 = vmatprep.subr.bf16.mxu0 0
        %5828 = vmatpush1.bf16.msra.mxu0 %v5675
        %5829 = vmatprep.subr.bf16.mxu0 0
        %5830 = vmatpush1.bf16.msra.mxu0 %v5676
        %5831 = vmatprep.subr.bf16.mxu0 0
        %5832 = vmatpush1.bf16.msra.mxu0 %v5677
        %5833 = vmatprep.subr.bf16.mxu0 0
        %5834 = vmatpush1.bf16.msra.mxu0 %v5678
        %5835 = vmatprep.subr.bf16.mxu0 0
        %5836 = vmatpush1.bf16.msra.mxu0 %v5679
        %5837 = vmatprep.subr.bf16.mxu0 0
        %5838 = vmatpush1.bf16.msra.mxu0 %v5680
        %5839 = vmatprep.subr.bf16.mxu0 0
        %5840 = vmatpush1.bf16.msra.mxu0 %v5681
        %5841 = vmatprep.subr.bf16.mxu0 0
        %5842 = vmatpush1.bf16.msra.mxu0 %v5682
        %5843 = vmatprep.mubr.bf16.mxu0 %v5115
        %5844 = vmatmul.mubr.bf16.gmra.mrb[0].mxu0 %v5051
        %v5845 = vpop.f32.mrb[0].mxu0
        %v5846 = vadd.f32 0.0, %v5845
        %v5847 = vpop.f32.mrb[0].mxu0
        %v5848 = vpop.f32.mrb[0].mxu0
        %v5849 = vadd.f32 0.0, %v5848
        %v5850 = vpop.f32.mrb[0].mxu0
        %5851 = vmatprep.mubr.bf16.mxu0 %v5116
        %5852 = vmatmul.mubr.bf16.gmra.mrb[0].mxu0 %v5052
        %v5853 = vpop.f32.mrb[0].mxu0
        %v5854 = vadd.f32 0.0, %v5853
        %v5855 = vpop.f32.mrb[0].mxu0
        %v5856 = vpop.f32.mrb[0].mxu0
        %v5857 = vadd.f32 0.0, %v5856
        %v5858 = vpop.f32.mrb[0].mxu0
        %5859 = vmatprep.mubr.bf16.mxu0 %v5117
        %5860 = vmatmul.mubr.bf16.gmra.mrb[0].mxu0 %v5053
        %v5861 = vpop.f32.mrb[0].mxu0
        %v5862 = vadd.f32 0.0, %v5861
        %v5863 = vpop.f32.mrb[0].mxu0
        %v5864 = vpop.f32.mrb[0].mxu0
        %v5865 = vadd.f32 0.0, %v5864
        %v5866 = vpop.f32.mrb[0].mxu0
        %5867 = vmatprep.mubr.bf16.mxu0 %v5118
        %5868 = vmatmul.mubr.bf16.gmra.mrb[0].mxu0 %v5054
        %v5869 = vpop.f32.mrb[0].mxu0
        %v5870 = vadd.f32 0.0, %v5869
        %v5871 = vpop.f32.mrb[0].mxu0
        %v5872 = vpop.f32.mrb[0].mxu0
        %v5873 = vadd.f32 0.0, %v5872
        %v5874 = vpop.f32.mrb[0].mxu0
        %5875 = vmatprep.mubr.bf16.mxu0 %v5119
        %5876 = vmatmul.mubr.bf16.gmra.mrb[0].mxu0 %v5055
        %v5877 = vpop.f32.mrb[0].mxu0
        %v5878 = vadd.f32 0.0, %v5877
        %v5879 = vpop.f32.mrb[0].mxu0
        %v5880 = vpop.f32.mrb[0].mxu0
        %v5881 = vadd.f32 0.0, %v5880
        %v5882 = vpop.f32.mrb[0].mxu0
        %5883 = vmatprep.mubr.bf16.mxu0 %v5120
        %5884 = vmatmul.mubr.bf16.gmra.mrb[0].mxu0 %v5056
        %v5885 = vpop.f32.mrb[0].mxu0
        %v5886 = vadd.f32 0.0, %v5885
        %v5887 = vpop.f32.mrb[0].mxu0
        %v5888 = vpop.f32.mrb[0].mxu0
        %v5889 = vadd.f32 0.0, %v5888
        %v5890 = vpop.f32.mrb[0].mxu0
        %5891 = vmatprep.mubr.bf16.mxu0 %v5121
        %5892 = vmatmul.mubr.bf16.gmra.mrb[0].mxu0 %v5057
        %v5893 = vpop.f32.mrb[0].mxu0
        %v5894 = vadd.f32 0.0, %v5893
        %v5895 = vpop.f32.mrb[0].mxu0
        %v5896 = vpop.f32.mrb[0].mxu0
        %v5897 = vadd.f32 0.0, %v5896
        %v5898 = vpop.f32.mrb[0].mxu0
        %5899 = vmatprep.mubr.bf16.mxu0 %v5122
        %5900 = vmatmul.mubr.bf16.gmra.mrb[0].mxu0 %v5058
        %v5901 = vpop.f32.mrb[0].mxu0
        %v5902 = vadd.f32 0.0, %v5901
        %v5903 = vpop.f32.mrb[0].mxu0
        %v5904 = vpop.f32.mrb[0].mxu0
        %v5905 = vadd.f32 0.0, %v5904
        %v5906 = vpop.f32.mrb[0].mxu0
        %5907 = vmatprep.mubr.bf16.mxu0 %v5123
        %5908 = vmatmul.mubr.bf16.gmra.mrb[0].mxu0 %v5059
        %v5909 = vpop.f32.mrb[0].mxu0
        %v5910 = vadd.f32 0.0, %v5909
        %v5911 = vpop.f32.mrb[0].mxu0
        %v5912 = vpop.f32.mrb[0].mxu0
        %v5913 = vadd.f32 0.0, %v5912
        %v5914 = vpop.f32.mrb[0].mxu0
        %5915 = vmatprep.mubr.bf16.mxu0 %v5124
        %5916 = vmatmul.mubr.bf16.gmra.mrb[0].mxu0 %v5060
        %v5917 = vpop.f32.mrb[0].mxu0
        %v5918 = vadd.f32 0.0, %v5917
        %v5919 = vpop.f32.mrb[0].mxu0
        %v5920 = vpop.f32.mrb[0].mxu0
        %v5921 = vadd.f32 0.0, %v5920
        %v5922 = vpop.f32.mrb[0].mxu0
        %5923 = vmatprep.mubr.bf16.mxu0 %v5125
        %5924 = vmatmul.mubr.bf16.gmra.mrb[0].mxu0 %v5061
        %v5925 = vpop.f32.mrb[0].mxu0
        %v5926 = vadd.f32 0.0, %v5925
        %v5927 = vpop.f32.mrb[0].mxu0
        %v5928 = vpop.f32.mrb[0].mxu0
        %v5929 = vadd.f32 0.0, %v5928
        %v5930 = vpop.f32.mrb[0].mxu0
        %5931 = vmatprep.mubr.bf16.mxu0 %v5126
        %5932 = vmatmul.mubr.bf16.gmra.mrb[0].mxu0 %v5062
        %v5933 = vpop.f32.mrb[0].mxu0
        %v5934 = vadd.f32 0.0, %v5933
        %v5935 = vpop.f32.mrb[0].mxu0
        %v5936 = vpop.f32.mrb[0].mxu0
        %v5937 = vadd.f32 0.0, %v5936
        %v5938 = vpop.f32.mrb[0].mxu0
        %5939 = vmatprep.mubr.bf16.mxu0 %v5127
        %5940 = vmatmul.mubr.bf16.gmra.mrb[0].mxu0 %v5063
        %v5941 = vpop.f32.mrb[0].mxu0
        %v5942 = vadd.f32 0.0, %v5941
        %v5943 = vpop.f32.mrb[0].mxu0
        %v5944 = vpop.f32.mrb[0].mxu0
        %v5945 = vadd.f32 0.0, %v5944
        %v5946 = vpop.f32.mrb[0].mxu0
        %5947 = vmatprep.mubr.bf16.mxu0 %v5128
        %5948 = vmatmul.mubr.bf16.gmra.mrb[0].mxu0 %v5064
        %v5949 = vpop.f32.mrb[0].mxu0
        %v5950 = vadd.f32 0.0, %v5949
        %v5951 = vpop.f32.mrb[0].mxu0
        %v5952 = vpop.f32.mrb[0].mxu0
        %v5953 = vadd.f32 0.0, %v5952
        %v5954 = vpop.f32.mrb[0].mxu0
        %5955 = vmatprep.mubr.bf16.mxu0 %v5129
        %5956 = vmatmul.mubr.bf16.gmra.mrb[0].mxu0 %v5065
        %v5957 = vpop.f32.mrb[0].mxu0
        %v5958 = vadd.f32 0.0, %v5957
        %v5959 = vpop.f32.mrb[0].mxu0
        %v5960 = vpop.f32.mrb[0].mxu0
        %v5961 = vadd.f32 0.0, %v5960
        %v5962 = vpop.f32.mrb[0].mxu0
        %5963 = vmatprep.mubr.bf16.mxu0 %v5130
        %5964 = vmatmul.mubr.bf16.gmra.mrb[0].mxu0 %v5066
        %v5965 = vpop.f32.mrb[0].mxu0
        %v5966 = vadd.f32 0.0, %v5965
        %v5967 = vpop.f32.mrb[0].mxu0
        %v5968 = vpop.f32.mrb[0].mxu0
        %v5969 = vadd.f32 0.0, %v5968
        %v5970 = vpop.f32.mrb[0].mxu0
        %5971 = vdwg.mxu0
        %5972 = vmatprep.subr.bf16.mxu0 0
        %5973 = vmatpush1.bf16.msra.mxu0 %v5683
        %5974 = vmatprep.subr.bf16.mxu0 0
        %5975 = vmatpush1.bf16.msra.mxu0 %v5684
        %5976 = vmatprep.subr.bf16.mxu0 0
        %5977 = vmatpush1.bf16.msra.mxu0 %v5685
        %5978 = vmatprep.subr.bf16.mxu0 0
        %5979 = vmatpush1.bf16.msra.mxu0 %v5686
        %5980 = vmatprep.subr.bf16.mxu0 0
        %5981 = vmatpush1.bf16.msra.mxu0 %v5687
        %5982 = vmatprep.subr.bf16.mxu0 0
        %5983 = vmatpush1.bf16.msra.mxu0 %v5688
        %5984 = vmatprep.subr.bf16.mxu0 0
        %5985 = vmatpush1.bf16.msra.mxu0 %v5689
        %5986 = vmatprep.subr.bf16.mxu0 0
        %5987 = vmatpush1.bf16.msra.mxu0 %v5690
        %5988 = vmatprep.subr.bf16.mxu0 0
        %5989 = vmatpush1.bf16.msra.mxu0 %v5691
        %5990 = vmatprep.subr.bf16.mxu0 0
        %5991 = vmatpush1.bf16.msra.mxu0 %v5692
        %5992 = vmatprep.subr.bf16.mxu0 0
        %5993 = vmatpush1.bf16.msra.mxu0 %v5693
        %5994 = vmatprep.subr.bf16.mxu0 0
        %5995 = vmatpush1.bf16.msra.mxu0 %v5694
        %5996 = vmatprep.subr.bf16.mxu0 0
        %5997 = vmatpush1.bf16.msra.mxu0 %v5695
        %5998 = vmatprep.subr.bf16.mxu0 0
        %5999 = vmatpush1.bf16.msra.mxu0 %v5696
        %6000 = vmatprep.subr.bf16.mxu0 0
        %6001 = vmatpush1.bf16.msra.mxu0 %v5697
        %6002 = vmatprep.subr.bf16.mxu0 0
        %6003 = vmatpush1.bf16.msra.mxu0 %v5698
        %6004 = vmatprep.mubr.bf16.mxu0 %v5052
        %6005 = vmatmul.mubr.bf16.gmra.mrb[0].mxu0 %v5179
        %v6006 = vpop.f32.mrb[0].mxu0
        %v6007 = vadd.f32 %v5846, %v6006
        %v6008 = vpop.f32.mrb[0].mxu0
        %v6009 = vpop.f32.mrb[0].mxu0
        %v6010 = vadd.f32 %v5849, %v6009
        %v6011 = vpop.f32.mrb[0].mxu0
        %6012 = vmatprep.mubr.bf16.mxu0 %v5053
        %6013 = vmatmul.mubr.bf16.gmra.mrb[0].mxu0 %v5180
        %v6014 = vpop.f32.mrb[0].mxu0
        %v6015 = vadd.f32 %v5854, %v6014
        %v6016 = vpop.f32.mrb[0].mxu0
        %v6017 = vpop.f32.mrb[0].mxu0
        %v6018 = vadd.f32 %v5857, %v6017
        %v6019 = vpop.f32.mrb[0].mxu0
        %6020 = vmatprep.mubr.bf16.mxu0 %v5054
        %6021 = vmatmul.mubr.bf16.gmra.mrb[0].mxu0 %v5181
        %v6022 = vpop.f32.mrb[0].mxu0
        %v6023 = vadd.f32 %v5862, %v6022
        %v6024 = vpop.f32.mrb[0].mxu0
        %v6025 = vpop.f32.mrb[0].mxu0
        %v6026 = vadd.f32 %v5865, %v6025
        %v6027 = vpop.f32.mrb[0].mxu0
        %6028 = vmatprep.mubr.bf16.mxu0 %v5055
        %6029 = vmatmul.mubr.bf16.gmra.mrb[0].mxu0 %v5182
        %v6030 = vpop.f32.mrb[0].mxu0
        %v6031 = vadd.f32 %v5870, %v6030
        %v6032 = vpop.f32.mrb[0].mxu0
        %v6033 = vpop.f32.mrb[0].mxu0
        %v6034 = vadd.f32 %v5873, %v6033
        %v6035 = vpop.f32.mrb[0].mxu0
        %6036 = vmatprep.mubr.bf16.mxu0 %v5056
        %6037 = vmatmul.mubr.bf16.gmra.mrb[0].mxu0 %v5183
        %v6038 = vpop.f32.mrb[0].mxu0
        %v6039 = vadd.f32 %v5878, %v6038
        %v6040 = vpop.f32.mrb[0].mxu0
        %v6041 = vpop.f32.mrb[0].mxu0
        %v6042 = vadd.f32 %v5881, %v6041
        %v6043 = vpop.f32.mrb[0].mxu0
        %6044 = vmatprep.mubr.bf16.mxu0 %v5057
        %6045 = vmatmul.mubr.bf16.gmra.mrb[0].mxu0 %v5184
        %v6046 = vpop.f32.mrb[0].mxu0
        %v6047 = vadd.f32 %v5886, %v6046
        %v6048 = vpop.f32.mrb[0].mxu0
        %v6049 = vpop.f32.mrb[0].mxu0
        %v6050 = vadd.f32 %v5889, %v6049
        %v6051 = vpop.f32.mrb[0].mxu0
        %6052 = vmatprep.mubr.bf16.mxu0 %v5058
        %6053 = vmatmul.mubr.bf16.gmra.mrb[0].mxu0 %v5185
        %v6054 = vpop.f32.mrb[0].mxu0
        %v6055 = vadd.f32 %v5894, %v6054
        %v6056 = vpop.f32.mrb[0].mxu0
        %v6057 = vpop.f32.mrb[0].mxu0
        %v6058 = vadd.f32 %v5897, %v6057
        %v6059 = vpop.f32.mrb[0].mxu0
        %6060 = vmatprep.mubr.bf16.mxu0 %v5059
        %6061 = vmatmul.mubr.bf16.gmra.mrb[0].mxu0 %v5186
        %v6062 = vpop.f32.mrb[0].mxu0
        %v6063 = vadd.f32 %v5902, %v6062
        %v6064 = vpop.f32.mrb[0].mxu0
        %v6065 = vpop.f32.mrb[0].mxu0
        %v6066 = vadd.f32 %v5905, %v6065
        %v6067 = vpop.f32.mrb[0].mxu0
        %6068 = vmatprep.mubr.bf16.mxu0 %v5060
        %6069 = vmatmul.mubr.bf16.gmra.mrb[0].mxu0 %v5187
        %v6070 = vpop.f32.mrb[0].mxu0
        %v6071 = vadd.f32 %v5910, %v6070
        %v6072 = vpop.f32.mrb[0].mxu0
        %v6073 = vpop.f32.mrb[0].mxu0
        %v6074 = vadd.f32 %v5913, %v6073
        %v6075 = vpop.f32.mrb[0].mxu0
        %6076 = vmatprep.mubr.bf16.mxu0 %v5061
        %6077 = vmatmul.mubr.bf16.gmra.mrb[0].mxu0 %v5188
        %v6078 = vpop.f32.mrb[0].mxu0
        %v6079 = vadd.f32 %v5918, %v6078
        %v6080 = vpop.f32.mrb[0].mxu0
        %v6081 = vpop.f32.mrb[0].mxu0
        %v6082 = vadd.f32 %v5921, %v6081
        %v6083 = vpop.f32.mrb[0].mxu0
        %6084 = vmatprep.mubr.bf16.mxu0 %v5062
        %6085 = vmatmul.mubr.bf16.gmra.mrb[0].mxu0 %v5189
        %v6086 = vpop.f32.mrb[0].mxu0
        %v6087 = vadd.f32 %v5926, %v6086
        %v6088 = vpop.f32.mrb[0].mxu0
        %v6089 = vpop.f32.mrb[0].mxu0
        %v6090 = vadd.f32 %v5929, %v6089
        %v6091 = vpop.f32.mrb[0].mxu0
        %6092 = vmatprep.mubr.bf16.mxu0 %v5063
        %6093 = vmatmul.mubr.bf16.gmra.mrb[0].mxu0 %v5190
        %v6094 = vpop.f32.mrb[0].mxu0
        %v6095 = vadd.f32 %v5934, %v6094
        %v6096 = vpop.f32.mrb[0].mxu0
        %v6097 = vpop.f32.mrb[0].mxu0
        %v6098 = vadd.f32 %v5937, %v6097
        %v6099 = vpop.f32.mrb[0].mxu0
        %6100 = vmatprep.mubr.bf16.mxu0 %v5064
        %6101 = vmatmul.mubr.bf16.gmra.mrb[0].mxu0 %v5191
        %v6102 = vpop.f32.mrb[0].mxu0
        %v6103 = vadd.f32 %v5942, %v6102
        %v6104 = vpop.f32.mrb[0].mxu0
        %v6105 = vpop.f32.mrb[0].mxu0
        %v6106 = vadd.f32 %v5945, %v6105
        %v6107 = vpop.f32.mrb[0].mxu0
        %6108 = vmatprep.mubr.bf16.mxu0 %v5065
        %6109 = vmatmul.mubr.bf16.gmra.mrb[0].mxu0 %v5192
        %v6110 = vpop.f32.mrb[0].mxu0
        %v6111 = vadd.f32 %v5950, %v6110
        %v6112 = vpop.f32.mrb[0].mxu0
        %v6113 = vpop.f32.mrb[0].mxu0
        %v6114 = vadd.f32 %v5953, %v6113
        %v6115 = vpop.f32.mrb[0].mxu0
        %6116 = vmatprep.mubr.bf16.mxu0 %v5066
        %6117 = vmatmul.mubr.bf16.gmra.mrb[0].mxu0 %v5193
        %v6118 = vpop.f32.mrb[0].mxu0
        %v6119 = vadd.f32 %v5958, %v6118
        %v6120 = vpop.f32.mrb[0].mxu0
        %v6121 = vpop.f32.mrb[0].mxu0
        %v6122 = vadd.f32 %v5961, %v6121
        %v6123 = vpop.f32.mrb[0].mxu0
        %6124 = vmatprep.mubr.bf16.mxu0 %v5213
        %6125 = vmatmul.mubr.bf16.gmra.mrb[0].mxu0 %v5194
        %v6126 = vpop.f32.mrb[0].mxu0
        %v6127 = vadd.f32 %v5966, %v6126
        %v6128 = vpop.f32.mrb[0].mxu0
        %v6129 = vpop.f32.mrb[0].mxu0
        %v6130 = vadd.f32 %v5969, %v6129
        %v6131 = vpop.f32.mrb[0].mxu0
        %6132 = vdwg.mxu0
        %6133 = vmatprep.subr.bf16.mxu0 0
        %6134 = vmatpush1.bf16.msra.mxu0 %v5699
        %6135 = vmatprep.subr.bf16.mxu0 0
        %6136 = vmatpush1.bf16.msra.mxu0 %v5700
        %6137 = vmatprep.subr.bf16.mxu0 0
        %6138 = vmatpush1.bf16.msra.mxu0 %v5701
        %6139 = vmatprep.subr.bf16.mxu0 0
        %6140 = vmatpush1.bf16.msra.mxu0 %v5702
        %6141 = vmatprep.subr.bf16.mxu0 0
        %6142 = vmatpush1.bf16.msra.mxu0 %v5703
        %6143 = vmatprep.subr.bf16.mxu0 0
        %6144 = vmatpush1.bf16.msra.mxu0 %v5704
        %6145 = vmatprep.subr.bf16.mxu0 0
        %6146 = vmatpush1.bf16.msra.mxu0 %v5705
        %6147 = vmatprep.subr.bf16.mxu0 0
        %6148 = vmatpush1.bf16.msra.mxu0 %v5706
        %6149 = vmatprep.subr.bf16.mxu0 0
        %6150 = vmatpush1.bf16.msra.mxu0 %v5707
        %6151 = vmatprep.subr.bf16.mxu0 0
        %6152 = vmatpush1.bf16.msra.mxu0 %v5708
        %6153 = vmatprep.subr.bf16.mxu0 0
        %6154 = vmatpush1.bf16.msra.mxu0 %v5709
        %6155 = vmatprep.subr.bf16.mxu0 0
        %6156 = vmatpush1.bf16.msra.mxu0 %v5710
        %6157 = vmatprep.subr.bf16.mxu0 0
        %6158 = vmatpush1.bf16.msra.mxu0 %v5711
        %6159 = vmatprep.subr.bf16.mxu0 0
        %6160 = vmatpush1.bf16.msra.mxu0 %v5712
        %6161 = vmatprep.subr.bf16.mxu0 0
        %6162 = vmatpush1.bf16.msra.mxu0 %v5713
        %6163 = vmatprep.subr.bf16.mxu0 0
        %6164 = vmatpush1.bf16.msra.mxu0 %v5714
        %6165 = vmatprep.mubr.bf16.mxu0 %v5180
        %6166 = vmatmul.mubr.bf16.gmra.mrb[0].mxu0 %v5116
        %v6167 = vpop.f32.mrb[0].mxu0
        %v6168 = vadd.f32 %v6007, %v6167
        %v6169 = vpop.f32.mrb[0].mxu0
        %v6170 = vpop.f32.mrb[0].mxu0
        %v6171 = vadd.f32 %v6010, %v6170
        %v6172 = vpop.f32.mrb[0].mxu0
        %6173 = vmatprep.mubr.bf16.mxu0 %v5181
        %6174 = vmatmul.mubr.bf16.gmra.mrb[0].mxu0 %v5117
        %v6175 = vpop.f32.mrb[0].mxu0
        %v6176 = vadd.f32 %v6015, %v6175
        %v6177 = vpop.f32.mrb[0].mxu0
        %v6178 = vpop.f32.mrb[0].mxu0
        %v6179 = vadd.f32 %v6018, %v6178
        %v6180 = vpop.f32.mrb[0].mxu0
        %6181 = vmatprep.mubr.bf16.mxu0 %v5182
        %6182 = vmatmul.mubr.bf16.gmra.mrb[0].mxu0 %v5118
        %v6183 = vpop.f32.mrb[0].mxu0
        %v6184 = vadd.f32 %v6023, %v6183
        %v6185 = vpop.f32.mrb[0].mxu0
        %v6186 = vpop.f32.mrb[0].mxu0
        %v6187 = vadd.f32 %v6026, %v6186
        %v6188 = vpop.f32.mrb[0].mxu0
        %6189 = vmatprep.mubr.bf16.mxu0 %v5183
        %6190 = vmatmul.mubr.bf16.gmra.mrb[0].mxu0 %v5119
        %v6191 = vpop.f32.mrb[0].mxu0
        %v6192 = vadd.f32 %v6031, %v6191
        %v6193 = vpop.f32.mrb[0].mxu0
        %v6194 = vpop.f32.mrb[0].mxu0
        %v6195 = vadd.f32 %v6034, %v6194
        %v6196 = vpop.f32.mrb[0].mxu0
        %6197 = vmatprep.mubr.bf16.mxu0 %v5184
        %6198 = vmatmul.mubr.bf16.gmra.mrb[0].mxu0 %v5120
        %v6199 = vpop.f32.mrb[0].mxu0
        %v6200 = vadd.f32 %v6039, %v6199
        %v6201 = vpop.f32.mrb[0].mxu0
        %v6202 = vpop.f32.mrb[0].mxu0
        %v6203 = vadd.f32 %v6042, %v6202
        %v6204 = vpop.f32.mrb[0].mxu0
        %6205 = vmatprep.mubr.bf16.mxu0 %v5185
        %6206 = vmatmul.mubr.bf16.gmra.mrb[0].mxu0 %v5121
        %v6207 = vpop.f32.mrb[0].mxu0
        %v6208 = vadd.f32 %v6047, %v6207
        %v6209 = vpop.f32.mrb[0].mxu0
        %v6210 = vpop.f32.mrb[0].mxu0
        %v6211 = vadd.f32 %v6050, %v6210
        %v6212 = vpop.f32.mrb[0].mxu0
        %6213 = vmatprep.mubr.bf16.mxu0 %v5186
        %6214 = vmatmul.mubr.bf16.gmra.mrb[0].mxu0 %v5122
        %v6215 = vpop.f32.mrb[0].mxu0
        %v6216 = vadd.f32 %v6055, %v6215
        %v6217 = vpop.f32.mrb[0].mxu0
        %v6218 = vpop.f32.mrb[0].mxu0
        %v6219 = vadd.f32 %v6058, %v6218
        %v6220 = vpop.f32.mrb[0].mxu0
        %6221 = vmatprep.mubr.bf16.mxu0 %v5187
        %6222 = vmatmul.mubr.bf16.gmra.mrb[0].mxu0 %v5123
        %v6223 = vpop.f32.mrb[0].mxu0
        %v6224 = vadd.f32 %v6063, %v6223
        %v6225 = vpop.f32.mrb[0].mxu0
        %v6226 = vpop.f32.mrb[0].mxu0
        %v6227 = vadd.f32 %v6066, %v6226
        %v6228 = vpop.f32.mrb[0].mxu0
        %6229 = vmatprep.mubr.bf16.mxu0 %v5188
        %6230 = vmatmul.mubr.bf16.gmra.mrb[0].mxu0 %v5124
        %v6231 = vpop.f32.mrb[0].mxu0
        %v6232 = vadd.f32 %v6071, %v6231
        %v6233 = vpop.f32.mrb[0].mxu0
        %v6234 = vpop.f32.mrb[0].mxu0
        %v6235 = vadd.f32 %v6074, %v6234
        %v6236 = vpop.f32.mrb[0].mxu0
        %6237 = vmatprep.mubr.bf16.mxu0 %v5189
        %6238 = vmatmul.mubr.bf16.gmra.mrb[0].mxu0 %v5125
        %v6239 = vpop.f32.mrb[0].mxu0
        %v6240 = vadd.f32 %v6079, %v6239
        %v6241 = vpop.f32.mrb[0].mxu0
        %v6242 = vpop.f32.mrb[0].mxu0
        %v6243 = vadd.f32 %v6082, %v6242
        %v6244 = vpop.f32.mrb[0].mxu0
        %6245 = vmatprep.mubr.bf16.mxu0 %v5190
        %6246 = vmatmul.mubr.bf16.gmra.mrb[0].mxu0 %v5126
        %v6247 = vpop.f32.mrb[0].mxu0
        %v6248 = vadd.f32 %v6087, %v6247
        %v6249 = vpop.f32.mrb[0].mxu0
        %v6250 = vpop.f32.mrb[0].mxu0
        %v6251 = vadd.f32 %v6090, %v6250
        %v6252 = vpop.f32.mrb[0].mxu0
        %6253 = vmatprep.mubr.bf16.mxu0 %v5191
        %6254 = vmatmul.mubr.bf16.gmra.mrb[0].mxu0 %v5127
        %v6255 = vpop.f32.mrb[0].mxu0
        %v6256 = vadd.f32 %v6095, %v6255
        %v6257 = vpop.f32.mrb[0].mxu0
        %v6258 = vpop.f32.mrb[0].mxu0
        %v6259 = vadd.f32 %v6098, %v6258
        %v6260 = vpop.f32.mrb[0].mxu0
        %6261 = vmatprep.mubr.bf16.mxu0 %v5192
        %6262 = vmatmul.mubr.bf16.gmra.mrb[0].mxu0 %v5128
        %v6263 = vpop.f32.mrb[0].mxu0
        %v6264 = vadd.f32 %v6103, %v6263
        %v6265 = vpop.f32.mrb[0].mxu0
        %v6266 = vpop.f32.mrb[0].mxu0
        %v6267 = vadd.f32 %v6106, %v6266
        %v6268 = vpop.f32.mrb[0].mxu0
        %6269 = vmatprep.mubr.bf16.mxu0 %v5193
        %6270 = vmatmul.mubr.bf16.gmra.mrb[0].mxu0 %v5129
        %v6271 = vpop.f32.mrb[0].mxu0
        %v6272 = vadd.f32 %v6111, %v6271
        %v6273 = vpop.f32.mrb[0].mxu0
        %v6274 = vpop.f32.mrb[0].mxu0
        %v6275 = vadd.f32 %v6114, %v6274
        %v6276 = vpop.f32.mrb[0].mxu0
        %6277 = vmatprep.mubr.bf16.mxu0 %v5194
        %6278 = vmatmul.mubr.bf16.gmra.mrb[0].mxu0 %v5130
        %v6279 = vpop.f32.mrb[0].mxu0
        %v6280 = vadd.f32 %v6119, %v6279
        %v6281 = vpop.f32.mrb[0].mxu0
        %v6282 = vpop.f32.mrb[0].mxu0
        %v6283 = vadd.f32 %v6122, %v6282
        %v6284 = vpop.f32.mrb[0].mxu0
        %6285 = vmatprep.mubr.bf16.mxu0 %v5221
        %6286 = vmatmul.mubr.bf16.gmra.mrb[0].mxu0 %v5217
        %v6287 = vpop.f32.mrb[0].mxu0
        %v6288 = vadd.f32 %v6127, %v6287
        %v6289 = vpop.f32.mrb[0].mxu0
        %v6290 = vpop.f32.mrb[0].mxu0
        %v6291 = vadd.f32 %v6130, %v6290
        %v6292 = vpop.f32.mrb[0].mxu0
        %6293 = vdwg.mxu0
        %6294 = vmatprep.subr.bf16.mxu0 0
        %6295 = vmatpush1.bf16.msra.mxu0 %v5715
        %6296 = vmatprep.subr.bf16.mxu0 0
        %6297 = vmatpush1.bf16.msra.mxu0 %v5716
        %6298 = vmatprep.subr.bf16.mxu0 0
        %6299 = vmatpush1.bf16.msra.mxu0 %v5717
        %6300 = vmatprep.subr.bf16.mxu0 0
        %6301 = vmatpush1.bf16.msra.mxu0 %v5718
        %6302 = vmatprep.subr.bf16.mxu0 0
        %6303 = vmatpush1.bf16.msra.mxu0 %v5719
        %6304 = vmatprep.subr.bf16.mxu0 0
        %6305 = vmatpush1.bf16.msra.mxu0 %v5720
        %6306 = vmatprep.subr.bf16.mxu0 0
        %6307 = vmatpush1.bf16.msra.mxu0 %v5721
        %6308 = vmatprep.subr.bf16.mxu0 0
        %6309 = vmatpush1.bf16.msra.mxu0 %v5722
        %6310 = vmatprep.subr.bf16.mxu0 0
        %6311 = vmatpush1.bf16.msra.mxu0 %v5723
        %6312 = vmatprep.subr.bf16.mxu0 0
        %6313 = vmatpush1.bf16.msra.mxu0 %v5724
        %6314 = vmatprep.subr.bf16.mxu0 0
        %6315 = vmatpush1.bf16.msra.mxu0 %v5725
        %6316 = vmatprep.subr.bf16.mxu0 0
        %6317 = vmatpush1.bf16.msra.mxu0 %v5726
        %6318 = vmatprep.subr.bf16.mxu0 0
        %6319 = vmatpush1.bf16.msra.mxu0 %v5727
        %6320 = vmatprep.subr.bf16.mxu0 0
        %6321 = vmatpush1.bf16.msra.mxu0 %v5728
        %6322 = vmatprep.subr.bf16.mxu0 0
        %6323 = vmatpush1.bf16.msra.mxu0 %v5729
        %6324 = vmatprep.subr.bf16.mxu0 0
        %6325 = vmatpush1.bf16.msra.mxu0 %v5730
        %6326 = vmatprep.mubr.bf16.mxu0 %v5117
        %6327 = vmatmul.mubr.bf16.gmra.mrb[0].mxu0 %v5053
        %v6328 = vpop.f32.mrb[0].mxu0
        %v6329 = vadd.f32 %v6168, %v6328
        %v6330 = vpop.f32.mrb[0].mxu0
        %v6331 = vpop.f32.mrb[0].mxu0
        %v6332 = vadd.f32 %v6171, %v6331
        %v6333 = vpop.f32.mrb[0].mxu0
        %6334 = vmatprep.mubr.bf16.mxu0 %v5118
        %6335 = vmatmul.mubr.bf16.gmra.mrb[0].mxu0 %v5054
        %v6336 = vpop.f32.mrb[0].mxu0
        %v6337 = vadd.f32 %v6176, %v6336
        %v6338 = vpop.f32.mrb[0].mxu0
        %v6339 = vpop.f32.mrb[0].mxu0
        %v6340 = vadd.f32 %v6179, %v6339
        %v6341 = vpop.f32.mrb[0].mxu0
        %6342 = vmatprep.mubr.bf16.mxu0 %v5119
        %6343 = vmatmul.mubr.bf16.gmra.mrb[0].mxu0 %v5055
        %v6344 = vpop.f32.mrb[0].mxu0
        %v6345 = vadd.f32 %v6184, %v6344
        %v6346 = vpop.f32.mrb[0].mxu0
        %v6347 = vpop.f32.mrb[0].mxu0
        %v6348 = vadd.f32 %v6187, %v6347
        %v6349 = vpop.f32.mrb[0].mxu0
        %6350 = vmatprep.mubr.bf16.mxu0 %v5120
        %6351 = vmatmul.mubr.bf16.gmra.mrb[0].mxu0 %v5056
        %v6352 = vpop.f32.mrb[0].mxu0
        %v6353 = vadd.f32 %v6192, %v6352
        %v6354 = vpop.f32.mrb[0].mxu0
        %v6355 = vpop.f32.mrb[0].mxu0
        %v6356 = vadd.f32 %v6195, %v6355
        %v6357 = vpop.f32.mrb[0].mxu0
        %6358 = vmatprep.mubr.bf16.mxu0 %v5121
        %6359 = vmatmul.mubr.bf16.gmra.mrb[0].mxu0 %v5057
        %v6360 = vpop.f32.mrb[0].mxu0
        %v6361 = vadd.f32 %v6200, %v6360
        %v6362 = vpop.f32.mrb[0].mxu0
        %v6363 = vpop.f32.mrb[0].mxu0
        %v6364 = vadd.f32 %v6203, %v6363
        %v6365 = vpop.f32.mrb[0].mxu0
        %6366 = vmatprep.mubr.bf16.mxu0 %v5122
        %6367 = vmatmul.mubr.bf16.gmra.mrb[0].mxu0 %v5058
        %v6368 = vpop.f32.mrb[0].mxu0
        %v6369 = vadd.f32 %v6208, %v6368
        %v6370 = vpop.f32.mrb[0].mxu0
        %v6371 = vpop.f32.mrb[0].mxu0
        %v6372 = vadd.f32 %v6211, %v6371
        %v6373 = vpop.f32.mrb[0].mxu0
        %6374 = vmatprep.mubr.bf16.mxu0 %v5123
        %6375 = vmatmul.mubr.bf16.gmra.mrb[0].mxu0 %v5059
        %v6376 = vpop.f32.mrb[0].mxu0
        %v6377 = vadd.f32 %v6216, %v6376
        %v6378 = vpop.f32.mrb[0].mxu0
        %v6379 = vpop.f32.mrb[0].mxu0
        %v6380 = vadd.f32 %v6219, %v6379
        %v6381 = vpop.f32.mrb[0].mxu0
        %6382 = vmatprep.mubr.bf16.mxu0 %v5124
        %6383 = vmatmul.mubr.bf16.gmra.mrb[0].mxu0 %v5060
        %v6384 = vpop.f32.mrb[0].mxu0
        %v6385 = vadd.f32 %v6224, %v6384
        %v6386 = vpop.f32.mrb[0].mxu0
        %v6387 = vpop.f32.mrb[0].mxu0
        %v6388 = vadd.f32 %v6227, %v6387
        %v6389 = vpop.f32.mrb[0].mxu0
        %6390 = vmatprep.mubr.bf16.mxu0 %v5125
        %6391 = vmatmul.mubr.bf16.gmra.mrb[0].mxu0 %v5061
        %v6392 = vpop.f32.mrb[0].mxu0
        %v6393 = vadd.f32 %v6232, %v6392
        %v6394 = vpop.f32.mrb[0].mxu0
        %v6395 = vpop.f32.mrb[0].mxu0
        %v6396 = vadd.f32 %v6235, %v6395
        %v6397 = vpop.f32.mrb[0].mxu0
        %6398 = vmatprep.mubr.bf16.mxu0 %v5126
        %6399 = vmatmul.mubr.bf16.gmra.mrb[0].mxu0 %v5062
        %v6400 = vpop.f32.mrb[0].mxu0
        %v6401 = vadd.f32 %v6240, %v6400
        %v6402 = vpop.f32.mrb[0].mxu0
        %v6403 = vpop.f32.mrb[0].mxu0
        %v6404 = vadd.f32 %v6243, %v6403
        %v6405 = vpop.f32.mrb[0].mxu0
        %6406 = vmatprep.mubr.bf16.mxu0 %v5127
        %6407 = vmatmul.mubr.bf16.gmra.mrb[0].mxu0 %v5063
        %v6408 = vpop.f32.mrb[0].mxu0
        %v6409 = vadd.f32 %v6248, %v6408
        %v6410 = vpop.f32.mrb[0].mxu0
        %v6411 = vpop.f32.mrb[0].mxu0
        %v6412 = vadd.f32 %v6251, %v6411
        %v6413 = vpop.f32.mrb[0].mxu0
        %6414 = vmatprep.mubr.bf16.mxu0 %v5128
        %6415 = vmatmul.mubr.bf16.gmra.mrb[0].mxu0 %v5064
        %v6416 = vpop.f32.mrb[0].mxu0
        %v6417 = vadd.f32 %v6256, %v6416
        %v6418 = vpop.f32.mrb[0].mxu0
        %v6419 = vpop.f32.mrb[0].mxu0
        %v6420 = vadd.f32 %v6259, %v6419
        %v6421 = vpop.f32.mrb[0].mxu0
        %6422 = vmatprep.mubr.bf16.mxu0 %v5129
        %6423 = vmatmul.mubr.bf16.gmra.mrb[0].mxu0 %v5065
        %v6424 = vpop.f32.mrb[0].mxu0
        %v6425 = vadd.f32 %v6264, %v6424
        %v6426 = vpop.f32.mrb[0].mxu0
        %v6427 = vpop.f32.mrb[0].mxu0
        %v6428 = vadd.f32 %v6267, %v6427
        %v6429 = vpop.f32.mrb[0].mxu0
        %6430 = vmatprep.mubr.bf16.mxu0 %v5130
        %6431 = vmatmul.mubr.bf16.gmra.mrb[0].mxu0 %v5066
        %v6432 = vpop.f32.mrb[0].mxu0
        %v6433 = vadd.f32 %v6272, %v6432
        %v6434 = vpop.f32.mrb[0].mxu0
        %v6435 = vpop.f32.mrb[0].mxu0
        %v6436 = vadd.f32 %v6275, %v6435
        %v6437 = vpop.f32.mrb[0].mxu0
        %6438 = vmatprep.mubr.bf16.mxu0 %v5217
        %6439 = vmatmul.mubr.bf16.gmra.mrb[0].mxu0 %v5213
        %v6440 = vpop.f32.mrb[0].mxu0
        %v6441 = vadd.f32 %v6280, %v6440
        %v6442 = vpop.f32.mrb[0].mxu0
        %v6443 = vpop.f32.mrb[0].mxu0
        %v6444 = vadd.f32 %v6283, %v6443
        %v6445 = vpop.f32.mrb[0].mxu0
        %6446 = vmatprep.mubr.bf16.mxu0 %v5229
        %6447 = vmatmul.mubr.bf16.gmra.mrb[0].mxu0 %v5225
        %v6448 = vpop.f32.mrb[0].mxu0
        %v6449 = vadd.f32 %v6288, %v6448
        %v6450 = vpop.f32.mrb[0].mxu0
        %v6451 = vpop.f32.mrb[0].mxu0
        %v6452 = vadd.f32 %v6291, %v6451
        %v6453 = vpop.f32.mrb[0].mxu0
        %6454 = vdwg.mxu0
        %6455 = vmatprep.subr.bf16.mxu0 0
        %6456 = vmatpush1.bf16.msra.mxu0 %v5731
        %6457 = vmatprep.subr.bf16.mxu0 0
        %6458 = vmatpush1.bf16.msra.mxu0 %v5732
        %6459 = vmatprep.subr.bf16.mxu0 0
        %6460 = vmatpush1.bf16.msra.mxu0 %v5733
        %6461 = vmatprep.subr.bf16.mxu0 0
        %6462 = vmatpush1.bf16.msra.mxu0 %v5734
        %6463 = vmatprep.subr.bf16.mxu0 0
        %6464 = vmatpush1.bf16.msra.mxu0 %v5735
        %6465 = vmatprep.subr.bf16.mxu0 0
        %6466 = vmatpush1.bf16.msra.mxu0 %v5736
        %6467 = vmatprep.subr.bf16.mxu0 0
        %6468 = vmatpush1.bf16.msra.mxu0 %v5737
        %6469 = vmatprep.subr.bf16.mxu0 0
        %6470 = vmatpush1.bf16.msra.mxu0 %v5738
        %6471 = vmatprep.subr.bf16.mxu0 0
        %6472 = vmatpush1.bf16.msra.mxu0 0
        %6473 = vmatprep.subr.bf16.mxu0 0
        %6474 = vmatpush1.bf16.msra.mxu0 0
        %6475 = vmatprep.subr.bf16.mxu0 0
        %6476 = vmatpush1.bf16.msra.mxu0 0
        %6477 = vmatprep.subr.bf16.mxu0 0
        %6478 = vmatpush1.bf16.msra.mxu0 0
        %6479 = vmatprep.subr.bf16.mxu0 0
        %6480 = vmatpush1.bf16.msra.mxu0 0
        %6481 = vmatprep.subr.bf16.mxu0 0
        %6482 = vmatpush1.bf16.msra.mxu0 0
        %6483 = vmatprep.subr.bf16.mxu0 0
        %6484 = vmatpush1.bf16.msra.mxu0 0
        %6485 = vmatprep.subr.bf16.mxu0 0
        %6486 = vmatpush1.bf16.msra.mxu0 0
        %6487 = vmatprep.mubr.bf16.mxu0 0
        %6488 = vmatmul.mubr.bf16.gmra.mrb[0].mxu0 %v5181
        %v6489 = vpop.f32.mrb[0].mxu0
        %v6490 = vadd.f32 %v6329, %v6489
        %v6491 = vpop.f32.mrb[0].mxu0
        %v6492 = vpop.f32.mrb[0].mxu0
        %v6493 = vadd.f32 %v6332, %v6492
        %v6494 = vpop.f32.mrb[0].mxu0
        %6495 = vmatprep.mubr.bf16.mxu0 0
        %6496 = vmatmul.mubr.bf16.gmra.mrb[0].mxu0 %v5182
        %v6497 = vpop.f32.mrb[0].mxu0
        %v6498 = vadd.f32 %v6337, %v6497
        %v6499 = vpop.f32.mrb[0].mxu0
        %v6500 = vpop.f32.mrb[0].mxu0
        %v6501 = vadd.f32 %v6340, %v6500
        %v6502 = vpop.f32.mrb[0].mxu0
        %6503 = vmatprep.mubr.bf16.mxu0 0
        %6504 = vmatmul.mubr.bf16.gmra.mrb[0].mxu0 %v5183
        %v6505 = vpop.f32.mrb[0].mxu0
        %v6506 = vadd.f32 %v6345, %v6505
        %v6507 = vpop.f32.mrb[0].mxu0
        %v6508 = vpop.f32.mrb[0].mxu0
        %v6509 = vadd.f32 %v6348, %v6508
        %v6510 = vpop.f32.mrb[0].mxu0
        %6511 = vmatprep.mubr.bf16.mxu0 0
        %6512 = vmatmul.mubr.bf16.gmra.mrb[0].mxu0 %v5184
        %v6513 = vpop.f32.mrb[0].mxu0
        %v6514 = vadd.f32 %v6353, %v6513
        %v6515 = vpop.f32.mrb[0].mxu0
        %v6516 = vpop.f32.mrb[0].mxu0
        %v6517 = vadd.f32 %v6356, %v6516
        %v6518 = vpop.f32.mrb[0].mxu0
        %6519 = vmatprep.mubr.bf16.mxu0 0
        %6520 = vmatmul.mubr.bf16.gmra.mrb[0].mxu0 %v5185
        %v6521 = vpop.f32.mrb[0].mxu0
        %v6522 = vadd.f32 %v6361, %v6521
        %v6523 = vpop.f32.mrb[0].mxu0
        %v6524 = vpop.f32.mrb[0].mxu0
        %v6525 = vadd.f32 %v6364, %v6524
        %v6526 = vpop.f32.mrb[0].mxu0
        %6527 = vmatprep.mubr.bf16.mxu0 0
        %6528 = vmatmul.mubr.bf16.gmra.mrb[0].mxu0 %v5186
        %v6529 = vpop.f32.mrb[0].mxu0
        %v6530 = vadd.f32 %v6369, %v6529
        %v6531 = vpop.f32.mrb[0].mxu0
        %v6532 = vpop.f32.mrb[0].mxu0
        %v6533 = vadd.f32 %v6372, %v6532
        %v6534 = vpop.f32.mrb[0].mxu0
        %6535 = vmatprep.mubr.bf16.mxu0 0
        %6536 = vmatmul.mubr.bf16.gmra.mrb[0].mxu0 %v5187
        %v6537 = vpop.f32.mrb[0].mxu0
        %v6538 = vadd.f32 %v6377, %v6537
        %v6539 = vpop.f32.mrb[0].mxu0
        %v6540 = vpop.f32.mrb[0].mxu0
        %v6541 = vadd.f32 %v6380, %v6540
        %v6542 = vpop.f32.mrb[0].mxu0
        %6543 = vmatprep.mubr.bf16.mxu0 0
        %6544 = vmatmul.mubr.bf16.gmra.mrb[0].mxu0 %v5188
        %v6545 = vpop.f32.mrb[0].mxu0
        %v6546 = vadd.f32 %v6385, %v6545
        %v6547 = vpop.f32.mrb[0].mxu0
        %v6548 = vpop.f32.mrb[0].mxu0
        %v6549 = vadd.f32 %v6388, %v6548
        %v6550 = vpop.f32.mrb[0].mxu0
        %6551 = vmatprep.mubr.bf16.mxu0 0
        %6552 = vmatmul.mubr.bf16.gmra.mrb[0].mxu0 %v5189
        %v6553 = vpop.f32.mrb[0].mxu0
        %v6554 = vadd.f32 %v6393, %v6553
        %v6555 = vpop.f32.mrb[0].mxu0
        %v6556 = vpop.f32.mrb[0].mxu0
        %v6557 = vadd.f32 %v6396, %v6556
        %v6558 = vpop.f32.mrb[0].mxu0
        %6559 = vmatprep.mubr.bf16.mxu0 0
        %6560 = vmatmul.mubr.bf16.gmra.mrb[0].mxu0 %v5190
        %v6561 = vpop.f32.mrb[0].mxu0
        %v6562 = vadd.f32 %v6401, %v6561
        %v6563 = vpop.f32.mrb[0].mxu0
        %v6564 = vpop.f32.mrb[0].mxu0
        %v6565 = vadd.f32 %v6404, %v6564
        %v6566 = vpop.f32.mrb[0].mxu0
        %6567 = vmatprep.mubr.bf16.mxu0 0
        %6568 = vmatmul.mubr.bf16.gmra.mrb[0].mxu0 %v5191
        %v6569 = vpop.f32.mrb[0].mxu0
        %v6570 = vadd.f32 %v6409, %v6569
        %v6571 = vpop.f32.mrb[0].mxu0
        %v6572 = vpop.f32.mrb[0].mxu0
        %v6573 = vadd.f32 %v6412, %v6572
        %v6574 = vpop.f32.mrb[0].mxu0
        %6575 = vmatprep.mubr.bf16.mxu0 0
        %6576 = vmatmul.mubr.bf16.gmra.mrb[0].mxu0 %v5192
        %v6577 = vpop.f32.mrb[0].mxu0
        %v6578 = vadd.f32 %v6417, %v6577
        %v6579 = vpop.f32.mrb[0].mxu0
        %v6580 = vpop.f32.mrb[0].mxu0
        %v6581 = vadd.f32 %v6420, %v6580
        %v6582 = vpop.f32.mrb[0].mxu0
        %6583 = vmatprep.mubr.bf16.mxu0 0
        %6584 = vmatmul.mubr.bf16.gmra.mrb[0].mxu0 %v5193
        %v6585 = vpop.f32.mrb[0].mxu0
        %v6586 = vadd.f32 %v6425, %v6585
        %v6587 = vpop.f32.mrb[0].mxu0
        %v6588 = vpop.f32.mrb[0].mxu0
        %v6589 = vadd.f32 %v6428, %v6588
        %v6590 = vpop.f32.mrb[0].mxu0
        %6591 = vmatprep.mubr.bf16.mxu0 0
        %6592 = vmatmul.mubr.bf16.gmra.mrb[0].mxu0 %v5194
        %v6593 = vpop.f32.mrb[0].mxu0
        %v6594 = vadd.f32 %v6433, %v6593
        %v6595 = vpop.f32.mrb[0].mxu0
        %v6596 = vpop.f32.mrb[0].mxu0
        %v6597 = vadd.f32 %v6436, %v6596
        %v6598 = vpop.f32.mrb[0].mxu0
        %6599 = vmatprep.mubr.bf16.mxu0 0
        %6600 = vmatmul.mubr.bf16.gmra.mrb[0].mxu0 %v5221
        %v6601 = vpop.f32.mrb[0].mxu0
        %v6602 = vadd.f32 %v6441, %v6601
        %v6603 = vpop.f32.mrb[0].mxu0
        %v6604 = vpop.f32.mrb[0].mxu0
        %v6605 = vadd.f32 %v6444, %v6604
        %v6606 = vpop.f32.mrb[0].mxu0
        %6607 = vmatprep.mubr.bf16.mxu0 0
        %6608 = vmatmul.mubr.bf16.gmra.mrb[0].mxu0 %v5233
        %v6609 = vpop.f32.mrb[0].mxu0
        %v6610 = vadd.f32 %v6449, %v6609
        %v6611 = vpop.f32.mrb[0].mxu0
        %v6612 = vpop.f32.mrb[0].mxu0
        %v6613 = vadd.f32 %v6452, %v6612
        %v6614 = vpop.f32.mrb[0].mxu0
        %6615 = vdwg.mxu0
        %v6616 = vadd.f32 %v6490, %v6493
        %v6617 = vadd.f32 %v6616, %v6498
        %v6618 = vadd.f32 %v6617, %v6501
        %v6619 = vadd.f32 %v6618, %v6506
        %v6620 = vadd.f32 %v6619, %v6509
        %v6621 = vadd.f32 %v6620, %v6514
        %v6622 = vadd.f32 %v6621, %v6517
        %v6623 = vadd.f32 %v6622, %v6522
        %v6624 = vadd.f32 %v6623, %v6525
        %v6625 = vadd.f32 %v6624, %v6530
        %v6626 = vadd.f32 %v6625, %v6533
        %v6627 = vadd.f32 %v6626, %v6538
        %v6628 = vadd.f32 %v6627, %v6541
        %v6629 = vadd.f32 %v6628, %v6546
        %v6630 = vadd.f32 %v6629, %v6549
        %v6631 = vadd.f32 %v6630, %v6554
        %v6632 = vadd.f32 %v6631, %v6557
        %v6633 = vadd.f32 %v6632, %v6562
        %v6634 = vadd.f32 %v6633, %v6565
        %v6635 = vadd.f32 %v6634, %v6570
        %v6636 = vadd.f32 %v6635, %v6573
        %v6637 = vadd.f32 %v6636, %v6578
        %v6638 = vadd.f32 %v6637, %v6581
        %v6639 = vadd.f32 %v6638, %v6586
        %v6640 = vadd.f32 %v6639, %v6589
        %v6641 = vadd.f32 %v6640, %v6594
        %v6642 = vadd.f32 %v6641, %v6597
        %v6643 = vadd.f32 %v6642, %v6602
        %v6644 = vadd.f32 %v6643, %v6605
        %v6645 = vadd.f32 %v6644, %v6610
        %v6646 = vadd.f32 %v6645, %v6613
        %v6647 = vrot.slane %v6646, 4
        %v6648 = vadd.f32 %v6646, %v6647
        %v6649 = vrot.slane %v6648, 2
        %v6650 = vadd.f32 %v6648, %v6649
        %v6651 = vrot.slane %v6650, 1
        %v6652 = vadd.f32 %v6650, %v6651
        %v6653 = vmul.f32 %v6490, %v6490
        %v6654 = vmul.f32 %v6493, %v6493
        %v6655 = vmul.f32 %v6498, %v6498
        %v6656 = vmul.f32 %v6501, %v6501
        %v6657 = vmul.f32 %v6506, %v6506
        %v6658 = vmul.f32 %v6509, %v6509
        %v6659 = vmul.f32 %v6514, %v6514
        %v6660 = vmul.f32 %v6517, %v6517
        %v6661 = vmul.f32 %v6522, %v6522
        %v6662 = vmul.f32 %v6525, %v6525
        %v6663 = vmul.f32 %v6530, %v6530
        %v6664 = vmul.f32 %v6533, %v6533
        %v6665 = vmul.f32 %v6538, %v6538
        %v6666 = vmul.f32 %v6541, %v6541
        %v6667 = vmul.f32 %v6546, %v6546
        %v6668 = vmul.f32 %v6549, %v6549
        %v6669 = vmul.f32 %v6554, %v6554
        %v6670 = vmul.f32 %v6557, %v6557
        %v6671 = vmul.f32 %v6562, %v6562
        %v6672 = vmul.f32 %v6565, %v6565
        %v6673 = vmul.f32 %v6570, %v6570
        %v6674 = vmul.f32 %v6573, %v6573
        %v6675 = vmul.f32 %v6578, %v6578
        %v6676 = vmul.f32 %v6581, %v6581
        %v6677 = vmul.f32 %v6586, %v6586
        %v6678 = vmul.f32 %v6589, %v6589
        %v6679 = vmul.f32 %v6594, %v6594
        %v6680 = vmul.f32 %v6597, %v6597
        %v6681 = vmul.f32 %v6602, %v6602
        %v6682 = vmul.f32 %v6605, %v6605
        %v6683 = vmul.f32 %v6610, %v6610
        %v6684 = vmul.f32 %v6613, %v6613
        %v6685 = vadd.f32 %v6653, %v6654
        %v6686 = vadd.f32 %v6685, %v6655
        %v6687 = vadd.f32 %v6686, %v6656
        %v6688 = vadd.f32 %v6687, %v6657
        %v6689 = vadd.f32 %v6688, %v6658
        %v6690 = vadd.f32 %v6689, %v6659
        %v6691 = vadd.f32 %v6690, %v6660
        %v6692 = vadd.f32 %v6691, %v6661
        %v6693 = vadd.f32 %v6692, %v6662
        %v6694 = vadd.f32 %v6693, %v6663
        %v6695 = vadd.f32 %v6694, %v6664
        %v6696 = vadd.f32 %v6695, %v6665
        %v6697 = vadd.f32 %v6696, %v6666
        %v6698 = vadd.f32 %v6697, %v6667
        %v6699 = vadd.f32 %v6698, %v6668
        %v6700 = vadd.f32 %v6699, %v6669
        %v6701 = vadd.f32 %v6700, %v6670
        %v6702 = vadd.f32 %v6701, %v6671
        %v6703 = vadd.f32 %v6702, %v6672
        %v6704 = vadd.f32 %v6703, %v6673
        %v6705 = vadd.f32 %v6704, %v6674
        %v6706 = vadd.f32 %v6705, %v6675
        %v6707 = vadd.f32 %v6706, %v6676
        %v6708 = vadd.f32 %v6707, %v6677
        %v6709 = vadd.f32 %v6708, %v6678
        %v6710 = vadd.f32 %v6709, %v6679
        %v6711 = vadd.f32 %v6710, %v6680
        %v6712 = vadd.f32 %v6711, %v6681
        %v6713 = vadd.f32 %v6712, %v6682
        %v6714 = vadd.f32 %v6713, %v6683
        %v6715 = vadd.f32 %v6714, %v6684
        %v6716 = vrot.slane %v6715, 4
        %v6717 = vadd.f32 %v6715, %v6716
        %v6718 = vrot.slane %v6717, 2
        %v6719 = vadd.f32 %v6717, %v6718
        %v6720 = vrot.slane %v6719, 1
        %v6721 = vadd.f32 %v6719, %v6720
        %v6722 = vmul.f32 %v6652, 0.00390625
        %v6723 = vmul.f32 %v6721, 0.00390625
        %v6724 = vmul.f32 %v6722, %v6722
        %v6725 = vsub.f32 %v6723, %v6724
        %v6726 = vmax.f32 %v6725, 0.0
        %v6727 = vsub.f32 %v6490, %v6722
        %v6728 = vsub.f32 %v6493, %v6722
        %v6729 = vsub.f32 %v6498, %v6722
        %v6730 = vsub.f32 %v6501, %v6722
        %v6731 = vsub.f32 %v6506, %v6722
        %v6732 = vsub.f32 %v6509, %v6722
        %v6733 = vsub.f32 %v6514, %v6722
        %v6734 = vsub.f32 %v6517, %v6722
        %v6735 = vsub.f32 %v6522, %v6722
        %v6736 = vsub.f32 %v6525, %v6722
        %v6737 = vsub.f32 %v6530, %v6722
        %v6738 = vsub.f32 %v6533, %v6722
        %v6739 = vsub.f32 %v6538, %v6722
        %v6740 = vsub.f32 %v6541, %v6722
        %v6741 = vsub.f32 %v6546, %v6722
        %v6742 = vsub.f32 %v6549, %v6722
        %v6743 = vsub.f32 %v6554, %v6722
        %v6744 = vsub.f32 %v6557, %v6722
        %v6745 = vsub.f32 %v6562, %v6722
        %v6746 = vsub.f32 %v6565, %v6722
        %v6747 = vsub.f32 %v6570, %v6722
        %v6748 = vsub.f32 %v6573, %v6722
        %v6749 = vsub.f32 %v6578, %v6722
        %v6750 = vsub.f32 %v6581, %v6722
        %v6751 = vsub.f32 %v6586, %v6722
        %v6752 = vsub.f32 %v6589, %v6722
        %v6753 = vsub.f32 %v6594, %v6722
        %v6754 = vsub.f32 %v6597, %v6722
        %v6755 = vsub.f32 %v6602, %v6722
        %v6756 = vsub.f32 %v6605, %v6722
        %v6757 = vsub.f32 %v6610, %v6722
        %v6758 = vsub.f32 %v6613, %v6722
        %v6759 = vadd.f32 %v6726, 1e-05
        %v6760 = vrsqrt.pop %v6759
        %v6761 = vmul.f32 %v6727, %v6760
        %v6762 = vmul.f32 %v6728, %v6760
        %v6763 = vmul.f32 %v6729, %v6760
        %v6764 = vmul.f32 %v6730, %v6760
        %v6765 = vmul.f32 %v6731, %v6760
        %v6766 = vmul.f32 %v6732, %v6760
        %v6767 = vmul.f32 %v6733, %v6760
        %v6768 = vmul.f32 %v6734, %v6760
        %v6769 = vmul.f32 %v6735, %v6760
        %v6770 = vmul.f32 %v6736, %v6760
        %v6771 = vmul.f32 %v6737, %v6760
        %v6772 = vmul.f32 %v6738, %v6760
        %v6773 = vmul.f32 %v6739, %v6760
        %v6774 = vmul.f32 %v6740, %v6760
        %v6775 = vmul.f32 %v6741, %v6760
        %v6776 = vmul.f32 %v6742, %v6760
        %v6777 = vmul.f32 %v6743, %v6760
        %v6778 = vmul.f32 %v6744, %v6760
        %v6779 = vmul.f32 %v6745, %v6760
        %v6780 = vmul.f32 %v6746, %v6760
        %v6781 = vmul.f32 %v6747, %v6760
        %v6782 = vmul.f32 %v6748, %v6760
        %v6783 = vmul.f32 %v6749, %v6760
        %v6784 = vmul.f32 %v6750, %v6760
        %v6785 = vmul.f32 %v6751, %v6760
        %v6786 = vmul.f32 %v6752, %v6760
        %v6787 = vmul.f32 %v6753, %v6760
        %v6788 = vmul.f32 %v6754, %v6760
        %v6789 = vmul.f32 %v6755, %v6760
        %v6790 = vmul.f32 %v6756, %v6760
        %v6791 = vmul.f32 %v6757, %v6760
        %v6792 = vmul.f32 %v6758, %v6760
        %v6793 = vadd.f32 %v170, %v6761
        %v6794 = vadd.f32 %v171, %v6762
        %v6795 = vadd.f32 %v172, %v6763
        %v6796 = vadd.f32 %v173, %v6764
        %v6797 = vadd.f32 %v174, %v6765
        %v6798 = vadd.f32 %v175, %v6766
        %v6799 = vadd.f32 %v176, %v6767
        %v6800 = vadd.f32 %v177, %v6768
        %v6801 = vadd.f32 %v178, %v6769
        %v6802 = vadd.f32 %v179, %v6770
        %v6803 = vadd.f32 %v180, %v6771
        %v6804 = vadd.f32 %v181, %v6772
        %v6805 = vadd.f32 %v182, %v6773
        %v6806 = vadd.f32 %v183, %v6774
        %v6807 = vadd.f32 %v184, %v6775
        %v6808 = vadd.f32 %v185, %v6776
        %v6809 = vadd.f32 %v186, %v6777
        %v6810 = vadd.f32 %v187, %v6778
        %v6811 = vadd.f32 %v188, %v6779
        %v6812 = vadd.f32 %v189, %v6780
        %v6813 = vadd.f32 %v190, %v6781
        %v6814 = vadd.f32 %v191, %v6782
        %v6815 = vadd.f32 %v192, %v6783
        %v6816 = vadd.f32 %v193, %v6784
        %v6817 = vadd.f32 %v194, %v6785
        %v6818 = vadd.f32 %v195, %v6786
        %v6819 = vadd.f32 %v196, %v6787
        %v6820 = vadd.f32 %v197, %v6788
        %v6821 = vadd.f32 %v198, %v6789
        %v6822 = vadd.f32 %v199, %v6790
        %v6823 = vadd.f32 %v200, %v6791
        %v6824 = vadd.f32 %v201, %v6792
        %6825 = vst [vmem:[%s163] sm:$0xff] %v6793
        %6826 = vst [vmem:[%s163 + $0x8] sm:$0xff] %v6794
        %6827 = vst [vmem:[%s163 + $0x10] sm:$0xff] %v6795
        %6828 = vst [vmem:[%s163 + $0x18] sm:$0xff] %v6796
        %6829 = vst [vmem:[%s163 + $0x20] sm:$0xff] %v6797
        %6830 = vst [vmem:[%s163 + $0x28] sm:$0xff] %v6798
        %6831 = vst [vmem:[%s163 + $0x30] sm:$0xff] %v6799
        %6832 = vst [vmem:[%s163 + $0x38] sm:$0xff] %v6800
        %6833 = vst [vmem:[%s163 + $0x40] sm:$0xff] %v6801
        %6834 = vst [vmem:[%s163 + $0x48] sm:$0xff] %v6802
        %6835 = vst [vmem:[%s163 + $0x50] sm:$0xff] %v6803
        %6836 = vst [vmem:[%s163 + $0x58] sm:$0xff] %v6804
        %6837 = vst [vmem:[%s163 + $0x60] sm:$0xff] %v6805
        %6838 = vst [vmem:[%s163 + $0x68] sm:$0xff] %v6806
        %6839 = vst [vmem:[%s163 + $0x70] sm:$0xff] %v6807
        %6840 = vst [vmem:[%s163 + $0x78] sm:$0xff] %v6808
        %6841 = vst [vmem:[%s163 + $0x80] sm:$0xff] %v6809
        %6842 = vst [vmem:[%s163 + $0x88] sm:$0xff] %v6810
        %6843 = vst [vmem:[%s163 + $0x90] sm:$0xff] %v6811
        %6844 = vst [vmem:[%s163 + $0x98] sm:$0xff] %v6812
        %6845 = vst [vmem:[%s163 + $0xa0] sm:$0xff] %v6813
        %6846 = vst [vmem:[%s163 + $0xa8] sm:$0xff] %v6814
        %6847 = vst [vmem:[%s163 + $0xb0] sm:$0xff] %v6815
        %6848 = vst [vmem:[%s163 + $0xb8] sm:$0xff] %v6816
        %6849 = vst [vmem:[%s163 + $0xc0] sm:$0xff] %v6817
        %6850 = vst [vmem:[%s163 + $0xc8] sm:$0xff] %v6818
        %6851 = vst [vmem:[%s163 + $0xd0] sm:$0xff] %v6819
        %6852 = vst [vmem:[%s163 + $0xd8] sm:$0xff] %v6820
        %6853 = vst [vmem:[%s163 + $0xe0] sm:$0xff] %v6821
        %6854 = vst [vmem:[%s163 + $0xe8] sm:$0xff] %v6822
        %6855 = vst [vmem:[%s163 + $0xf0] sm:$0xff] %v6823
        %6856 = vst [vmem:[%s163 + $0xf8] sm:$0xff] %v6824
        %s6857 = sand.u32 %s93, 1
        %s6858 = scalar_lea.sflag [#allocation5], %s6857
        %s6859 = sand.u32 %s93, 1
        %s6860 = smul.addr %s6859, 256
        %s6861 = scalar_lea.vmem [#allocation4], %s6860
        // Predicated region
        $region33: #{resnet_block.1} parent=31 // pred_check
          %p6862 = pneg %p103
        $region34: #{resnet_block.1} parent=31 // pred_check_branch
          %6864 = sbr.rel (%p6862) target = $region36
        $region35: #{resnet_block.1} parent=31 // pred_region
          %s6866 = ssub.s32 4096, 4096
          %6867 = vsyncadd %s6858, %s6866
          %s6868 = smul.addr %s17, 32
          %s6869 = smul.addr %s6868, 128
          %s6870 = scalar_lea.hbm %s3, %s6869
          %s6871 = sshll.u32 %s6861, 4
          %s6872 = int_to_ptr.vmem [resolvable:$true] %s6871
          %6877 = dma.vmem_to_hbm [thread:$0]  %s6872, 4096, %s6870, %s6858, 128, 128, 8
        $region36: #{resnet_block.1} parent=31 // pred_fallthru
          _
      $region32: #{resnet_block.1} parent=5 // pred_fallthru
        _
      %p6878 = scmp.le.s32.totalorder 2, %s12
      // Predicated region
      $region37: #{resnet_block.1} parent=5 // pred_check
        %p6879 = pneg %p6878
      $region38: #{resnet_block.1} parent=5 // pred_check_branch
        %6881 = sbr.rel (%p6879) target = $region40
      $region39: #{resnet_block.1} parent=5 // pred_region
        %s6882 = ssub.s32 %s12, 2
        // Predicated region
        $region41: #{resnet_block.1} parent=39 // pred_check
          %p6883 = pneg %p109
        $region42: #{resnet_block.1} parent=39 // pred_check_branch
          %6885 = sbr.rel (%p6883) target = $region44
        $region43: #{resnet_block.1} parent=39 // pred_region
          %s6886 = sand.u32 %s94, 1
          %s6887 = scalar_lea.sflag [#allocation5], %s6886
          %s6888 = sand.u32 %s94, 1
          %s6889 = smul.addr %s6888, 256
          %s6890 = scalar_lea.vmem [#allocation4], %s6889
          %6891 = dma.done %s6887, 4096
        $region44: #{resnet_block.1} parent=39 // pred_fallthru
          _
      $region40: #{resnet_block.1} parent=5 // pred_fallthru
        _
    $region6: #{resnet_block.1} parent=1 // loop_footer
      %s16 = sadd.s32 1, %s12
    $region7: #{resnet_block.1} parent=1 // loop_footer_branch
      %11 = sbr.rel target = $region3
    $region8: #{resnet_block.1} parent=1 // loop_exit
      _
    %6892 = vsyncpa [#allocation5], 1
    %s6893 = scalar_lea.sflag [#allocation5], 1
    %6894 = vsyncpa %s6893, 1

</llo_original>
